<compile_context>
chip_gen: v6e
topology: v6e:2x2x1
jax: 0.10.0
libtpu: 0.0.40
codegen_flags: <defaults>
</compile_context>

<pallas_src>
import jax
import jax.numpy as jnp
from jax import lax
from jax.experimental import pallas as pl
from jax.experimental.pallas import tpu as pltpu

_BN_EPS = 1e-5
_NEG_SLOPE = 0.1


def _leaky_relu(v):
    return jnp.where(v >= 0, v, _NEG_SLOPE * v)


def _round_up(x, m):
    return ((x + m - 1) // m) * m


# ----------------------------------------------------------------------------
# Fused ResBlock kernel: one row-tile per grid step
# ----------------------------------------------------------------------------
def _resblock_kernel(x_ref, xt_ref, xb_ref, w1_ref, b1_ref, w2_ref, b2_ref,
                     o_ref):
    """One row-tile (R image rows) of a ResBlock.

    x_ref : (M, C)        main tile, M = R*W flattened image rows, f32
    xt_ref: (W, C)        halo row above the tile (row index clamped to image)
    xb_ref: (W, C)        halo row below the tile (row index clamped to image)
    w1_ref: (C, Cm)       1x1 conv weights, BN scale folded, bf16
    b1_ref: (1, Cm)       folded BN bias, f32
    w2_ref: (3, 3*Cm, C)  3x3 conv weights (dy, dx-folded-K, Cout), BN folded, bf16
    b2_ref: (1, C)        folded BN bias, f32
    o_ref : (M, C)
    """
    j = pl.program_id(1)
    last = pl.num_programs(1) - 1
    m = x_ref.shape[0]
    w_img = xt_ref.shape[0]
    cmid = w1_ref.shape[1]
    cout = o_ref.shape[1]

    x_main = x_ref[...]                                    # f32, kept for residual
    x_all = jnp.concatenate([xt_ref[...], x_main, xb_ref[...]], axis=0)

    # ---- 1x1 conv + BN + LeakyReLU over all M + 2W rows: ONE MXU matmul ----
    h = jnp.dot(x_all.astype(jnp.bfloat16), w1_ref[...],
                preferred_element_type=jnp.float32)
    h = _leaky_relu(h + b1_ref[...])                       # (M+2W, Cm) f32

    # SAME zero padding of h along H: halo rows outside the image contribute 0.
    rid = lax.broadcasted_iota(jnp.int32, (m + 2 * w_img, 1), 0)
    top_ok = (j > 0).astype(jnp.float32)
    bot_ok = (j < last).astype(jnp.float32)
    h = h * (jnp.where(rid < w_img, top_ok, 1.0) *
             jnp.where(rid >= m + w_img, bot_ok, 1.0))

    # SAME zero padding along W / dx taps: +-1 row-shift on the flattened axis,
    # then zero the column that crossed a row (or image) boundary.
    col = rid % w_img
    zrow = jnp.zeros((1, cmid), jnp.float32)
    h_l = jnp.concatenate([zrow, h[:-1, :]], axis=0) * jnp.where(col == 0, 0.0, 1.0)
    h_r = jnp.concatenate([h[1:, :], zrow], axis=0) * jnp.where(col == w_img - 1, 0.0, 1.0)
    # Fold dx into the matmul K axis: (M+2W, 3*Cm), lane order [dx=0|dx=1|dx=2].
    hc = jnp.concatenate([h_l, h, h_r], axis=-1)

    # ---- 3x3 conv: 3 matmuls (one per dy), K = 3*Cm, aligned dy slices ----
    acc = jnp.zeros((m, cout), jnp.float32)
    for dy in range(3):
        tap = hc[dy * w_img: dy * w_img + m, :].astype(jnp.bfloat16)
        acc = acc + jnp.dot(tap, w2_ref[dy], preferred_element_type=jnp.float32)

    y = _leaky_relu(acc + b2_ref[...])
    o_ref[...] = (y + x_main).astype(o_ref.dtype)


def _pick_row_tile(h, w, target_m=256, max_m=1024):
    """Largest divisor R of H with R*W <= max_m, preferring R*W >= target_m."""
    divs = [d for d in range(1, h + 1) if h % d == 0]
    best = divs[0]
    for d in divs:
        if d * w <= max_m:
            best = d
            if d * w >= target_m:
                break
    return best


def resblock_forward(x_nhwc, w1, b1, w2k, b2, row_tile):
    """One ResBlock. x_nhwc: (N, H, W, C) with C already lane-padded."""
    n, h, w, c = x_nhwc.shape
    assert h % row_tile == 0
    assert w % 8 == 0, "image width must be a multiple of 8 (pad W otherwise)"
    r = row_tile
    m = r * w
    xf = x_nhwc.reshape(n, h * w, c)          # free reshape: lane-dense 2-D slabs

    out = pl.pallas_call(
        _resblock_kernel,
        out_shape=jax.ShapeDtypeStruct((n, h * w, c), x_nhwc.dtype),
        grid=(n, h // r),
        in_specs=[
            # main tile: R*W flattened rows
            pl.BlockSpec((None, m, c), lambda i, j: (i, j, 0)),
            # single halo row above / below the tile (clamped to the image)
            pl.BlockSpec((None, w, c),
                         lambda i, j: (i, jnp.maximum(j * r - 1, 0), 0)),
            pl.BlockSpec((None, w, c),
                         lambda i, j: (i, jnp.minimum((j + 1) * r, h - 1), 0)),
            # weights / biases: constant index maps -> fetched once, resident
            pl.BlockSpec(w1.shape, lambda i, j: (0, 0)),
            pl.BlockSpec(b1.shape, lambda i, j: (0, 0)),
            pl.BlockSpec(w2k.shape, lambda i, j: (0, 0, 0)),
            pl.BlockSpec(b2.shape, lambda i, j: (0, 0)),
        ],
        out_specs=pl.BlockSpec((None, m, c), lambda i, j: (i, j, 0)),
        compiler_params=pltpu.CompilerParams(
            dimension_semantics=("parallel", "parallel"),
            vmem_limit_bytes=48 * 1024 * 1024),
    )(xf, xf, xf, w1, b1, w2k, b2)
    return out.reshape(n, h, w, c)


# ----------------------------------------------------------------------------
# DarknetBlock parameters, one-time prep, forward
# ----------------------------------------------------------------------------
def init_darknet_block(key, in_channels, num_blocks):
    """Deterministic params matching DarknetBlock(in_channels, num_blocks)."""
    mid = in_channels // 2
    params = []
    for _ in range(num_blocks):
        key, k1, k2, k3, k4, k5, k6 = jax.random.split(key, 7)
        params.append({
            # conv1: 1x1, in_channels -> mid, stored (Cin, Cout)
            "w1": jax.random.normal(k1, (in_channels, mid), jnp.float32) * 0.1,
            "gamma1": jax.random.uniform(k2, (mid,), jnp.float32, 0.5, 1.5),
            "beta1": jax.random.normal(k3, (mid,), jnp.float32) * 0.1,
            "mean1": jnp.zeros((mid,), jnp.float32),
            "var1": jnp.ones((mid,), jnp.float32),
            # conv2: 3x3, mid -> in_channels, stored HWIO (3,3,Cin,Cout)
            "w2": jax.random.normal(k4, (3, 3, mid, in_channels), jnp.float32) * 0.1,
            "gamma2": jax.random.uniform(k5, (in_channels,), jnp.float32, 0.5, 1.5),
            "beta2": jax.random.normal(k6, (in_channels,), jnp.float32) * 0.1,
            "mean2": jnp.zeros((in_channels,), jnp.float32),
            "var2": jnp.ones((in_channels,), jnp.float32),
        })
    return params


def _fold_bn_into_conv(w, gamma, beta, mean, var):
    # Inference BN: y = (conv - mean) * gamma/sqrt(var+eps) + beta
    scale = gamma / jnp.sqrt(var + _BN_EPS)      # broadcasts over Cout (last dim)
    return w * scale, beta - mean * scale


def prepare_darknet_params(params, lane=128):
    """One-time prep (hoisted out of the forward): fold inference BN, zero-pad
    Cmid / block channels to lane multiples, fold 3x3 dx taps into the matmul K
    axis, cast MXU operands to bf16."""
    prepared = []
    for blk in params:
        w1, b1 = _fold_bn_into_conv(blk["w1"], blk["gamma1"], blk["beta1"],
                                    blk["mean1"], blk["var1"])
        w2, b2 = _fold_bn_into_conv(blk["w2"], blk["gamma2"], blk["beta2"],
                                    blk["mean2"], blk["var2"])
        cin, cmid = w1.shape
        cout = w2.shape[-1]                       # == cin for a ResBlock
        cp = _round_up(cout, lane)
        mp = _round_up(cmid, lane)
        w1p = jnp.zeros((cp, mp), jnp.float32).at[:cin, :cmid].set(w1)
        b1p = jnp.zeros((1, mp), jnp.float32).at[0, :cmid].set(b1)
        w2p = jnp.zeros((3, 3, mp, cp), jnp.float32).at[:, :, :cmid, :cout].set(w2)
        b2p = jnp.zeros((1, cp), jnp.float32).at[0, :cout].set(b2)
        prepared.append((w1p.astype(jnp.bfloat16),
                         b1p,
                         w2p.reshape(3, 3 * mp, cp).astype(jnp.bfloat16),
                         b2p))
    return prepared


def darknet_block_forward(prepared, x_nchw):
    """Forward pass with pre-prepared params. Input/output NCHW (PyTorch)."""
    x = jnp.transpose(x_nchw, (0, 2, 3, 1))       # NCHW -> NHWC (channels on lanes)
    n, hh, ww, cin = x.shape
    cp = prepared[0][0].shape[0]
    if cp != cin:                                 # lane-pad channels once per call
        x = jnp.pad(x, ((0, 0), (0, 0), (0, 0), (0, cp - cin)))
    row_tile = _pick_row_tile(hh, ww)
    for (w1, b1, w2k, b2) in prepared:
        x = resblock_forward(x, w1, b1, w2k, b2, row_tile)
    x = x[..., :cin]                              # drop lane padding once
    return jnp.transpose(x, (0, 3, 1, 2))         # NHWC -> NCHW


# ----------------------------------------------------------------------------
# Pure-JAX f32 reference (correctness check)
# ----------------------------------------------------------------------------
def _ref_forward(params, x_nchw):
    x = jnp.transpose(x_nchw, (0, 2, 3, 1))
    dn = ("NHWC", "HWIO", "NHWC")
    for blk in params:
        s1 = blk["gamma1"] / jnp.sqrt(blk["var1"] + _BN_EPS)
        b1 = blk["beta1"] - blk["mean1"] * s1
        s2 = blk["gamma2"] / jnp.sqrt(blk["var2"] + _BN_EPS)
        b2 = blk["beta2"] - blk["mean2"] * s2
        h = lax.conv_general_dilated(x, blk["w1"][None, None], (1, 1), "SAME",
                                     dimension_numbers=dn)
        h = _leaky_relu(h * s1 + b1)
        h2 = lax.conv_general_dilated(h, blk["w2"], (1, 1), "SAME",
                                      dimension_numbers=dn)
        h2 = _leaky_relu(h2 * s2 + b2)
        x = h2 + x
    return jnp.transpose(x, (0, 3, 1, 2))


# ----------------------------------------------------------------------------
if __name__ == "__main__":
    key = jax.random.PRNGKey(0)
    k_x, k_p = jax.random.split(key)

    in_channels = 4
    num_blocks = 2
    x = jax.random.normal(k_x, (2, in_channels, 16, 16), jnp.float32)  # NCHW

    params = init_darknet_block(k_p, in_channels, num_blocks)
    prepared = prepare_darknet_params(params)     # one-time param prep

    fwd = jax.jit(darknet_block_forward)
    out = jax.block_until_ready(fwd(prepared, x))

    ref = jax.block_until_ready(_ref_forward(params, x))
    assert out.shape == x.shape, (out.shape, x.shape)
    max_err = float(jnp.max(jnp.abs(out - ref)))
    # bf16 MXU inputs (f32 accumulation) -> tolerance loosened vs a pure-f32 run.
    assert jnp.allclose(out, ref, atol=2e-2, rtol=2e-2), (
        f"mismatch vs reference (max abs err {max_err})")

    print("KERNEL_OK")
</pallas_src>

<mosaic_0001>
module attributes {stable_mosaic.version = 11 : i64} {
  func.func @_resblock_kernel(%arg0: i32, %arg1: i32, %arg2: memref<1x256x128xf32, #tpu.memory_space<vmem>>, %arg3: memref<1x16x128xf32, #tpu.memory_space<vmem>>, %arg4: memref<1x16x128xf32, #tpu.memory_space<vmem>>, %arg5: memref<128x128xbf16, #tpu.memory_space<vmem>>, %arg6: memref<1x128xf32, #tpu.memory_space<vmem>>, %arg7: memref<3x384x128xbf16, #tpu.memory_space<vmem>>, %arg8: memref<1x128xf32, #tpu.memory_space<vmem>>, %arg9: memref<1x256x128xf32, #tpu.memory_space<vmem>>) attributes {dimension_semantics = [#tpu.dimension_semantics<parallel>, #tpu.dimension_semantics<parallel>], iteration_bounds = array<i64: 2, 1>, scalar_prefetch = 0 : i64, scratch_operands = 0 : i64, tpu.core_type = #tpu.core_type<tc>, window_params = [{transform_indices = @transform_0, window_bounds = array<i64: 1, 256, 128>}, {transform_indices = @transform_1, window_bounds = array<i64: 1, 16, 128>}, {transform_indices = @transform_2, window_bounds = array<i64: 1, 16, 128>}, {pipeline_mode = #tpu.pipeline_mode<synchronous>, transform_indices = @transform_3, window_bounds = array<i64: 128, 128>}, {pipeline_mode = #tpu.pipeline_mode<synchronous>, transform_indices = @transform_4, window_bounds = array<i64: 1, 128>}, {pipeline_mode = #tpu.pipeline_mode<synchronous>, transform_indices = @transform_5, window_bounds = array<i64: 3, 384, 128>}, {pipeline_mode = #tpu.pipeline_mode<synchronous>, transform_indices = @transform_6, window_bounds = array<i64: 1, 128>}, {transform_indices = @transform_7, window_bounds = array<i64: 1, 256, 128>}]} {
    %c0 = arith.constant 0 : index
    %c0_0 = arith.constant 0 : index
    %c0_1 = arith.constant 0 : index
    %0 = vector.load %arg2[%c0, %c0_0, %c0_1] : memref<1x256x128xf32, #tpu.memory_space<vmem>>, vector<1x256x128xf32>
    %1 = vector.shape_cast %0 : vector<1x256x128xf32> to vector<256x128xf32>
    %c0_2 = arith.constant 0 : index
    %c0_3 = arith.constant 0 : index
    %c0_4 = arith.constant 0 : index
    %2 = vector.load %arg3[%c0_2, %c0_3, %c0_4] : memref<1x16x128xf32, #tpu.memory_space<vmem>>, vector<1x16x128xf32>
    %3 = vector.shape_cast %2 : vector<1x16x128xf32> to vector<16x128xf32>
    %c0_5 = arith.constant 0 : index
    %c0_6 = arith.constant 0 : index
    %c0_7 = arith.constant 0 : index
    %4 = vector.load %arg4[%c0_5, %c0_6, %c0_7] : memref<1x16x128xf32, #tpu.memory_space<vmem>>, vector<1x16x128xf32>
    %5 = vector.shape_cast %4 : vector<1x16x128xf32> to vector<16x128xf32>
    %6 = tpu.concatenate %3, %1, %5 in 0 : vector<16x128xf32>, vector<256x128xf32>, vector<16x128xf32> -> vector<288x128xf32>
    %7 = arith.truncf %6 : vector<288x128xf32> to vector<288x128xbf16>
    %c0_8 = arith.constant 0 : index
    %c0_9 = arith.constant 0 : index
    %8 = vector.load %arg5[%c0_8, %c0_9] : memref<128x128xbf16, #tpu.memory_space<vmem>>, vector<128x128xbf16>
    %cst = arith.constant dense<0.000000e+00> : vector<288x128xf32>
    %9 = tpu.matmul %7, %8, %cst {dimension_numbers = #tpu.dot_dimension_numbers<[1], [0], [0], [1], [0, 0, 1, 1], [], []>} : vector<288x128xbf16>, vector<128x128xbf16>, vector<288x128xf32> -> vector<288x128xf32>
    %c0_10 = arith.constant 0 : index
    %c0_11 = arith.constant 0 : index
    %10 = vector.load %arg6[%c0_10, %c0_11] : memref<1x128xf32, #tpu.memory_space<vmem>>, vector<1x128xf32>
    %11 = vector.broadcast %10 : vector<1x128xf32> to vector<288x128xf32>
    %12 = arith.addf %9, %11 : vector<288x128xf32>
    %cst_12 = arith.constant 0.000000e+00 : f32
    %13 = vector.broadcast %cst_12 : f32 to vector<288x128xf32>
    %14 = arith.cmpf oge, %12, %13 : vector<288x128xf32>
    %cst_13 = arith.constant 1.000000e-01 : f32
    %15 = vector.broadcast %cst_13 : f32 to vector<288x128xf32>
    %16 = arith.mulf %15, %12 : vector<288x128xf32>
    %17 = arith.select %14, %12, %16 : vector<288x128xi1>, vector<288x128xf32>
    %18 = tpu.iota {dimensions = array<i32: 0>} : vector<288x1xi32>
    %c0_i32 = arith.constant 0 : i32
    %19 = arith.cmpi sgt, %arg1, %c0_i32 : i32
    %20 = arith.extui %19 : i1 to i32
    %21 = arith.sitofp %20 : i32 to f32
    %c0_i32_14 = arith.constant 0 : i32
    %22 = arith.cmpi slt, %arg1, %c0_i32_14 : i32
    %23 = arith.extui %22 : i1 to i32
    %24 = arith.sitofp %23 : i32 to f32
    %c16_i32 = arith.constant 16 : i32
    %25 = vector.broadcast %c16_i32 : i32 to vector<288x1xi32>
    %26 = arith.cmpi slt, %18, %25 : vector<288x1xi32>
    %cst_15 = arith.constant 1.000000e+00 : f32
    %27 = vector.broadcast %21 : f32 to vector<288x1xf32>
    %28 = vector.broadcast %cst_15 : f32 to vector<288x1xf32>
    %29 = arith.select %26, %27, %28 : vector<288x1xi1>, vector<288x1xf32>
    %c272_i32 = arith.constant 272 : i32
    %30 = vector.broadcast %c272_i32 : i32 to vector<288x1xi32>
    %31 = arith.cmpi sge, %18, %30 : vector<288x1xi32>
    %cst_16 = arith.constant 1.000000e+00 : f32
    %32 = vector.broadcast %24 : f32 to vector<288x1xf32>
    %33 = vector.broadcast %cst_16 : f32 to vector<288x1xf32>
    %34 = arith.select %31, %32, %33 : vector<288x1xi1>, vector<288x1xf32>
    %35 = arith.mulf %29, %34 : vector<288x1xf32>
    %36 = vector.broadcast %35 : vector<288x1xf32> to vector<288x128xf32>
    %37 = arith.mulf %17, %36 : vector<288x128xf32>
    %c16_i32_17 = arith.constant 16 : i32
    %c0_i32_18 = arith.constant 0 : i32
    %38 = arith.cmpi eq, %c16_i32_17, %c0_i32_18 : i32
    %c1_i32 = arith.constant 1 : i32
    %39 = arith.select %38, %c1_i32, %c16_i32_17 : i32
    %40 = vector.broadcast %39 : i32 to vector<288x1xi32>
    %41 = arith.remsi %18, %40 : vector<288x1xi32>
    %c0_i32_19 = arith.constant 0 : i32
    %42 = vector.broadcast %c0_i32_19 : i32 to vector<288x1xi32>
    %43 = arith.cmpi ne, %41, %42 : vector<288x1xi32>
    %c0_i32_20 = arith.constant 0 : i32
    %44 = vector.broadcast %c0_i32_20 : i32 to vector<288x1xi32>
    %45 = arith.cmpi slt, %41, %44 : vector<288x1xi32>
    %c0_i32_21 = arith.constant 0 : i32
    %46 = arith.cmpi slt, %39, %c0_i32_21 : i32
    %47 = vector.broadcast %46 : i1 to vector<288x1xi1>
    %48 = vector.broadcast %47 : vector<288x1xi1> to vector<288x1xi1>
    %49 = arith.xori %45, %48 : vector<288x1xi1>
    %50 = arith.andi %49, %43 : vector<288x1xi1>
    %51 = vector.broadcast %39 : i32 to vector<288x1xi32>
    %52 = arith.addi %41, %51 : vector<288x1xi32>
    %53 = arith.select %50, %52, %41 : vector<288x1xi1>, vector<288x1xi32>
    %cst_22 = arith.constant 0.000000e+00 : f32
    %54 = vector.broadcast %cst_22 : f32 to vector<1x128xf32>
    %55 = vector.extract_strided_slice %37 {offsets = [0, 0], sizes = [287, 128], strides = [1, 1]} : vector<288x128xf32> to vector<287x128xf32>
    %56 = tpu.concatenate %54, %55 in 0 : vector<1x128xf32>, vector<287x128xf32> -> vector<288x128xf32>
    %c0_i32_23 = arith.constant 0 : i32
    %57 = vector.broadcast %c0_i32_23 : i32 to vector<288x1xi32>
    %58 = arith.cmpi eq, %53, %57 : vector<288x1xi32>
    %cst_24 = arith.constant 0.000000e+00 : f32
    %cst_25 = arith.constant 1.000000e+00 : f32
    %59 = vector.broadcast %cst_24 : f32 to vector<288x1xf32>
    %60 = vector.broadcast %cst_25 : f32 to vector<288x1xf32>
    %61 = arith.select %58, %59, %60 : vector<288x1xi1>, vector<288x1xf32>
    %62 = vector.broadcast %61 : vector<288x1xf32> to vector<288x128xf32>
    %63 = arith.mulf %56, %62 : vector<288x128xf32>
    %64 = vector.extract_strided_slice %37 {offsets = [1, 0], sizes = [287, 128], strides = [1, 1]} : vector<288x128xf32> to vector<287x128xf32>
    %65 = tpu.concatenate %64, %54 in 0 : vector<287x128xf32>, vector<1x128xf32> -> vector<288x128xf32>
    %c15_i32 = arith.constant 15 : i32
    %66 = vector.broadcast %c15_i32 : i32 to vector<288x1xi32>
    %67 = arith.cmpi eq, %53, %66 : vector<288x1xi32>
    %cst_26 = arith.constant 0.000000e+00 : f32
    %cst_27 = arith.constant 1.000000e+00 : f32
    %68 = vector.broadcast %cst_26 : f32 to vector<288x1xf32>
    %69 = vector.broadcast %cst_27 : f32 to vector<288x1xf32>
    %70 = arith.select %67, %68, %69 : vector<288x1xi1>, vector<288x1xf32>
    %71 = vector.broadcast %70 : vector<288x1xf32> to vector<288x128xf32>
    %72 = arith.mulf %65, %71 : vector<288x128xf32>
    %73 = tpu.concatenate %63, %37, %72 in 1 : vector<288x128xf32>, vector<288x128xf32>, vector<288x128xf32> -> vector<288x384xf32>
    %cst_28 = arith.constant 0.000000e+00 : f32
    %74 = vector.broadcast %cst_28 : f32 to vector<256x128xf32>
    %75 = vector.extract_strided_slice %73 {offsets = [0, 0], sizes = [256, 384], strides = [1, 1]} : vector<288x384xf32> to vector<256x384xf32>
    %76 = arith.truncf %75 : vector<256x384xf32> to vector<256x384xbf16>
    %c0_29 = arith.constant 0 : index
    %c0_30 = arith.constant 0 : index
    %c0_31 = arith.constant 0 : index
    %77 = vector.load %arg7[%c0_29, %c0_30, %c0_31] : memref<3x384x128xbf16, #tpu.memory_space<vmem>>, vector<1x384x128xbf16>
    %78 = vector.shape_cast %77 : vector<1x384x128xbf16> to vector<384x128xbf16>
    %cst_32 = arith.constant dense<0.000000e+00> : vector<256x128xf32>
    %79 = tpu.matmul %76, %78, %cst_32 {dimension_numbers = #tpu.dot_dimension_numbers<[1], [0], [0], [1], [0, 0, 1, 1], [], []>} : vector<256x384xbf16>, vector<384x128xbf16>, vector<256x128xf32> -> vector<256x128xf32>
    %80 = arith.addf %74, %79 : vector<256x128xf32>
    %81 = vector.extract_strided_slice %73 {offsets = [16, 0], sizes = [256, 384], strides = [1, 1]} : vector<288x384xf32> to vector<256x384xf32>
    %82 = arith.truncf %81 : vector<256x384xf32> to vector<256x384xbf16>
    %c1 = arith.constant 1 : index
    %c0_33 = arith.constant 0 : index
    %c0_34 = arith.constant 0 : index
    %83 = vector.load %arg7[%c1, %c0_33, %c0_34] : memref<3x384x128xbf16, #tpu.memory_space<vmem>>, vector<1x384x128xbf16>
    %84 = vector.shape_cast %83 : vector<1x384x128xbf16> to vector<384x128xbf16>
    %cst_35 = arith.constant dense<0.000000e+00> : vector<256x128xf32>
    %85 = tpu.matmul %82, %84, %cst_35 {dimension_numbers = #tpu.dot_dimension_numbers<[1], [0], [0], [1], [0, 0, 1, 1], [], []>} : vector<256x384xbf16>, vector<384x128xbf16>, vector<256x128xf32> -> vector<256x128xf32>
    %86 = arith.addf %80, %85 : vector<256x128xf32>
    %87 = vector.extract_strided_slice %73 {offsets = [32, 0], sizes = [256, 384], strides = [1, 1]} : vector<288x384xf32> to vector<256x384xf32>
    %88 = arith.truncf %87 : vector<256x384xf32> to vector<256x384xbf16>
    %c2 = arith.constant 2 : index
    %c0_36 = arith.constant 0 : index
    %c0_37 = arith.constant 0 : index
    %89 = vector.load %arg7[%c2, %c0_36, %c0_37] : memref<3x384x128xbf16, #tpu.memory_space<vmem>>, vector<1x384x128xbf16>
    %90 = vector.shape_cast %89 : vector<1x384x128xbf16> to vector<384x128xbf16>
    %cst_38 = arith.constant dense<0.000000e+00> : vector<256x128xf32>
    %91 = tpu.matmul %88, %90, %cst_38 {dimension_numbers = #tpu.dot_dimension_numbers<[1], [0], [0], [1], [0, 0, 1, 1], [], []>} : vector<256x384xbf16>, vector<384x128xbf16>, vector<256x128xf32> -> vector<256x128xf32>
    %92 = arith.addf %86, %91 : vector<256x128xf32>
    %c0_39 = arith.constant 0 : index
    %c0_40 = arith.constant 0 : index
    %93 = vector.load %arg8[%c0_39, %c0_40] : memref<1x128xf32, #tpu.memory_space<vmem>>, vector<1x128xf32>
    %94 = vector.broadcast %93 : vector<1x128xf32> to vector<256x128xf32>
    %95 = arith.addf %92, %94 : vector<256x128xf32>
    %cst_41 = arith.constant 0.000000e+00 : f32
    %96 = vector.broadcast %cst_41 : f32 to vector<256x128xf32>
    %97 = arith.cmpf oge, %95, %96 : vector<256x128xf32>
    %cst_42 = arith.constant 1.000000e-01 : f32
    %98 = vector.broadcast %cst_42 : f32 to vector<256x128xf32>
    %99 = arith.mulf %98, %95 : vector<256x128xf32>
    %100 = arith.select %97, %95, %99 : vector<256x128xi1>, vector<256x128xf32>
    %101 = arith.addf %100, %1 : vector<256x128xf32>
    %c0_43 = arith.constant 0 : index
    %c0_44 = arith.constant 0 : index
    %c0_45 = arith.constant 0 : index
    %102 = vector.load %arg9[%c0_43, %c0_44, %c0_45] : memref<1x256x128xf32, #tpu.memory_space<vmem>>, vector<1x256x128xf32>
    %103 = vector.shape_cast %102 : vector<1x256x128xf32> to vector<256x128xf32>
    %104 = vector.shape_cast %101 : vector<256x128xf32> to vector<1x256x128xf32>
    tpu.vector_store %arg9[%c0_43, %c0_44, %c0_45], %104 {strides = array<i32>} : memref<1x256x128xf32, #tpu.memory_space<vmem>>, vector<1x256x128xf32>,
    return
  }
  func.func @transform_0(%arg0: i32, %arg1: i32) -> (i32, i32, i32) {
    %c0_i32 = arith.constant 0 : i32
    %c0_i32_0 = arith.constant 0 : i32
    return %arg0, %arg1, %c0_i32 : i32, i32, i32
  }
  func.func @transform_1(%arg0: i32, %arg1: i32) -> (i32, i32, i32) {
    %c16_i32 = arith.constant 16 : i32
    %0 = arith.muli %arg1, %c16_i32 : i32
    %c1_i32 = arith.constant 1 : i32
    %1 = arith.subi %0, %c1_i32 : i32
    %c0_i32 = arith.constant 0 : i32
    %2 = arith.maxsi %1, %c0_i32 : i32
    %c0_i32_0 = arith.constant 0 : i32
    %c0_i32_1 = arith.constant 0 : i32
    return %arg0, %2, %c0_i32_0 : i32, i32, i32
  }
  func.func @transform_2(%arg0: i32, %arg1: i32) -> (i32, i32, i32) {
    %c1_i32 = arith.constant 1 : i32
    %0 = arith.addi %arg1, %c1_i32 : i32
    %c16_i32 = arith.constant 16 : i32
    %1 = arith.muli %0, %c16_i32 : i32
    %c15_i32 = arith.constant 15 : i32
    %2 = arith.minsi %1, %c15_i32 : i32
    %c0_i32 = arith.constant 0 : i32
    %c0_i32_0 = arith.constant 0 : i32
    return %arg0, %2, %c0_i32 : i32, i32, i32
  }
  func.func @transform_3(%arg0: i32, %arg1: i32) -> (i32, i32) {
    %c0_i32 = arith.constant 0 : i32
    %c0_i32_0 = arith.constant 0 : i32
    %c0_i32_1 = arith.constant 0 : i32
    return %c0_i32, %c0_i32_0 : i32, i32
  }
  func.func @transform_4(%arg0: i32, %arg1: i32) -> (i32, i32) {
    %c0_i32 = arith.constant 0 : i32
    %c0_i32_0 = arith.constant 0 : i32
    %c0_i32_1 = arith.constant 0 : i32
    return %c0_i32, %c0_i32_0 : i32, i32
  }
  func.func @transform_5(%arg0: i32, %arg1: i32) -> (i32, i32, i32) {
    %c0_i32 = arith.constant 0 : i32
    %c0_i32_0 = arith.constant 0 : i32
    %c0_i32_1 = arith.constant 0 : i32
    %c0_i32_2 = arith.constant 0 : i32
    return %c0_i32, %c0_i32_0, %c0_i32_1 : i32, i32, i32
  }
  func.func @transform_6(%arg0: i32, %arg1: i32) -> (i32, i32) {
    %c0_i32 = arith.constant 0 : i32
    %c0_i32_0 = arith.constant 0 : i32
    %c0_i32_1 = arith.constant 0 : i32
    return %c0_i32, %c0_i32_0 : i32, i32
  }
  func.func @transform_7(%arg0: i32, %arg1: i32) -> (i32, i32, i32) {
    %c0_i32 = arith.constant 0 : i32
    %c0_i32_0 = arith.constant 0 : i32
    return %arg0, %arg1, %c0_i32 : i32, i32, i32
  }
}

</mosaic_0001>

<llo_original>
// kernel: darknet_block_forward.2
$region0: #{darknet_block_forward.2}
  #allocation0 [shape = 'u32[]', space=smem, size = 0x4, offset = 0x4, fixed_abs, tag = 'smem constant byte address 0x4 - core index']
  #allocation1 [shape = 'u32[144,128]{1,0:T(1,128)}', space=vmem, size = 0x12000, scoped, tag = 'internal scratch']
  %s0 = inlined_call_operand.vmem [shape: f32[2,256,128], index: 0, kind: input, shape index: {}, may-alias: {0,1,2}]
  %s1 = inlined_call_operand.vmem [shape: f32[2,256,128], index: 1, kind: input, shape index: {}, may-alias: {0,1,2}]
  %s2 = inlined_call_operand.vmem [shape: f32[2,256,128], index: 2, kind: input, shape index: {}, may-alias: {0,1,2}]
  %s3 = inlined_call_operand.vmem [shape: bf16[128,128], index: 3, kind: input, shape index: {}]
  %s4 = inlined_call_operand.vmem [shape: f32[1,128], index: 4, kind: input, shape index: {}]
  %s5 = inlined_call_operand.vmem [shape: bf16[3,384,128], index: 5, kind: input, shape index: {}]
  %s6 = inlined_call_operand.vmem [shape: f32[1,128], index: 6, kind: input, shape index: {}]
  %s7 = inlined_call_operand.vmem [shape: f32[2,256,128], index: 7, kind: output, shape index: {}]
  %s8 = sld [smem:[#allocation0]]
  $region61: #{darknet_block_forward.2} parent=0
    _
  %s10 = ssub.s32 1, %s8
  %s11 = scalar_select 0, %s10, %s8
  loop: start=0, step=1, limit=4
  $region2: #{darknet_block_forward.2} parent=0 // loop_pre_header
    _
  $region3: #{darknet_block_forward.2} parent=0 // loop_header
    %s13 = sphi 0, %s17
    %p14 = scmp.ge.s32.totalorder %s13, 4
    %s20 = sphi 0, %s32
    %s21 = sphi 0, %s28
    %s22 = sphi 0, %s20
    %s23 = sphi 0, %s21
    %s24 = sphi 0, %s22
    %s25 = sphi 0, %s23
    %s37 = sphi 0, %s39
    %s40 = sphi 0, %s37
    %s41 = sphi 0, %s40
    %s57 = sphi 0, %s41
    %s73 = sphi 0, %s75
    %s76 = sphi 0, %s73
    %s77 = sphi 0, %s76
    %s93 = sphi 0, %s77
    %s109 = sphi 0, %s111
    %s112 = sphi 0, %s109
    %s113 = sphi 0, %s112
    %s129 = sphi 0, %s113
    %s133 = sphi 0, %s133
    %s135 = sphi 0, %s133
    %s136 = sphi 0, %s135
    %s150 = sphi 0, %s136
    %s154 = sphi 0, %s154
    %s156 = sphi 0, %s154
    %s157 = sphi 0, %s156
    %s171 = sphi 0, %s157
    %s175 = sphi 0, %s175
    %s177 = sphi 0, %s175
    %s178 = sphi 0, %s177
    %s192 = sphi 0, %s178
    %s196 = sphi 0, %s196
    %s198 = sphi 0, %s196
    %s199 = sphi 0, %s198
    %s213 = sphi 0, %s199
    %s221 = sphi 0, %s223
    %s224 = sphi 0, %s221
    %s225 = sphi 0, %s224
    %s241 = sphi 0, %s225
  $region4: #{darknet_block_forward.2} parent=0 // loop_header_branch
    %16 = sbr.rel (%p14) target = $region8
  $region5: #{darknet_block_forward.2} parent=0 // loop_body
    %s18 = ssub.s32 %s13, 1
    %s19 = ssub.s32 %s13, 2
    %s26 = sadd.s32 1, %s21
    %p27 = scmp.ge.s32.totalorder %s26, 1
    %s28 = scalar_select %p27, 0, %s26
    %s29 = sadd.s32 1, %s20
    %s30 = scalar_select %p27, %s29, %s20
    %p31 = scmp.ge.s32.totalorder %s30, 2
    %s32 = scalar_select %p31, 0, %s30
    %s33 = ssub.s32 %s20, %s32
    %s34 = ssub.s32 %s21, %s28
    %s35 = sor.u32 %s33, %s34
    %p36 = scmp.eq.s32.totalorder %s35, 0
    %s38 = sadd.s32 %s37, 1
    %s39 = scalar_select %p36, %s37, %s38
    %p42 = pneg %p36
    %p43 = scmp.eq.s32.totalorder %s13, 1
    %p44 = por %p42, %p43
    %p45 = scmp.ne.s32.totalorder %s37, %s40
    %p46 = scmp.eq.s32.totalorder %s13, 0
    %p47 = por %p45, %p46
    %p48 = scmp.ne.s32.totalorder %s37, %s40
    %p49 = scmp.eq.s32.totalorder %s18, 1
    %p50 = por %p48, %p49
    %p51 = scmp.ne.s32.totalorder %s40, %s41
    %p52 = scmp.eq.s32.totalorder %s18, 0
    %p53 = por %p51, %p52
    %p54 = scmp.ne.s32.totalorder %s40, %s41
    %p55 = scmp.eq.s32.totalorder %s19, 1
    %p56 = por %p54, %p55
    %p58 = scmp.ne.s32.totalorder %s41, %s57
    %p59 = scmp.eq.s32.totalorder %s19, 0
    %p60 = por %p58, %p59
    %s61 = smul.u32 %s21, 16
    %s62 = ssub.s32 %s61, 1
    %p63 = scmp.gt.s32.totalorder %s62, 0
    %s64 = scalar_select %p63, %s62, 0
    %s65 = smul.u32 %s28, 16
    %s66 = ssub.s32 %s65, 1
    %p67 = scmp.gt.s32.totalorder %s66, 0
    %s68 = scalar_select %p67, %s66, 0
    %s69 = ssub.s32 %s20, %s32
    %s70 = ssub.s32 %s64, %s68
    %s71 = sor.u32 %s69, %s70
    %p72 = scmp.eq.s32.totalorder %s71, 0
    %s74 = sadd.s32 %s73, 1
    %s75 = scalar_select %p72, %s73, %s74
    %p78 = pneg %p72
    %p79 = scmp.eq.s32.totalorder %s13, 1
    %p80 = por %p78, %p79
    %p81 = scmp.ne.s32.totalorder %s73, %s76
    %p82 = scmp.eq.s32.totalorder %s13, 0
    %p83 = por %p81, %p82
    %p84 = scmp.ne.s32.totalorder %s73, %s76
    %p85 = scmp.eq.s32.totalorder %s18, 1
    %p86 = por %p84, %p85
    %p87 = scmp.ne.s32.totalorder %s76, %s77
    %p88 = scmp.eq.s32.totalorder %s18, 0
    %p89 = por %p87, %p88
    %p90 = scmp.ne.s32.totalorder %s76, %s77
    %p91 = scmp.eq.s32.totalorder %s19, 1
    %p92 = por %p90, %p91
    %p94 = scmp.ne.s32.totalorder %s77, %s93
    %p95 = scmp.eq.s32.totalorder %s19, 0
    %p96 = por %p94, %p95
    %s97 = sadd.s32 %s21, 1
    %s98 = smul.u32 %s97, 16
    %p99 = scmp.lt.s32.totalorder %s98, 15
    %s100 = scalar_select %p99, %s98, 15
    %s101 = sadd.s32 %s28, 1
    %s102 = smul.u32 %s101, 16
    %p103 = scmp.lt.s32.totalorder %s102, 15
    %s104 = scalar_select %p103, %s102, 15
    %s105 = ssub.s32 %s20, %s32
    %s106 = ssub.s32 %s100, %s104
    %s107 = sor.u32 %s105, %s106
    %p108 = scmp.eq.s32.totalorder %s107, 0
    %s110 = sadd.s32 %s109, 1
    %s111 = scalar_select %p108, %s109, %s110
    %p114 = pneg %p108
    %p115 = scmp.eq.s32.totalorder %s13, 1
    %p116 = por %p114, %p115
    %p117 = scmp.ne.s32.totalorder %s109, %s112
    %p118 = scmp.eq.s32.totalorder %s13, 0
    %p119 = por %p117, %p118
    %p120 = scmp.ne.s32.totalorder %s109, %s112
    %p121 = scmp.eq.s32.totalorder %s18, 1
    %p122 = por %p120, %p121
    %p123 = scmp.ne.s32.totalorder %s112, %s113
    %p124 = scmp.eq.s32.totalorder %s18, 0
    %p125 = por %p123, %p124
    %p126 = scmp.ne.s32.totalorder %s112, %s113
    %p127 = scmp.eq.s32.totalorder %s19, 1
    %p128 = por %p126, %p127
    %p130 = scmp.ne.s32.totalorder %s113, %s129
    %p131 = scmp.eq.s32.totalorder %s19, 0
    %p132 = por %p130, %p131
    %s134 = sadd.s32 %s133, 1
    %p137 = scmp.eq.s32.totalorder %s13, 1
    %p138 = scmp.ne.s32.totalorder %s133, %s135
    %p139 = scmp.eq.s32.totalorder %s13, 0
    %p140 = por %p138, %p139
    %p141 = scmp.ne.s32.totalorder %s133, %s135
    %p142 = scmp.eq.s32.totalorder %s18, 1
    %p143 = por %p141, %p142
    %p144 = scmp.ne.s32.totalorder %s135, %s136
    %p145 = scmp.eq.s32.totalorder %s18, 0
    %p146 = por %p144, %p145
    %p147 = scmp.ne.s32.totalorder %s135, %s136
    %p148 = scmp.eq.s32.totalorder %s19, 1
    %p149 = por %p147, %p148
    %p151 = scmp.ne.s32.totalorder %s136, %s150
    %p152 = scmp.eq.s32.totalorder %s19, 0
    %p153 = por %p151, %p152
    %s155 = sadd.s32 %s154, 1
    %p158 = scmp.eq.s32.totalorder %s13, 1
    %p159 = scmp.ne.s32.totalorder %s154, %s156
    %p160 = scmp.eq.s32.totalorder %s13, 0
    %p161 = por %p159, %p160
    %p162 = scmp.ne.s32.totalorder %s154, %s156
    %p163 = scmp.eq.s32.totalorder %s18, 1
    %p164 = por %p162, %p163
    %p165 = scmp.ne.s32.totalorder %s156, %s157
    %p166 = scmp.eq.s32.totalorder %s18, 0
    %p167 = por %p165, %p166
    %p168 = scmp.ne.s32.totalorder %s156, %s157
    %p169 = scmp.eq.s32.totalorder %s19, 1
    %p170 = por %p168, %p169
    %p172 = scmp.ne.s32.totalorder %s157, %s171
    %p173 = scmp.eq.s32.totalorder %s19, 0
    %p174 = por %p172, %p173
    %s176 = sadd.s32 %s175, 1
    %p179 = scmp.eq.s32.totalorder %s13, 1
    %p180 = scmp.ne.s32.totalorder %s175, %s177
    %p181 = scmp.eq.s32.totalorder %s13, 0
    %p182 = por %p180, %p181
    %p183 = scmp.ne.s32.totalorder %s175, %s177
    %p184 = scmp.eq.s32.totalorder %s18, 1
    %p185 = por %p183, %p184
    %p186 = scmp.ne.s32.totalorder %s177, %s178
    %p187 = scmp.eq.s32.totalorder %s18, 0
    %p188 = por %p186, %p187
    %p189 = scmp.ne.s32.totalorder %s177, %s178
    %p190 = scmp.eq.s32.totalorder %s19, 1
    %p191 = por %p189, %p190
    %p193 = scmp.ne.s32.totalorder %s178, %s192
    %p194 = scmp.eq.s32.totalorder %s19, 0
    %p195 = por %p193, %p194
    %s197 = sadd.s32 %s196, 1
    %p200 = scmp.eq.s32.totalorder %s13, 1
    %p201 = scmp.ne.s32.totalorder %s196, %s198
    %p202 = scmp.eq.s32.totalorder %s13, 0
    %p203 = por %p201, %p202
    %p204 = scmp.ne.s32.totalorder %s196, %s198
    %p205 = scmp.eq.s32.totalorder %s18, 1
    %p206 = por %p204, %p205
    %p207 = scmp.ne.s32.totalorder %s198, %s199
    %p208 = scmp.eq.s32.totalorder %s18, 0
    %p209 = por %p207, %p208
    %p210 = scmp.ne.s32.totalorder %s198, %s199
    %p211 = scmp.eq.s32.totalorder %s19, 1
    %p212 = por %p210, %p211
    %p214 = scmp.ne.s32.totalorder %s199, %s213
    %p215 = scmp.eq.s32.totalorder %s19, 0
    %p216 = por %p214, %p215
    %s217 = ssub.s32 %s20, %s32
    %s218 = ssub.s32 %s21, %s28
    %s219 = sor.u32 %s217, %s218
    %p220 = scmp.eq.s32.totalorder %s219, 0
    %s222 = sadd.s32 %s221, 1
    %s223 = scalar_select %p220, %s221, %s222
    %p226 = pneg %p220
    %p227 = scmp.eq.s32.totalorder %s13, 1
    %p228 = por %p226, %p227
    %p229 = scmp.ne.s32.totalorder %s221, %s224
    %p230 = scmp.eq.s32.totalorder %s13, 0
    %p231 = por %p229, %p230
    %p232 = scmp.ne.s32.totalorder %s221, %s224
    %p233 = scmp.eq.s32.totalorder %s18, 1
    %p234 = por %p232, %p233
    %p235 = scmp.ne.s32.totalorder %s224, %s225
    %p236 = scmp.eq.s32.totalorder %s18, 0
    %p237 = por %p235, %p236
    %p238 = scmp.ne.s32.totalorder %s224, %s225
    %p239 = scmp.eq.s32.totalorder %s19, 1
    %p240 = por %p238, %p239
    %p242 = scmp.ne.s32.totalorder %s225, %s241
    %p243 = scmp.eq.s32.totalorder %s19, 0
    %p244 = por %p242, %p243
    %p245 = scmp.le.s32.totalorder 1, %s13
    %p246 = scmp.lt.s32.totalorder %s13, 3
    %p247 = pnand %p245, %p246
    %p248 = pneg %p247
    // Predicated region
    $region9: #{darknet_block_forward.2} parent=5 // pred_check
      _
    $region10: #{darknet_block_forward.2} parent=5 // pred_check_branch
      %250 = sbr.rel (%p247) target = $region12
    $region11: #{darknet_block_forward.2} parent=5 // pred_region
      %s251 = ssub.s32 %s13, 1
      // Predicated region
      $region13: #{darknet_block_forward.2} parent=11 // pred_check
        %p252 = pneg %p146
      $region14: #{darknet_block_forward.2} parent=11 // pred_check_branch
        %254 = sbr.rel (%p252) target = $region16
      $region15: #{darknet_block_forward.2} parent=11 // pred_region
        _
      $region16: #{darknet_block_forward.2} parent=11 // pred_fallthru
        _
      // Predicated region
      $region17: #{darknet_block_forward.2} parent=11 // pred_check
        %p255 = pneg %p167
      $region18: #{darknet_block_forward.2} parent=11 // pred_check_branch
        %257 = sbr.rel (%p255) target = $region20
      $region19: #{darknet_block_forward.2} parent=11 // pred_region
        _
      $region20: #{darknet_block_forward.2} parent=11 // pred_fallthru
        _
      // Predicated region
      $region21: #{darknet_block_forward.2} parent=11 // pred_check
        %p258 = pneg %p188
      $region22: #{darknet_block_forward.2} parent=11 // pred_check_branch
        %260 = sbr.rel (%p258) target = $region24
      $region23: #{darknet_block_forward.2} parent=11 // pred_region
        _
      $region24: #{darknet_block_forward.2} parent=11 // pred_fallthru
        _
      // Predicated region
      $region25: #{darknet_block_forward.2} parent=11 // pred_check
        %p261 = pneg %p209
      $region26: #{darknet_block_forward.2} parent=11 // pred_check_branch
        %263 = sbr.rel (%p261) target = $region28
      $region27: #{darknet_block_forward.2} parent=11 // pred_region
        _
      $region28: #{darknet_block_forward.2} parent=11 // pred_fallthru
        _
    $region12: #{darknet_block_forward.2} parent=5 // pred_fallthru
      _
    %p264 = scmp.lt.s32.totalorder %s13, 2
    // Predicated region
    $region29: #{darknet_block_forward.2} parent=5 // pred_check
      %p265 = pneg %p264
    $region30: #{darknet_block_forward.2} parent=5 // pred_check_branch
      %267 = sbr.rel (%p265) target = $region32
    $region31: #{darknet_block_forward.2} parent=5 // pred_region
      // Predicated region
      $region33: #{darknet_block_forward.2} parent=31 // pred_check
        %p268 = pneg %p47
      $region34: #{darknet_block_forward.2} parent=31 // pred_check_branch
        %270 = sbr.rel (%p268) target = $region36
      $region35: #{darknet_block_forward.2} parent=31 // pred_region
        %s271 = smul.u32 32, %s21
        %p272 = scmp.lt.s32.totalorder %s20, 1
        %s273 = scalar_select %p272, %s20, 1
        %p274 = scmp.lt.s32.totalorder %s271, 31
        %s275 = scalar_select %p274, %s271, 31
        %s276 = smul.addr %s273, 32
        %s277 = sadd.s32 %s275, %s276
        %s278 = smul.addr %s277, 8
        %s279 = scalar_lea.vmem %s0, %s278
        %s280 = smul.u32 32, %s21
      $region36: #{darknet_block_forward.2} parent=31 // pred_fallthru
        _
      // Predicated region
      $region37: #{darknet_block_forward.2} parent=31 // pred_check
        %p281 = pneg %p83
      $region38: #{darknet_block_forward.2} parent=31 // pred_check_branch
        %283 = sbr.rel (%p281) target = $region40
      $region39: #{darknet_block_forward.2} parent=31 // pred_region
        %s284 = smul.u32 %s21, 16
        %s285 = ssub.s32 %s284, 1
        %p286 = scmp.gt.s32.totalorder %s285, 0
        %s287 = scalar_select %p286, %s285, 0
        %s288 = smul.u32 2, %s287
        %p289 = scmp.lt.s32.totalorder %s20, 1
        %s290 = scalar_select %p289, %s20, 1
        %p291 = scmp.lt.s32.totalorder %s288, 31
        %s292 = scalar_select %p291, %s288, 31
        %s293 = smul.addr %s290, 32
        %s294 = sadd.s32 %s292, %s293
        %s295 = smul.addr %s294, 8
        %s296 = scalar_lea.vmem %s1, %s295
        %s297 = smul.u32 %s21, 16
        %s298 = ssub.s32 %s297, 1
        %p299 = scmp.gt.s32.totalorder %s298, 0
        %s300 = scalar_select %p299, %s298, 0
        %s301 = smul.u32 2, %s300
      $region40: #{darknet_block_forward.2} parent=31 // pred_fallthru
        _
      // Predicated region
      $region41: #{darknet_block_forward.2} parent=31 // pred_check
        %p302 = pneg %p119
      $region42: #{darknet_block_forward.2} parent=31 // pred_check_branch
        %304 = sbr.rel (%p302) target = $region44
      $region43: #{darknet_block_forward.2} parent=31 // pred_region
        %s305 = sadd.s32 %s21, 1
        %s306 = smul.u32 %s305, 16
        %p307 = scmp.lt.s32.totalorder %s306, 15
        %s308 = scalar_select %p307, %s306, 15
        %s309 = smul.u32 2, %s308
        %p310 = scmp.lt.s32.totalorder %s20, 1
        %s311 = scalar_select %p310, %s20, 1
        %p312 = scmp.lt.s32.totalorder %s309, 31
        %s313 = scalar_select %p312, %s309, 31
        %s314 = smul.addr %s311, 32
        %s315 = sadd.s32 %s313, %s314
        %s316 = smul.addr %s315, 8
        %s317 = scalar_lea.vmem %s2, %s316
        %s318 = sadd.s32 %s21, 1
        %s319 = smul.u32 %s318, 16
        %p320 = scmp.lt.s32.totalorder %s319, 15
        %s321 = scalar_select %p320, %s319, 15
        %s322 = smul.u32 2, %s321
      $region44: #{darknet_block_forward.2} parent=31 // pred_fallthru
        _
    $region32: #{darknet_block_forward.2} parent=5 // pred_fallthru
      _
    %p323 = scmp.le.s32.totalorder 1, %s13
    %p324 = scmp.lt.s32.totalorder %s13, 3
    %p325 = pnand %p323, %p324
    %p326 = pneg %p325
    // Predicated region
    $region45: #{darknet_block_forward.2} parent=5 // pred_check
      _
    $region46: #{darknet_block_forward.2} parent=5 // pred_check_branch
      %328 = sbr.rel (%p325) target = $region48
    $region47: #{darknet_block_forward.2} parent=5 // pred_region
      %s329 = ssub.s32 %s13, 1
      %s330 = smul.u32 32, %s23
      %p331 = scmp.lt.s32.totalorder %s22, 1
      %s332 = scalar_select %p331, %s22, 1
      %p333 = scmp.lt.s32.totalorder %s330, 31
      %s334 = scalar_select %p333, %s330, 31
      %s335 = smul.addr %s332, 32
      %s336 = sadd.s32 %s334, %s335
      %s337 = smul.addr %s336, 8
      %s338 = scalar_lea.vmem %s0, %s337
      %p339 = pneg %p53
      %p340 = pneg %p50
      %s341 = smul.u32 %s23, 16
      %s342 = ssub.s32 %s341, 1
      %p343 = scmp.gt.s32.totalorder %s342, 0
      %s344 = scalar_select %p343, %s342, 0
      %s345 = smul.u32 2, %s344
      %p346 = scmp.lt.s32.totalorder %s22, 1
      %s347 = scalar_select %p346, %s22, 1
      %p348 = scmp.lt.s32.totalorder %s345, 31
      %s349 = scalar_select %p348, %s345, 31
      %s350 = smul.addr %s347, 32
      %s351 = sadd.s32 %s349, %s350
      %s352 = smul.addr %s351, 8
      %s353 = scalar_lea.vmem %s1, %s352
      %p354 = pneg %p89
      %p355 = pneg %p86
      %s356 = sadd.s32 %s23, 1
      %s357 = smul.u32 %s356, 16
      %p358 = scmp.lt.s32.totalorder %s357, 15
      %s359 = scalar_select %p358, %s357, 15
      %s360 = smul.u32 2, %s359
      %p361 = scmp.lt.s32.totalorder %s22, 1
      %s362 = scalar_select %p361, %s22, 1
      %p363 = scmp.lt.s32.totalorder %s360, 31
      %s364 = scalar_select %p363, %s360, 31
      %s365 = smul.addr %s362, 32
      %s366 = sadd.s32 %s364, %s365
      %s367 = smul.addr %s366, 8
      %s368 = scalar_lea.vmem %s2, %s367
      %p369 = pneg %p125
      %p370 = pneg %p122
      %p371 = pneg %p146
      %p372 = pneg %p143
      %p373 = pneg %p167
      %p374 = pneg %p164
      %p375 = pneg %p188
      %p376 = pneg %p185
      %p377 = pneg %p209
      %p378 = pneg %p206
      %p379 = pneg %p237
      %p380 = pneg %p234
      %s381 = smul.u32 32, %s23
      %p382 = scmp.lt.s32.totalorder %s22, 1
      %s383 = scalar_select %p382, %s22, 1
      %p384 = scmp.lt.s32.totalorder %s381, 31
      %s385 = scalar_select %p384, %s381, 31
      %s386 = smul.addr %s383, 32
      %s387 = sadd.s32 %s385, %s386
      %s388 = smul.addr %s387, 8
      %s389 = scalar_lea.vmem %s7, %s388
      %s390 = smul.u32 32, %s23
      %p391 = scmp.lt.s32.totalorder %s22, 1
      %s392 = scalar_select %p391, %s22, 1
      %p393 = scmp.lt.s32.totalorder %s390, 31
      %s394 = scalar_select %p393, %s390, 31
      %s395 = smul.addr %s392, 32
      %s396 = sadd.s32 %s394, %s395
      %s397 = smul.addr %s396, 8
      %s398 = scalar_lea.vmem %s0, %s397
      %s399 = smul.u32 32, %s23
      %s400 = smul.u32 %s23, 16
      %s401 = ssub.s32 %s400, 1
      %p402 = scmp.gt.s32.totalorder %s401, 0
      %s403 = scalar_select %p402, %s401, 0
      %s404 = smul.u32 2, %s403
      %p405 = scmp.lt.s32.totalorder %s22, 1
      %s406 = scalar_select %p405, %s22, 1
      %p407 = scmp.lt.s32.totalorder %s404, 31
      %s408 = scalar_select %p407, %s404, 31
      %s409 = smul.addr %s406, 32
      %s410 = sadd.s32 %s408, %s409
      %s411 = smul.addr %s410, 8
      %s412 = scalar_lea.vmem %s1, %s411
      %s413 = smul.u32 %s23, 16
      %s414 = ssub.s32 %s413, 1
      %p415 = scmp.gt.s32.totalorder %s414, 0
      %s416 = scalar_select %p415, %s414, 0
      %s417 = smul.u32 2, %s416
      %s418 = sadd.s32 %s23, 1
      %s419 = smul.u32 %s418, 16
      %p420 = scmp.lt.s32.totalorder %s419, 15
      %s421 = scalar_select %p420, %s419, 15
      %s422 = smul.u32 2, %s421
      %p423 = scmp.lt.s32.totalorder %s22, 1
      %s424 = scalar_select %p423, %s22, 1
      %p425 = scmp.lt.s32.totalorder %s422, 31
      %s426 = scalar_select %p425, %s422, 31
      %s427 = smul.addr %s424, 32
      %s428 = sadd.s32 %s426, %s427
      %s429 = smul.addr %s428, 8
      %s430 = scalar_lea.vmem %s2, %s429
      %s431 = sadd.s32 %s23, 1
      %s432 = smul.u32 %s431, 16
      %p433 = scmp.lt.s32.totalorder %s432, 15
      %s434 = scalar_select %p433, %s432, 15
      %s435 = smul.u32 2, %s434
      %s436 = smul.u32 32, %s23
      %p437 = scmp.lt.s32.totalorder %s22, 1
      %s438 = scalar_select %p437, %s22, 1
      %p439 = scmp.lt.s32.totalorder %s436, 31
      %s440 = scalar_select %p439, %s436, 31
      %s441 = smul.addr %s438, 32
      %s442 = sadd.s32 %s440, %s441
      %s443 = smul.addr %s442, 8
      %s444 = scalar_lea.vmem %s7, %s443
      %s445 = smul.u32 32, %s23
      %v447 = vld [vmem:[%s398] sm:$0xff]
      %v448 = vld [vmem:[%s398 + $0x8] sm:$0xff]
      %v449 = vld [vmem:[%s398 + $0x10] sm:$0xff]
      %v450 = vld [vmem:[%s398 + $0x18] sm:$0xff]
      %v451 = vld [vmem:[%s398 + $0x20] sm:$0xff]
      %v452 = vld [vmem:[%s398 + $0x28] sm:$0xff]
      %v453 = vld [vmem:[%s398 + $0x30] sm:$0xff]
      %v454 = vld [vmem:[%s398 + $0x38] sm:$0xff]
      %v455 = vld [vmem:[%s398 + $0x40] sm:$0xff]
      %v456 = vld [vmem:[%s398 + $0x48] sm:$0xff]
      %v457 = vld [vmem:[%s398 + $0x50] sm:$0xff]
      %v458 = vld [vmem:[%s398 + $0x58] sm:$0xff]
      %v459 = vld [vmem:[%s398 + $0x60] sm:$0xff]
      %v460 = vld [vmem:[%s398 + $0x68] sm:$0xff]
      %v461 = vld [vmem:[%s398 + $0x70] sm:$0xff]
      %v462 = vld [vmem:[%s398 + $0x78] sm:$0xff]
      %v463 = vld [vmem:[%s398 + $0x80] sm:$0xff]
      %v464 = vld [vmem:[%s398 + $0x88] sm:$0xff]
      %v465 = vld [vmem:[%s398 + $0x90] sm:$0xff]
      %v466 = vld [vmem:[%s398 + $0x98] sm:$0xff]
      %v467 = vld [vmem:[%s398 + $0xa0] sm:$0xff]
      %v468 = vld [vmem:[%s398 + $0xa8] sm:$0xff]
      %v469 = vld [vmem:[%s398 + $0xb0] sm:$0xff]
      %v470 = vld [vmem:[%s398 + $0xb8] sm:$0xff]
      %v471 = vld [vmem:[%s398 + $0xc0] sm:$0xff]
      %v472 = vld [vmem:[%s398 + $0xc8] sm:$0xff]
      %v473 = vld [vmem:[%s398 + $0xd0] sm:$0xff]
      %v474 = vld [vmem:[%s398 + $0xd8] sm:$0xff]
      %v475 = vld [vmem:[%s398 + $0xe0] sm:$0xff]
      %v476 = vld [vmem:[%s398 + $0xe8] sm:$0xff]
      %v477 = vld [vmem:[%s398 + $0xf0] sm:$0xff]
      %v478 = vld [vmem:[%s398 + $0xf8] sm:$0xff]
      %v479 = vld [vmem:[%s412] sm:$0xff]
      %v480 = vld [vmem:[%s412 + $0x8] sm:$0xff]
      %v481 = vld [vmem:[%s430] sm:$0xff]
      %v482 = vld [vmem:[%s430 + $0x8] sm:$0xff]
      %v483 = vpack.c.bf16 %v480, %v479
      %v484 = vpack.c.bf16 %v448, %v447
      %v485 = vpack.c.bf16 %v450, %v449
      %v486 = vpack.c.bf16 %v452, %v451
      %v487 = vpack.c.bf16 %v454, %v453
      %v488 = vpack.c.bf16 %v456, %v455
      %v489 = vpack.c.bf16 %v458, %v457
      %v490 = vpack.c.bf16 %v460, %v459
      %v491 = vpack.c.bf16 %v462, %v461
      %v492 = vpack.c.bf16 %v464, %v463
      %v493 = vpack.c.bf16 %v466, %v465
      %v494 = vpack.c.bf16 %v468, %v467
      %v495 = vpack.c.bf16 %v470, %v469
      %v496 = vpack.c.bf16 %v472, %v471
      %v497 = vpack.c.bf16 %v474, %v473
      %v498 = vpack.c.bf16 %v476, %v475
      %v499 = vpack.c.bf16 %v478, %v477
      %v500 = vpack.c.bf16 %v482, %v481
      %v501 = vld [vmem:[%s3] sm:$0xf]
      %v502 = vld [vmem:[%s3 + $0x4] sm:$0xf]
      %v503 = vld [vmem:[%s3 + $0x8] sm:$0xf]
      %v504 = vld [vmem:[%s3 + $0xc] sm:$0xf]
      %v505 = vld [vmem:[%s3 + $0x10] sm:$0xf]
      %v506 = vld [vmem:[%s3 + $0x14] sm:$0xf]
      %v507 = vld [vmem:[%s3 + $0x18] sm:$0xf]
      %v508 = vld [vmem:[%s3 + $0x1c] sm:$0xf]
      %v509 = vld [vmem:[%s3 + $0x20] sm:$0xf]
      %v510 = vld [vmem:[%s3 + $0x24] sm:$0xf]
      %v511 = vld [vmem:[%s3 + $0x28] sm:$0xf]
      %v512 = vld [vmem:[%s3 + $0x2c] sm:$0xf]
      %v513 = vld [vmem:[%s3 + $0x30] sm:$0xf]
      %v514 = vld [vmem:[%s3 + $0x34] sm:$0xf]
      %v515 = vld [vmem:[%s3 + $0x38] sm:$0xf]
      %v516 = vld [vmem:[%s3 + $0x3c] sm:$0xf]
      %v517 = vld [vmem:[%s4] sm:$0x1]
      %v519 = vlaneseq
      %v520 = vshrl.u32 %v519, 7
      %v521 = vsub.s32 0, %v520
      %v522 = vrot.slane %v517, %v521
      %v540 = vunpack.c.l.b16 %v501
      %v541 = vunpack.c.l.b16 %v502
      %v542 = vunpack.c.l.b16 %v503
      %v543 = vunpack.c.l.b16 %v504
      %v544 = vunpack.c.l.b16 %v505
      %v545 = vunpack.c.l.b16 %v506
      %v546 = vunpack.c.l.b16 %v507
      %v547 = vunpack.c.l.b16 %v508
      %v548 = vunpack.c.l.b16 %v509
      %v549 = vunpack.c.l.b16 %v510
      %v550 = vunpack.c.l.b16 %v511
      %v551 = vunpack.c.l.b16 %v512
      %v552 = vunpack.c.l.b16 %v513
      %v553 = vunpack.c.l.b16 %v514
      %v554 = vunpack.c.l.b16 %v515
      %v555 = vunpack.c.l.b16 %v516
      %v556 = vpack.c.b16 %v541, %v540
      %v557 = vpack.c.b16 %v543, %v542
      %v558 = vpack.c.b16 %v545, %v544
      %v559 = vpack.c.b16 %v547, %v546
      %v560 = vpack.c.b16 %v549, %v548
      %v561 = vpack.c.b16 %v551, %v550
      %v562 = vpack.c.b16 %v553, %v552
      %v563 = vpack.c.b16 %v555, %v554
      %572 = vmatprep.subr.bf16.mxu0 0
      %573 = vmatpush1.bf16.msra.mxu0 %v563
      %574 = vmatprep.subr.bf16.mxu0 0
      %575 = vmatpush1.bf16.msra.mxu0 %v562
      %576 = vmatprep.subr.bf16.mxu0 0
      %577 = vmatpush1.bf16.msra.mxu0 %v561
      %578 = vmatprep.subr.bf16.mxu0 0
      %579 = vmatpush1.bf16.msra.mxu0 %v560
      %580 = vmatprep.subr.bf16.mxu0 0
      %581 = vmatpush1.bf16.msra.mxu0 %v559
      %582 = vmatprep.subr.bf16.mxu0 0
      %583 = vmatpush1.bf16.msra.mxu0 %v558
      %584 = vmatprep.subr.bf16.mxu0 0
      %585 = vmatpush1.bf16.msra.mxu0 %v557
      %586 = vmatprep.subr.bf16.mxu0 0
      %587 = vmatpush1.bf16.msra.mxu0 %v556
      %588 = vmatprep.subr.bf16.mxu0 0
      %589 = vmatpush2.bf16.msra.mxu0 0
      %590 = vmatprep.subr.bf16.mxu0 0
      %591 = vmatpush2.bf16.msra.mxu0 0
      %592 = vmatprep.subr.bf16.mxu0 0
      %593 = vmatpush2.bf16.msra.mxu0 0
      %594 = vmatprep.subr.bf16.mxu0 0
      %595 = vmatpush2.bf16.msra.mxu0 0
      %596 = vmatprep.subr.bf16.mxu0 0
      %597 = vmatpush2.bf16.msra.mxu0 0
      %598 = vmatprep.subr.bf16.mxu0 0
      %599 = vmatpush2.bf16.msra.mxu0 0
      %600 = vmatprep.subr.bf16.mxu0 0
      %601 = vmatpush2.bf16.msra.mxu0 0
      %602 = vmatprep.subr.bf16.mxu0 0
      %603 = vmatpush2.bf16.msra.mxu0 0
      %604 = vmatprep.mubr.bf16.mxu0 0
      %605 = vmatmul.mubr.bf16.gmra.mxu0 %v483
      %v606 = vpop.f32.mrf.mxu0
      %v607 = vadd.f32 %v522, %v606
      %v608 = vpop.f32.mrf.mxu0
      %v609 = vpop.f32.mrf.mxu0
      %v610 = vadd.f32 %v522, %v609
      %v611 = vpop.f32.mrf.mxu0
      %612 = vmatprep.mubr.bf16.mxu0 0
      %613 = vmatmul.mubr.bf16.gmra.mxu0 %v484
      %v614 = vpop.f32.mrf.mxu0
      %v615 = vadd.f32 %v522, %v614
      %v616 = vpop.f32.mrf.mxu0
      %v617 = vpop.f32.mrf.mxu0
      %v618 = vadd.f32 %v522, %v617
      %v619 = vpop.f32.mrf.mxu0
      %620 = vmatprep.mubr.bf16.mxu0 0
      %621 = vmatmul.mubr.bf16.gmra.mxu0 %v485
      %v622 = vpop.f32.mrf.mxu0
      %v623 = vadd.f32 %v522, %v622
      %v624 = vpop.f32.mrf.mxu0
      %v625 = vpop.f32.mrf.mxu0
      %v626 = vadd.f32 %v522, %v625
      %v627 = vpop.f32.mrf.mxu0
      %628 = vmatprep.mubr.bf16.mxu0 0
      %629 = vmatmul.mubr.bf16.gmra.mxu0 %v486
      %v630 = vpop.f32.mrf.mxu0
      %v631 = vadd.f32 %v522, %v630
      %v632 = vpop.f32.mrf.mxu0
      %v633 = vpop.f32.mrf.mxu0
      %v634 = vadd.f32 %v522, %v633
      %v635 = vpop.f32.mrf.mxu0
      %636 = vmatprep.mubr.bf16.mxu0 0
      %637 = vmatmul.mubr.bf16.gmra.mxu0 %v487
      %v638 = vpop.f32.mrf.mxu0
      %v639 = vadd.f32 %v522, %v638
      %v640 = vpop.f32.mrf.mxu0
      %v641 = vpop.f32.mrf.mxu0
      %v642 = vadd.f32 %v522, %v641
      %v643 = vpop.f32.mrf.mxu0
      %644 = vmatprep.mubr.bf16.mxu0 0
      %645 = vmatmul.mubr.bf16.gmra.mxu0 %v488
      %v646 = vpop.f32.mrf.mxu0
      %v647 = vadd.f32 %v522, %v646
      %v648 = vpop.f32.mrf.mxu0
      %v649 = vpop.f32.mrf.mxu0
      %v650 = vadd.f32 %v522, %v649
      %v651 = vpop.f32.mrf.mxu0
      %652 = vmatprep.mubr.bf16.mxu0 0
      %653 = vmatmul.mubr.bf16.gmra.mxu0 %v489
      %v654 = vpop.f32.mrf.mxu0
      %v655 = vadd.f32 %v522, %v654
      %v656 = vpop.f32.mrf.mxu0
      %v657 = vpop.f32.mrf.mxu0
      %v658 = vadd.f32 %v522, %v657
      %v659 = vpop.f32.mrf.mxu0
      %660 = vmatprep.mubr.bf16.mxu0 0
      %661 = vmatmul.mubr.bf16.gmra.mxu0 %v490
      %v662 = vpop.f32.mrf.mxu0
      %v663 = vadd.f32 %v522, %v662
      %v664 = vpop.f32.mrf.mxu0
      %v665 = vpop.f32.mrf.mxu0
      %v666 = vadd.f32 %v522, %v665
      %v667 = vpop.f32.mrf.mxu0
      %668 = vmatprep.mubr.bf16.mxu0 0
      %669 = vmatmul.mubr.bf16.gmra.mxu0 %v491
      %v670 = vpop.f32.mrf.mxu0
      %v671 = vadd.f32 %v522, %v670
      %v672 = vpop.f32.mrf.mxu0
      %v673 = vpop.f32.mrf.mxu0
      %v674 = vadd.f32 %v522, %v673
      %v675 = vpop.f32.mrf.mxu0
      %676 = vmatprep.mubr.bf16.mxu0 0
      %677 = vmatmul.mubr.bf16.gmra.mxu0 %v492
      %v678 = vpop.f32.mrf.mxu0
      %v679 = vadd.f32 %v522, %v678
      %v680 = vpop.f32.mrf.mxu0
      %v681 = vpop.f32.mrf.mxu0
      %v682 = vadd.f32 %v522, %v681
      %v683 = vpop.f32.mrf.mxu0
      %684 = vmatprep.mubr.bf16.mxu0 0
      %685 = vmatmul.mubr.bf16.gmra.mxu0 %v493
      %v686 = vpop.f32.mrf.mxu0
      %v687 = vadd.f32 %v522, %v686
      %v688 = vpop.f32.mrf.mxu0
      %v689 = vpop.f32.mrf.mxu0
      %v690 = vadd.f32 %v522, %v689
      %v691 = vpop.f32.mrf.mxu0
      %692 = vmatprep.mubr.bf16.mxu0 0
      %693 = vmatmul.mubr.bf16.gmra.mxu0 %v494
      %v694 = vpop.f32.mrf.mxu0
      %v695 = vadd.f32 %v522, %v694
      %v696 = vpop.f32.mrf.mxu0
      %v697 = vpop.f32.mrf.mxu0
      %v698 = vadd.f32 %v522, %v697
      %v699 = vpop.f32.mrf.mxu0
      %700 = vmatprep.mubr.bf16.mxu0 0
      %701 = vmatmul.mubr.bf16.gmra.mxu0 %v495
      %v702 = vpop.f32.mrf.mxu0
      %v703 = vadd.f32 %v522, %v702
      %v704 = vpop.f32.mrf.mxu0
      %v705 = vpop.f32.mrf.mxu0
      %v706 = vadd.f32 %v522, %v705
      %v707 = vpop.f32.mrf.mxu0
      %708 = vmatprep.mubr.bf16.mxu0 0
      %709 = vmatmul.mubr.bf16.gmra.mxu0 %v496
      %v710 = vpop.f32.mrf.mxu0
      %v711 = vadd.f32 %v522, %v710
      %v712 = vpop.f32.mrf.mxu0
      %v713 = vpop.f32.mrf.mxu0
      %v714 = vadd.f32 %v522, %v713
      %v715 = vpop.f32.mrf.mxu0
      %716 = vmatprep.mubr.bf16.mxu0 0
      %717 = vmatmul.mubr.bf16.gmra.mxu0 %v497
      %v718 = vpop.f32.mrf.mxu0
      %v719 = vadd.f32 %v522, %v718
      %v720 = vpop.f32.mrf.mxu0
      %v721 = vpop.f32.mrf.mxu0
      %v722 = vadd.f32 %v522, %v721
      %v723 = vpop.f32.mrf.mxu0
      %724 = vmatprep.mubr.bf16.mxu0 0
      %725 = vmatmul.mubr.bf16.gmra.mxu0 %v498
      %v726 = vpop.f32.mrf.mxu0
      %v727 = vadd.f32 %v522, %v726
      %v728 = vpop.f32.mrf.mxu0
      %v729 = vpop.f32.mrf.mxu0
      %v730 = vadd.f32 %v522, %v729
      %v731 = vpop.f32.mrf.mxu0
      %732 = vmatprep.mubr.bf16.mxu0 0
      %733 = vmatmul.mubr.bf16.gmra.mxu0 %v499
      %v734 = vpop.f32.mrf.mxu0
      %v735 = vadd.f32 %v522, %v734
      %v736 = vpop.f32.mrf.mxu0
      %v737 = vpop.f32.mrf.mxu0
      %v738 = vadd.f32 %v522, %v737
      %v739 = vpop.f32.mrf.mxu0
      %740 = vmatprep.mubr.bf16.mxu0 0
      %741 = vmatmul.mubr.bf16.gmra.mxu0 %v500
      %v742 = vpop.f32.mrf.mxu0
      %v743 = vadd.f32 %v522, %v742
      %v744 = vpop.f32.mrf.mxu0
      %v745 = vpop.f32.mrf.mxu0
      %v746 = vadd.f32 %v522, %v745
      %v747 = vpop.f32.mrf.mxu0
      %748 = vdwg.mxu0
      %vm749 = vcmp.ge.f32.partialorder %v607, 0.0
      %vm750 = vcmp.ge.f32.partialorder %v610, 0.0
      %vm751 = vcmp.ge.f32.partialorder %v615, 0.0
      %vm752 = vcmp.ge.f32.partialorder %v618, 0.0
      %vm753 = vcmp.ge.f32.partialorder %v623, 0.0
      %vm754 = vcmp.ge.f32.partialorder %v626, 0.0
      %vm755 = vcmp.ge.f32.partialorder %v631, 0.0
      %vm756 = vcmp.ge.f32.partialorder %v634, 0.0
      %vm757 = vcmp.ge.f32.partialorder %v639, 0.0
      %vm758 = vcmp.ge.f32.partialorder %v642, 0.0
      %vm759 = vcmp.ge.f32.partialorder %v647, 0.0
      %vm760 = vcmp.ge.f32.partialorder %v650, 0.0
      %vm761 = vcmp.ge.f32.partialorder %v655, 0.0
      %vm762 = vcmp.ge.f32.partialorder %v658, 0.0
      %vm763 = vcmp.ge.f32.partialorder %v663, 0.0
      %vm764 = vcmp.ge.f32.partialorder %v666, 0.0
      %vm765 = vcmp.ge.f32.partialorder %v671, 0.0
      %vm766 = vcmp.ge.f32.partialorder %v674, 0.0
      %vm767 = vcmp.ge.f32.partialorder %v679, 0.0
      %vm768 = vcmp.ge.f32.partialorder %v682, 0.0
      %vm769 = vcmp.ge.f32.partialorder %v687, 0.0
      %vm770 = vcmp.ge.f32.partialorder %v690, 0.0
      %vm771 = vcmp.ge.f32.partialorder %v695, 0.0
      %vm772 = vcmp.ge.f32.partialorder %v698, 0.0
      %vm773 = vcmp.ge.f32.partialorder %v703, 0.0
      %vm774 = vcmp.ge.f32.partialorder %v706, 0.0
      %vm775 = vcmp.ge.f32.partialorder %v711, 0.0
      %vm776 = vcmp.ge.f32.partialorder %v714, 0.0
      %vm777 = vcmp.ge.f32.partialorder %v719, 0.0
      %vm778 = vcmp.ge.f32.partialorder %v722, 0.0
      %vm779 = vcmp.ge.f32.partialorder %v727, 0.0
      %vm780 = vcmp.ge.f32.partialorder %v730, 0.0
      %vm781 = vcmp.ge.f32.partialorder %v735, 0.0
      %vm782 = vcmp.ge.f32.partialorder %v738, 0.0
      %vm783 = vcmp.ge.f32.partialorder %v743, 0.0
      %vm784 = vcmp.ge.f32.partialorder %v746, 0.0
      %v785 = vmul.f32 %v607, 0.1
      %v786 = vmul.f32 %v610, 0.1
      %v787 = vmul.f32 %v615, 0.1
      %v788 = vmul.f32 %v618, 0.1
      %v789 = vmul.f32 %v623, 0.1
      %v790 = vmul.f32 %v626, 0.1
      %v791 = vmul.f32 %v631, 0.1
      %v792 = vmul.f32 %v634, 0.1
      %v793 = vmul.f32 %v639, 0.1
      %v794 = vmul.f32 %v642, 0.1
      %v795 = vmul.f32 %v647, 0.1
      %v796 = vmul.f32 %v650, 0.1
      %v797 = vmul.f32 %v655, 0.1
      %v798 = vmul.f32 %v658, 0.1
      %v799 = vmul.f32 %v663, 0.1
      %v800 = vmul.f32 %v666, 0.1
      %v801 = vmul.f32 %v671, 0.1
      %v802 = vmul.f32 %v674, 0.1
      %v803 = vmul.f32 %v679, 0.1
      %v804 = vmul.f32 %v682, 0.1
      %v805 = vmul.f32 %v687, 0.1
      %v806 = vmul.f32 %v690, 0.1
      %v807 = vmul.f32 %v695, 0.1
      %v808 = vmul.f32 %v698, 0.1
      %v809 = vmul.f32 %v703, 0.1
      %v810 = vmul.f32 %v706, 0.1
      %v811 = vmul.f32 %v711, 0.1
      %v812 = vmul.f32 %v714, 0.1
      %v813 = vmul.f32 %v719, 0.1
      %v814 = vmul.f32 %v722, 0.1
      %v815 = vmul.f32 %v727, 0.1
      %v816 = vmul.f32 %v730, 0.1
      %v817 = vmul.f32 %v735, 0.1
      %v818 = vmul.f32 %v738, 0.1
      %v819 = vmul.f32 %v743, 0.1
      %v820 = vmul.f32 %v746, 0.1
      %v821 = vsel %vm749, %v607, %v785
      %v822 = vsel %vm750, %v610, %v786
      %v823 = vsel %vm751, %v615, %v787
      %v824 = vsel %vm752, %v618, %v788
      %v825 = vsel %vm753, %v623, %v789
      %v826 = vsel %vm754, %v626, %v790
      %v827 = vsel %vm755, %v631, %v791
      %v828 = vsel %vm756, %v634, %v792
      %v829 = vsel %vm757, %v639, %v793
      %v830 = vsel %vm758, %v642, %v794
      %v831 = vsel %vm759, %v647, %v795
      %v832 = vsel %vm760, %v650, %v796
      %v833 = vsel %vm761, %v655, %v797
      %v834 = vsel %vm762, %v658, %v798
      %v835 = vsel %vm763, %v663, %v799
      %v836 = vsel %vm764, %v666, %v800
      %v837 = vsel %vm765, %v671, %v801
      %v838 = vsel %vm766, %v674, %v802
      %v839 = vsel %vm767, %v679, %v803
      %v840 = vsel %vm768, %v682, %v804
      %v841 = vsel %vm769, %v687, %v805
      %v842 = vsel %vm770, %v690, %v806
      %v843 = vsel %vm771, %v695, %v807
      %v844 = vsel %vm772, %v698, %v808
      %v845 = vsel %vm773, %v703, %v809
      %v846 = vsel %vm774, %v706, %v810
      %v847 = vsel %vm775, %v711, %v811
      %v848 = vsel %vm776, %v714, %v812
      %v849 = vsel %vm777, %v719, %v813
      %v850 = vsel %vm778, %v722, %v814
      %v851 = vsel %vm779, %v727, %v815
      %v852 = vsel %vm780, %v730, %v816
      %v853 = vsel %vm781, %v735, %v817
      %v854 = vsel %vm782, %v738, %v818
      %v855 = vsel %vm783, %v743, %v819
      %v856 = vsel %vm784, %v746, %v820
      %v857 = vlaneseq
      %v858 = vshrl.u32 %v857, 7
      %v859 = vadd.s32 %v858, 8
      %v860 = vadd.s32 %v858, 16
      %v861 = vadd.s32 %v858, 24
      %v862 = vadd.s32 %v858, 32
      %v863 = vadd.s32 %v858, 40
      %v864 = vadd.s32 %v858, 48
      %v865 = vadd.s32 %v858, 56
      %v866 = vadd.s32 %v858, 64
      %v867 = vadd.s32 %v858, 72
      %v868 = vadd.s32 %v858, 80
      %v869 = vadd.s32 %v858, 88
      %v870 = vadd.s32 %v858, 96
      %v871 = vadd.s32 %v858, 104
      %v872 = vadd.s32 %v858, 112
      %v873 = vadd.s32 %v858, 120
      %v874 = vadd.s32 %v858, 128
      %v875 = vadd.s32 %v858, 136
      %v876 = vadd.s32 %v858, 144
      %v877 = vadd.s32 %v858, 152
      %v878 = vadd.s32 %v858, 160
      %v879 = vadd.s32 %v858, 168
      %v880 = vadd.s32 %v858, 176
      %v881 = vadd.s32 %v858, 184
      %v882 = vadd.s32 %v858, 192
      %v883 = vadd.s32 %v858, 200
      %v884 = vadd.s32 %v858, 208
      %v885 = vadd.s32 %v858, 216
      %v886 = vadd.s32 %v858, 224
      %v887 = vadd.s32 %v858, 232
      %v888 = vadd.s32 %v858, 240
      %v889 = vadd.s32 %v858, 248
      %v890 = vadd.s32 %v858, 256
      %v891 = vadd.s32 %v858, 264
      %v892 = vadd.s32 %v858, 272
      %v893 = vadd.s32 %v858, 280
      %p894 = scmp.gt.s32.totalorder %s23, 0
      %s895 = scalar_select %p894, 1, 0
      %s896 = scvt.s32.f32 %s895
      %p897 = scmp.lt.s32.totalorder %s23, 0
      %s898 = scalar_select %p897, 1, 0
      %s899 = scvt.s32.f32 %s898
      %vm900 = vcmp.lt.s32.totalorder %v858, 16
      %vm901 = vcmp.lt.s32.totalorder %v859, 16
      %vm902 = vcmp.lt.s32.totalorder %v860, 16
      %vm903 = vcmp.lt.s32.totalorder %v861, 16
      %vm904 = vcmp.lt.s32.totalorder %v862, 16
      %vm905 = vcmp.lt.s32.totalorder %v863, 16
      %vm906 = vcmp.lt.s32.totalorder %v864, 16
      %vm907 = vcmp.lt.s32.totalorder %v865, 16
      %vm908 = vcmp.lt.s32.totalorder %v866, 16
      %vm909 = vcmp.lt.s32.totalorder %v867, 16
      %vm910 = vcmp.lt.s32.totalorder %v868, 16
      %vm911 = vcmp.lt.s32.totalorder %v869, 16
      %vm912 = vcmp.lt.s32.totalorder %v870, 16
      %vm913 = vcmp.lt.s32.totalorder %v871, 16
      %vm914 = vcmp.lt.s32.totalorder %v872, 16
      %vm915 = vcmp.lt.s32.totalorder %v873, 16
      %vm916 = vcmp.lt.s32.totalorder %v874, 16
      %vm917 = vcmp.lt.s32.totalorder %v875, 16
      %vm918 = vcmp.lt.s32.totalorder %v876, 16
      %vm919 = vcmp.lt.s32.totalorder %v877, 16
      %vm920 = vcmp.lt.s32.totalorder %v878, 16
      %vm921 = vcmp.lt.s32.totalorder %v879, 16
      %vm922 = vcmp.lt.s32.totalorder %v880, 16
      %vm923 = vcmp.lt.s32.totalorder %v881, 16
      %vm924 = vcmp.lt.s32.totalorder %v882, 16
      %vm925 = vcmp.lt.s32.totalorder %v883, 16
      %vm926 = vcmp.lt.s32.totalorder %v884, 16
      %vm927 = vcmp.lt.s32.totalorder %v885, 16
      %vm928 = vcmp.lt.s32.totalorder %v886, 16
      %vm929 = vcmp.lt.s32.totalorder %v887, 16
      %vm930 = vcmp.lt.s32.totalorder %v888, 16
      %vm931 = vcmp.lt.s32.totalorder %v889, 16
      %vm932 = vcmp.lt.s32.totalorder %v890, 16
      %vm933 = vcmp.lt.s32.totalorder %v891, 16
      %vm934 = vcmp.lt.s32.totalorder %v892, 16
      %vm935 = vcmp.lt.s32.totalorder %v893, 16
      %v936 = vstv %s896
      %v937 = vsel %vm900, %v936, 1.0
      %v938 = vsel %vm901, %v936, 1.0
      %v939 = vsel %vm902, %v936, 1.0
      %v940 = vsel %vm903, %v936, 1.0
      %v941 = vsel %vm904, %v936, 1.0
      %v942 = vsel %vm905, %v936, 1.0
      %v943 = vsel %vm906, %v936, 1.0
      %v944 = vsel %vm907, %v936, 1.0
      %v945 = vsel %vm908, %v936, 1.0
      %v946 = vsel %vm909, %v936, 1.0
      %v947 = vsel %vm910, %v936, 1.0
      %v948 = vsel %vm911, %v936, 1.0
      %v949 = vsel %vm912, %v936, 1.0
      %v950 = vsel %vm913, %v936, 1.0
      %v951 = vsel %vm914, %v936, 1.0
      %v952 = vsel %vm915, %v936, 1.0
      %v953 = vsel %vm916, %v936, 1.0
      %v954 = vsel %vm917, %v936, 1.0
      %v955 = vsel %vm918, %v936, 1.0
      %v956 = vsel %vm919, %v936, 1.0
      %v957 = vsel %vm920, %v936, 1.0
      %v958 = vsel %vm921, %v936, 1.0
      %v959 = vsel %vm922, %v936, 1.0
      %v960 = vsel %vm923, %v936, 1.0
      %v961 = vsel %vm924, %v936, 1.0
      %v962 = vsel %vm925, %v936, 1.0
      %v963 = vsel %vm926, %v936, 1.0
      %v964 = vsel %vm927, %v936, 1.0
      %v965 = vsel %vm928, %v936, 1.0
      %v966 = vsel %vm929, %v936, 1.0
      %v967 = vsel %vm930, %v936, 1.0
      %v968 = vsel %vm931, %v936, 1.0
      %v969 = vsel %vm932, %v936, 1.0
      %v970 = vsel %vm933, %v936, 1.0
      %v971 = vsel %vm934, %v936, 1.0
      %v972 = vsel %vm935, %v936, 1.0
      %vm973 = vcmp.ge.s32.totalorder %v858, 272
      %vm974 = vcmp.ge.s32.totalorder %v859, 272
      %vm975 = vcmp.ge.s32.totalorder %v860, 272
      %vm976 = vcmp.ge.s32.totalorder %v861, 272
      %vm977 = vcmp.ge.s32.totalorder %v862, 272
      %vm978 = vcmp.ge.s32.totalorder %v863, 272
      %vm979 = vcmp.ge.s32.totalorder %v864, 272
      %vm980 = vcmp.ge.s32.totalorder %v865, 272
      %vm981 = vcmp.ge.s32.totalorder %v866, 272
      %vm982 = vcmp.ge.s32.totalorder %v867, 272
      %vm983 = vcmp.ge.s32.totalorder %v868, 272
      %vm984 = vcmp.ge.s32.totalorder %v869, 272
      %vm985 = vcmp.ge.s32.totalorder %v870, 272
      %vm986 = vcmp.ge.s32.totalorder %v871, 272
      %vm987 = vcmp.ge.s32.totalorder %v872, 272
      %vm988 = vcmp.ge.s32.totalorder %v873, 272
      %vm989 = vcmp.ge.s32.totalorder %v874, 272
      %vm990 = vcmp.ge.s32.totalorder %v875, 272
      %vm991 = vcmp.ge.s32.totalorder %v876, 272
      %vm992 = vcmp.ge.s32.totalorder %v877, 272
      %vm993 = vcmp.ge.s32.totalorder %v878, 272
      %vm994 = vcmp.ge.s32.totalorder %v879, 272
      %vm995 = vcmp.ge.s32.totalorder %v880, 272
      %vm996 = vcmp.ge.s32.totalorder %v881, 272
      %vm997 = vcmp.ge.s32.totalorder %v882, 272
      %vm998 = vcmp.ge.s32.totalorder %v883, 272
      %vm999 = vcmp.ge.s32.totalorder %v884, 272
      %vm1000 = vcmp.ge.s32.totalorder %v885, 272
      %vm1001 = vcmp.ge.s32.totalorder %v886, 272
      %vm1002 = vcmp.ge.s32.totalorder %v887, 272
      %vm1003 = vcmp.ge.s32.totalorder %v888, 272
      %vm1004 = vcmp.ge.s32.totalorder %v889, 272
      %vm1005 = vcmp.ge.s32.totalorder %v890, 272
      %vm1006 = vcmp.ge.s32.totalorder %v891, 272
      %vm1007 = vcmp.ge.s32.totalorder %v892, 272
      %vm1008 = vcmp.ge.s32.totalorder %v893, 272
      %v1009 = vstv %s899
      %v1010 = vsel %vm973, %v1009, 1.0
      %v1011 = vsel %vm974, %v1009, 1.0
      %v1012 = vsel %vm975, %v1009, 1.0
      %v1013 = vsel %vm976, %v1009, 1.0
      %v1014 = vsel %vm977, %v1009, 1.0
      %v1015 = vsel %vm978, %v1009, 1.0
      %v1016 = vsel %vm979, %v1009, 1.0
      %v1017 = vsel %vm980, %v1009, 1.0
      %v1018 = vsel %vm981, %v1009, 1.0
      %v1019 = vsel %vm982, %v1009, 1.0
      %v1020 = vsel %vm983, %v1009, 1.0
      %v1021 = vsel %vm984, %v1009, 1.0
      %v1022 = vsel %vm985, %v1009, 1.0
      %v1023 = vsel %vm986, %v1009, 1.0
      %v1024 = vsel %vm987, %v1009, 1.0
      %v1025 = vsel %vm988, %v1009, 1.0
      %v1026 = vsel %vm989, %v1009, 1.0
      %v1027 = vsel %vm990, %v1009, 1.0
      %v1028 = vsel %vm991, %v1009, 1.0
      %v1029 = vsel %vm992, %v1009, 1.0
      %v1030 = vsel %vm993, %v1009, 1.0
      %v1031 = vsel %vm994, %v1009, 1.0
      %v1032 = vsel %vm995, %v1009, 1.0
      %v1033 = vsel %vm996, %v1009, 1.0
      %v1034 = vsel %vm997, %v1009, 1.0
      %v1035 = vsel %vm998, %v1009, 1.0
      %v1036 = vsel %vm999, %v1009, 1.0
      %v1037 = vsel %vm1000, %v1009, 1.0
      %v1038 = vsel %vm1001, %v1009, 1.0
      %v1039 = vsel %vm1002, %v1009, 1.0
      %v1040 = vsel %vm1003, %v1009, 1.0
      %v1041 = vsel %vm1004, %v1009, 1.0
      %v1042 = vsel %vm1005, %v1009, 1.0
      %v1043 = vsel %vm1006, %v1009, 1.0
      %v1044 = vsel %vm1007, %v1009, 1.0
      %v1045 = vsel %vm1008, %v1009, 1.0
      %v1046 = vmul.f32 %v937, %v1010
      %v1047 = vmul.f32 %v938, %v1011
      %v1048 = vmul.f32 %v939, %v1012
      %v1049 = vmul.f32 %v940, %v1013
      %v1050 = vmul.f32 %v941, %v1014
      %v1051 = vmul.f32 %v942, %v1015
      %v1052 = vmul.f32 %v943, %v1016
      %v1053 = vmul.f32 %v944, %v1017
      %v1054 = vmul.f32 %v945, %v1018
      %v1055 = vmul.f32 %v946, %v1019
      %v1056 = vmul.f32 %v947, %v1020
      %v1057 = vmul.f32 %v948, %v1021
      %v1058 = vmul.f32 %v949, %v1022
      %v1059 = vmul.f32 %v950, %v1023
      %v1060 = vmul.f32 %v951, %v1024
      %v1061 = vmul.f32 %v952, %v1025
      %v1062 = vmul.f32 %v953, %v1026
      %v1063 = vmul.f32 %v954, %v1027
      %v1064 = vmul.f32 %v955, %v1028
      %v1065 = vmul.f32 %v956, %v1029
      %v1066 = vmul.f32 %v957, %v1030
      %v1067 = vmul.f32 %v958, %v1031
      %v1068 = vmul.f32 %v959, %v1032
      %v1069 = vmul.f32 %v960, %v1033
      %v1070 = vmul.f32 %v961, %v1034
      %v1071 = vmul.f32 %v962, %v1035
      %v1072 = vmul.f32 %v963, %v1036
      %v1073 = vmul.f32 %v964, %v1037
      %v1074 = vmul.f32 %v965, %v1038
      %v1075 = vmul.f32 %v966, %v1039
      %v1076 = vmul.f32 %v967, %v1040
      %v1077 = vmul.f32 %v968, %v1041
      %v1078 = vmul.f32 %v969, %v1042
      %v1079 = vmul.f32 %v970, %v1043
      %v1080 = vmul.f32 %v971, %v1044
      %v1081 = vmul.f32 %v972, %v1045
      %v1082 = vmul.f32 %v821, %v1046
      %v1083 = vmul.f32 %v822, %v1047
      %v1084 = vmul.f32 %v823, %v1048
      %v1085 = vmul.f32 %v824, %v1049
      %v1086 = vmul.f32 %v825, %v1050
      %v1087 = vmul.f32 %v826, %v1051
      %v1088 = vmul.f32 %v827, %v1052
      %v1089 = vmul.f32 %v828, %v1053
      %v1090 = vmul.f32 %v829, %v1054
      %v1091 = vmul.f32 %v830, %v1055
      %v1092 = vmul.f32 %v831, %v1056
      %v1093 = vmul.f32 %v832, %v1057
      %v1094 = vmul.f32 %v833, %v1058
      %v1095 = vmul.f32 %v834, %v1059
      %v1096 = vmul.f32 %v835, %v1060
      %v1097 = vmul.f32 %v836, %v1061
      %v1098 = vmul.f32 %v837, %v1062
      %v1099 = vmul.f32 %v838, %v1063
      %v1100 = vmul.f32 %v839, %v1064
      %v1101 = vmul.f32 %v840, %v1065
      %v1102 = vmul.f32 %v841, %v1066
      %v1103 = vmul.f32 %v842, %v1067
      %v1104 = vmul.f32 %v843, %v1068
      %v1105 = vmul.f32 %v844, %v1069
      %v1106 = vmul.f32 %v845, %v1070
      %v1107 = vmul.f32 %v846, %v1071
      %v1108 = vmul.f32 %v847, %v1072
      %v1109 = vmul.f32 %v848, %v1073
      %v1110 = vmul.f32 %v849, %v1074
      %v1111 = vmul.f32 %v850, %v1075
      %v1112 = vmul.f32 %v851, %v1076
      %v1113 = vmul.f32 %v852, %v1077
      %v1114 = vmul.f32 %v853, %v1078
      %v1115 = vmul.f32 %v854, %v1079
      %v1116 = vmul.f32 %v855, %v1080
      %v1117 = vmul.f32 %v856, %v1081
      %vm1118 = vcmp.lt.s32.totalorder %v858, 0
      %v1119 = vsub.s32 0, %v858
      %v1120 = vsel %vm1118, %v1119, %v858
      %v1121 = vshrl.u32 %v1120, 4
      %v1122 = vand.u32 %v1120, 15
      %v1123 = vsub.s32 0, %v1122
      %v1124 = vsel %vm1118, %v1123, %v1122
      %vm1125 = vcmp.lt.s32.totalorder %v859, 0
      %v1126 = vsub.s32 0, %v859
      %v1127 = vsel %vm1125, %v1126, %v859
      %v1128 = vshrl.u32 %v1127, 4
      %v1129 = vand.u32 %v1127, 15
      %v1130 = vsub.s32 0, %v1129
      %v1131 = vsel %vm1125, %v1130, %v1129
      %vm1132 = vcmp.lt.s32.totalorder %v860, 0
      %v1133 = vsub.s32 0, %v860
      %v1134 = vsel %vm1132, %v1133, %v860
      %v1135 = vshrl.u32 %v1134, 4
      %v1136 = vand.u32 %v1134, 15
      %v1137 = vsub.s32 0, %v1136
      %v1138 = vsel %vm1132, %v1137, %v1136
      %vm1139 = vcmp.lt.s32.totalorder %v861, 0
      %v1140 = vsub.s32 0, %v861
      %v1141 = vsel %vm1139, %v1140, %v861
      %v1142 = vshrl.u32 %v1141, 4
      %v1143 = vand.u32 %v1141, 15
      %v1144 = vsub.s32 0, %v1143
      %v1145 = vsel %vm1139, %v1144, %v1143
      %vm1146 = vcmp.lt.s32.totalorder %v862, 0
      %v1147 = vsub.s32 0, %v862
      %v1148 = vsel %vm1146, %v1147, %v862
      %v1149 = vshrl.u32 %v1148, 4
      %v1150 = vand.u32 %v1148, 15
      %v1151 = vsub.s32 0, %v1150
      %v1152 = vsel %vm1146, %v1151, %v1150
      %vm1153 = vcmp.lt.s32.totalorder %v863, 0
      %v1154 = vsub.s32 0, %v863
      %v1155 = vsel %vm1153, %v1154, %v863
      %v1156 = vshrl.u32 %v1155, 4
      %v1157 = vand.u32 %v1155, 15
      %v1158 = vsub.s32 0, %v1157
      %v1159 = vsel %vm1153, %v1158, %v1157
      %vm1160 = vcmp.lt.s32.totalorder %v864, 0
      %v1161 = vsub.s32 0, %v864
      %v1162 = vsel %vm1160, %v1161, %v864
      %v1163 = vshrl.u32 %v1162, 4
      %v1164 = vand.u32 %v1162, 15
      %v1165 = vsub.s32 0, %v1164
      %v1166 = vsel %vm1160, %v1165, %v1164
      %vm1167 = vcmp.lt.s32.totalorder %v865, 0
      %v1168 = vsub.s32 0, %v865
      %v1169 = vsel %vm1167, %v1168, %v865
      %v1170 = vshrl.u32 %v1169, 4
      %v1171 = vand.u32 %v1169, 15
      %v1172 = vsub.s32 0, %v1171
      %v1173 = vsel %vm1167, %v1172, %v1171
      %vm1174 = vcmp.lt.s32.totalorder %v866, 0
      %v1175 = vsub.s32 0, %v866
      %v1176 = vsel %vm1174, %v1175, %v866
      %v1177 = vshrl.u32 %v1176, 4
      %v1178 = vand.u32 %v1176, 15
      %v1179 = vsub.s32 0, %v1178
      %v1180 = vsel %vm1174, %v1179, %v1178
      %vm1181 = vcmp.lt.s32.totalorder %v867, 0
      %v1182 = vsub.s32 0, %v867
      %v1183 = vsel %vm1181, %v1182, %v867
      %v1184 = vshrl.u32 %v1183, 4
      %v1185 = vand.u32 %v1183, 15
      %v1186 = vsub.s32 0, %v1185
      %v1187 = vsel %vm1181, %v1186, %v1185
      %vm1188 = vcmp.lt.s32.totalorder %v868, 0
      %v1189 = vsub.s32 0, %v868
      %v1190 = vsel %vm1188, %v1189, %v868
      %v1191 = vshrl.u32 %v1190, 4
      %v1192 = vand.u32 %v1190, 15
      %v1193 = vsub.s32 0, %v1192
      %v1194 = vsel %vm1188, %v1193, %v1192
      %vm1195 = vcmp.lt.s32.totalorder %v869, 0
      %v1196 = vsub.s32 0, %v869
      %v1197 = vsel %vm1195, %v1196, %v869
      %v1198 = vshrl.u32 %v1197, 4
      %v1199 = vand.u32 %v1197, 15
      %v1200 = vsub.s32 0, %v1199
      %v1201 = vsel %vm1195, %v1200, %v1199
      %vm1202 = vcmp.lt.s32.totalorder %v870, 0
      %v1203 = vsub.s32 0, %v870
      %v1204 = vsel %vm1202, %v1203, %v870
      %v1205 = vshrl.u32 %v1204, 4
      %v1206 = vand.u32 %v1204, 15
      %v1207 = vsub.s32 0, %v1206
      %v1208 = vsel %vm1202, %v1207, %v1206
      %vm1209 = vcmp.lt.s32.totalorder %v871, 0
      %v1210 = vsub.s32 0, %v871
      %v1211 = vsel %vm1209, %v1210, %v871
      %v1212 = vshrl.u32 %v1211, 4
      %v1213 = vand.u32 %v1211, 15
      %v1214 = vsub.s32 0, %v1213
      %v1215 = vsel %vm1209, %v1214, %v1213
      %vm1216 = vcmp.lt.s32.totalorder %v872, 0
      %v1217 = vsub.s32 0, %v872
      %v1218 = vsel %vm1216, %v1217, %v872
      %v1219 = vshrl.u32 %v1218, 4
      %v1220 = vand.u32 %v1218, 15
      %v1221 = vsub.s32 0, %v1220
      %v1222 = vsel %vm1216, %v1221, %v1220
      %vm1223 = vcmp.lt.s32.totalorder %v873, 0
      %v1224 = vsub.s32 0, %v873
      %v1225 = vsel %vm1223, %v1224, %v873
      %v1226 = vshrl.u32 %v1225, 4
      %v1227 = vand.u32 %v1225, 15
      %v1228 = vsub.s32 0, %v1227
      %v1229 = vsel %vm1223, %v1228, %v1227
      %vm1230 = vcmp.lt.s32.totalorder %v874, 0
      %v1231 = vsub.s32 0, %v874
      %v1232 = vsel %vm1230, %v1231, %v874
      %v1233 = vshrl.u32 %v1232, 4
      %v1234 = vand.u32 %v1232, 15
      %v1235 = vsub.s32 0, %v1234
      %v1236 = vsel %vm1230, %v1235, %v1234
      %vm1237 = vcmp.lt.s32.totalorder %v875, 0
      %v1238 = vsub.s32 0, %v875
      %v1239 = vsel %vm1237, %v1238, %v875
      %v1240 = vshrl.u32 %v1239, 4
      %v1241 = vand.u32 %v1239, 15
      %v1242 = vsub.s32 0, %v1241
      %v1243 = vsel %vm1237, %v1242, %v1241
      %vm1244 = vcmp.lt.s32.totalorder %v876, 0
      %v1245 = vsub.s32 0, %v876
      %v1246 = vsel %vm1244, %v1245, %v876
      %v1247 = vshrl.u32 %v1246, 4
      %v1248 = vand.u32 %v1246, 15
      %v1249 = vsub.s32 0, %v1248
      %v1250 = vsel %vm1244, %v1249, %v1248
      %vm1251 = vcmp.lt.s32.totalorder %v877, 0
      %v1252 = vsub.s32 0, %v877
      %v1253 = vsel %vm1251, %v1252, %v877
      %v1254 = vshrl.u32 %v1253, 4
      %v1255 = vand.u32 %v1253, 15
      %v1256 = vsub.s32 0, %v1255
      %v1257 = vsel %vm1251, %v1256, %v1255
      %vm1258 = vcmp.lt.s32.totalorder %v878, 0
      %v1259 = vsub.s32 0, %v878
      %v1260 = vsel %vm1258, %v1259, %v878
      %v1261 = vshrl.u32 %v1260, 4
      %v1262 = vand.u32 %v1260, 15
      %v1263 = vsub.s32 0, %v1262
      %v1264 = vsel %vm1258, %v1263, %v1262
      %vm1265 = vcmp.lt.s32.totalorder %v879, 0
      %v1266 = vsub.s32 0, %v879
      %v1267 = vsel %vm1265, %v1266, %v879
      %v1268 = vshrl.u32 %v1267, 4
      %v1269 = vand.u32 %v1267, 15
      %v1270 = vsub.s32 0, %v1269
      %v1271 = vsel %vm1265, %v1270, %v1269
      %vm1272 = vcmp.lt.s32.totalorder %v880, 0
      %v1273 = vsub.s32 0, %v880
      %v1274 = vsel %vm1272, %v1273, %v880
      %v1275 = vshrl.u32 %v1274, 4
      %v1276 = vand.u32 %v1274, 15
      %v1277 = vsub.s32 0, %v1276
      %v1278 = vsel %vm1272, %v1277, %v1276
      %vm1279 = vcmp.lt.s32.totalorder %v881, 0
      %v1280 = vsub.s32 0, %v881
      %v1281 = vsel %vm1279, %v1280, %v881
      %v1282 = vshrl.u32 %v1281, 4
      %v1283 = vand.u32 %v1281, 15
      %v1284 = vsub.s32 0, %v1283
      %v1285 = vsel %vm1279, %v1284, %v1283
      %vm1286 = vcmp.lt.s32.totalorder %v882, 0
      %v1287 = vsub.s32 0, %v882
      %v1288 = vsel %vm1286, %v1287, %v882
      %v1289 = vshrl.u32 %v1288, 4
      %v1290 = vand.u32 %v1288, 15
      %v1291 = vsub.s32 0, %v1290
      %v1292 = vsel %vm1286, %v1291, %v1290
      %vm1293 = vcmp.lt.s32.totalorder %v883, 0
      %v1294 = vsub.s32 0, %v883
      %v1295 = vsel %vm1293, %v1294, %v883
      %v1296 = vshrl.u32 %v1295, 4
      %v1297 = vand.u32 %v1295, 15
      %v1298 = vsub.s32 0, %v1297
      %v1299 = vsel %vm1293, %v1298, %v1297
      %vm1300 = vcmp.lt.s32.totalorder %v884, 0
      %v1301 = vsub.s32 0, %v884
      %v1302 = vsel %vm1300, %v1301, %v884
      %v1303 = vshrl.u32 %v1302, 4
      %v1304 = vand.u32 %v1302, 15
      %v1305 = vsub.s32 0, %v1304
      %v1306 = vsel %vm1300, %v1305, %v1304
      %vm1307 = vcmp.lt.s32.totalorder %v885, 0
      %v1308 = vsub.s32 0, %v885
      %v1309 = vsel %vm1307, %v1308, %v885
      %v1310 = vshrl.u32 %v1309, 4
      %v1311 = vand.u32 %v1309, 15
      %v1312 = vsub.s32 0, %v1311
      %v1313 = vsel %vm1307, %v1312, %v1311
      %vm1314 = vcmp.lt.s32.totalorder %v886, 0
      %v1315 = vsub.s32 0, %v886
      %v1316 = vsel %vm1314, %v1315, %v886
      %v1317 = vshrl.u32 %v1316, 4
      %v1318 = vand.u32 %v1316, 15
      %v1319 = vsub.s32 0, %v1318
      %v1320 = vsel %vm1314, %v1319, %v1318
      %vm1321 = vcmp.lt.s32.totalorder %v887, 0
      %v1322 = vsub.s32 0, %v887
      %v1323 = vsel %vm1321, %v1322, %v887
      %v1324 = vshrl.u32 %v1323, 4
      %v1325 = vand.u32 %v1323, 15
      %v1326 = vsub.s32 0, %v1325
      %v1327 = vsel %vm1321, %v1326, %v1325
      %vm1328 = vcmp.lt.s32.totalorder %v888, 0
      %v1329 = vsub.s32 0, %v888
      %v1330 = vsel %vm1328, %v1329, %v888
      %v1331 = vshrl.u32 %v1330, 4
      %v1332 = vand.u32 %v1330, 15
      %v1333 = vsub.s32 0, %v1332
      %v1334 = vsel %vm1328, %v1333, %v1332
      %vm1335 = vcmp.lt.s32.totalorder %v889, 0
      %v1336 = vsub.s32 0, %v889
      %v1337 = vsel %vm1335, %v1336, %v889
      %v1338 = vshrl.u32 %v1337, 4
      %v1339 = vand.u32 %v1337, 15
      %v1340 = vsub.s32 0, %v1339
      %v1341 = vsel %vm1335, %v1340, %v1339
      %vm1342 = vcmp.lt.s32.totalorder %v890, 0
      %v1343 = vsub.s32 0, %v890
      %v1344 = vsel %vm1342, %v1343, %v890
      %v1345 = vshrl.u32 %v1344, 4
      %v1346 = vand.u32 %v1344, 15
      %v1347 = vsub.s32 0, %v1346
      %v1348 = vsel %vm1342, %v1347, %v1346
      %vm1349 = vcmp.lt.s32.totalorder %v891, 0
      %v1350 = vsub.s32 0, %v891
      %v1351 = vsel %vm1349, %v1350, %v891
      %v1352 = vshrl.u32 %v1351, 4
      %v1353 = vand.u32 %v1351, 15
      %v1354 = vsub.s32 0, %v1353
      %v1355 = vsel %vm1349, %v1354, %v1353
      %vm1356 = vcmp.lt.s32.totalorder %v892, 0
      %v1357 = vsub.s32 0, %v892
      %v1358 = vsel %vm1356, %v1357, %v892
      %v1359 = vshrl.u32 %v1358, 4
      %v1360 = vand.u32 %v1358, 15
      %v1361 = vsub.s32 0, %v1360
      %v1362 = vsel %vm1356, %v1361, %v1360
      %vm1363 = vcmp.lt.s32.totalorder %v893, 0
      %v1364 = vsub.s32 0, %v893
      %v1365 = vsel %vm1363, %v1364, %v893
      %v1366 = vshrl.u32 %v1365, 4
      %v1367 = vand.u32 %v1365, 15
      %v1368 = vsub.s32 0, %v1367
      %v1369 = vsel %vm1363, %v1368, %v1367
      %vm1370 = vcmp.ne.s32.totalorder %v1124, 0
      %vm1371 = vcmp.ne.s32.totalorder %v1131, 0
      %vm1372 = vcmp.ne.s32.totalorder %v1138, 0
      %vm1373 = vcmp.ne.s32.totalorder %v1145, 0
      %vm1374 = vcmp.ne.s32.totalorder %v1152, 0
      %vm1375 = vcmp.ne.s32.totalorder %v1159, 0
      %vm1376 = vcmp.ne.s32.totalorder %v1166, 0
      %vm1377 = vcmp.ne.s32.totalorder %v1173, 0
      %vm1378 = vcmp.ne.s32.totalorder %v1180, 0
      %vm1379 = vcmp.ne.s32.totalorder %v1187, 0
      %vm1380 = vcmp.ne.s32.totalorder %v1194, 0
      %vm1381 = vcmp.ne.s32.totalorder %v1201, 0
      %vm1382 = vcmp.ne.s32.totalorder %v1208, 0
      %vm1383 = vcmp.ne.s32.totalorder %v1215, 0
      %vm1384 = vcmp.ne.s32.totalorder %v1222, 0
      %vm1385 = vcmp.ne.s32.totalorder %v1229, 0
      %vm1386 = vcmp.ne.s32.totalorder %v1236, 0
      %vm1387 = vcmp.ne.s32.totalorder %v1243, 0
      %vm1388 = vcmp.ne.s32.totalorder %v1250, 0
      %vm1389 = vcmp.ne.s32.totalorder %v1257, 0
      %vm1390 = vcmp.ne.s32.totalorder %v1264, 0
      %vm1391 = vcmp.ne.s32.totalorder %v1271, 0
      %vm1392 = vcmp.ne.s32.totalorder %v1278, 0
      %vm1393 = vcmp.ne.s32.totalorder %v1285, 0
      %vm1394 = vcmp.ne.s32.totalorder %v1292, 0
      %vm1395 = vcmp.ne.s32.totalorder %v1299, 0
      %vm1396 = vcmp.ne.s32.totalorder %v1306, 0
      %vm1397 = vcmp.ne.s32.totalorder %v1313, 0
      %vm1398 = vcmp.ne.s32.totalorder %v1320, 0
      %vm1399 = vcmp.ne.s32.totalorder %v1327, 0
      %vm1400 = vcmp.ne.s32.totalorder %v1334, 0
      %vm1401 = vcmp.ne.s32.totalorder %v1341, 0
      %vm1402 = vcmp.ne.s32.totalorder %v1348, 0
      %vm1403 = vcmp.ne.s32.totalorder %v1355, 0
      %vm1404 = vcmp.ne.s32.totalorder %v1362, 0
      %vm1405 = vcmp.ne.s32.totalorder %v1369, 0
      %vm1406 = vcmp.lt.s32.totalorder %v1124, 0
      %vm1407 = vcmp.lt.s32.totalorder %v1131, 0
      %vm1408 = vcmp.lt.s32.totalorder %v1138, 0
      %vm1409 = vcmp.lt.s32.totalorder %v1145, 0
      %vm1410 = vcmp.lt.s32.totalorder %v1152, 0
      %vm1411 = vcmp.lt.s32.totalorder %v1159, 0
      %vm1412 = vcmp.lt.s32.totalorder %v1166, 0
      %vm1413 = vcmp.lt.s32.totalorder %v1173, 0
      %vm1414 = vcmp.lt.s32.totalorder %v1180, 0
      %vm1415 = vcmp.lt.s32.totalorder %v1187, 0
      %vm1416 = vcmp.lt.s32.totalorder %v1194, 0
      %vm1417 = vcmp.lt.s32.totalorder %v1201, 0
      %vm1418 = vcmp.lt.s32.totalorder %v1208, 0
      %vm1419 = vcmp.lt.s32.totalorder %v1215, 0
      %vm1420 = vcmp.lt.s32.totalorder %v1222, 0
      %vm1421 = vcmp.lt.s32.totalorder %v1229, 0
      %vm1422 = vcmp.lt.s32.totalorder %v1236, 0
      %vm1423 = vcmp.lt.s32.totalorder %v1243, 0
      %vm1424 = vcmp.lt.s32.totalorder %v1250, 0
      %vm1425 = vcmp.lt.s32.totalorder %v1257, 0
      %vm1426 = vcmp.lt.s32.totalorder %v1264, 0
      %vm1427 = vcmp.lt.s32.totalorder %v1271, 0
      %vm1428 = vcmp.lt.s32.totalorder %v1278, 0
      %vm1429 = vcmp.lt.s32.totalorder %v1285, 0
      %vm1430 = vcmp.lt.s32.totalorder %v1292, 0
      %vm1431 = vcmp.lt.s32.totalorder %v1299, 0
      %vm1432 = vcmp.lt.s32.totalorder %v1306, 0
      %vm1433 = vcmp.lt.s32.totalorder %v1313, 0
      %vm1434 = vcmp.lt.s32.totalorder %v1320, 0
      %vm1435 = vcmp.lt.s32.totalorder %v1327, 0
      %vm1436 = vcmp.lt.s32.totalorder %v1334, 0
      %vm1437 = vcmp.lt.s32.totalorder %v1341, 0
      %vm1438 = vcmp.lt.s32.totalorder %v1348, 0
      %vm1439 = vcmp.lt.s32.totalorder %v1355, 0
      %vm1440 = vcmp.lt.s32.totalorder %v1362, 0
      %vm1441 = vcmp.lt.s32.totalorder %v1369, 0
      %vm1442 = vmand %vm1406, %vm1370
      %vm1443 = vmand %vm1407, %vm1371
      %vm1444 = vmand %vm1408, %vm1372
      %vm1445 = vmand %vm1409, %vm1373
      %vm1446 = vmand %vm1410, %vm1374
      %vm1447 = vmand %vm1411, %vm1375
      %vm1448 = vmand %vm1412, %vm1376
      %vm1449 = vmand %vm1413, %vm1377
      %vm1450 = vmand %vm1414, %vm1378
      %vm1451 = vmand %vm1415, %vm1379
      %vm1452 = vmand %vm1416, %vm1380
      %vm1453 = vmand %vm1417, %vm1381
      %vm1454 = vmand %vm1418, %vm1382
      %vm1455 = vmand %vm1419, %vm1383
      %vm1456 = vmand %vm1420, %vm1384
      %vm1457 = vmand %vm1421, %vm1385
      %vm1458 = vmand %vm1422, %vm1386
      %vm1459 = vmand %vm1423, %vm1387
      %vm1460 = vmand %vm1424, %vm1388
      %vm1461 = vmand %vm1425, %vm1389
      %vm1462 = vmand %vm1426, %vm1390
      %vm1463 = vmand %vm1427, %vm1391
      %vm1464 = vmand %vm1428, %vm1392
      %vm1465 = vmand %vm1429, %vm1393
      %vm1466 = vmand %vm1430, %vm1394
      %vm1467 = vmand %vm1431, %vm1395
      %vm1468 = vmand %vm1432, %vm1396
      %vm1469 = vmand %vm1433, %vm1397
      %vm1470 = vmand %vm1434, %vm1398
      %vm1471 = vmand %vm1435, %vm1399
      %vm1472 = vmand %vm1436, %vm1400
      %vm1473 = vmand %vm1437, %vm1401
      %vm1474 = vmand %vm1438, %vm1402
      %vm1475 = vmand %vm1439, %vm1403
      %vm1476 = vmand %vm1440, %vm1404
      %vm1477 = vmand %vm1441, %vm1405
      %v1478 = vadd.s32 %v1124, 16
      %v1479 = vadd.s32 %v1131, 16
      %v1480 = vadd.s32 %v1138, 16
      %v1481 = vadd.s32 %v1145, 16
      %v1482 = vadd.s32 %v1152, 16
      %v1483 = vadd.s32 %v1159, 16
      %v1484 = vadd.s32 %v1166, 16
      %v1485 = vadd.s32 %v1173, 16
      %v1486 = vadd.s32 %v1180, 16
      %v1487 = vadd.s32 %v1187, 16
      %v1488 = vadd.s32 %v1194, 16
      %v1489 = vadd.s32 %v1201, 16
      %v1490 = vadd.s32 %v1208, 16
      %v1491 = vadd.s32 %v1215, 16
      %v1492 = vadd.s32 %v1222, 16
      %v1493 = vadd.s32 %v1229, 16
      %v1494 = vadd.s32 %v1236, 16
      %v1495 = vadd.s32 %v1243, 16
      %v1496 = vadd.s32 %v1250, 16
      %v1497 = vadd.s32 %v1257, 16
      %v1498 = vadd.s32 %v1264, 16
      %v1499 = vadd.s32 %v1271, 16
      %v1500 = vadd.s32 %v1278, 16
      %v1501 = vadd.s32 %v1285, 16
      %v1502 = vadd.s32 %v1292, 16
      %v1503 = vadd.s32 %v1299, 16
      %v1504 = vadd.s32 %v1306, 16
      %v1505 = vadd.s32 %v1313, 16
      %v1506 = vadd.s32 %v1320, 16
      %v1507 = vadd.s32 %v1327, 16
      %v1508 = vadd.s32 %v1334, 16
      %v1509 = vadd.s32 %v1341, 16
      %v1510 = vadd.s32 %v1348, 16
      %v1511 = vadd.s32 %v1355, 16
      %v1512 = vadd.s32 %v1362, 16
      %v1513 = vadd.s32 %v1369, 16
      %v1514 = vsel %vm1442, %v1478, %v1124
      %v1515 = vsel %vm1443, %v1479, %v1131
      %v1516 = vsel %vm1444, %v1480, %v1138
      %v1517 = vsel %vm1445, %v1481, %v1145
      %v1518 = vsel %vm1446, %v1482, %v1152
      %v1519 = vsel %vm1447, %v1483, %v1159
      %v1520 = vsel %vm1448, %v1484, %v1166
      %v1521 = vsel %vm1449, %v1485, %v1173
      %v1522 = vsel %vm1450, %v1486, %v1180
      %v1523 = vsel %vm1451, %v1487, %v1187
      %v1524 = vsel %vm1452, %v1488, %v1194
      %v1525 = vsel %vm1453, %v1489, %v1201
      %v1526 = vsel %vm1454, %v1490, %v1208
      %v1527 = vsel %vm1455, %v1491, %v1215
      %v1528 = vsel %vm1456, %v1492, %v1222
      %v1529 = vsel %vm1457, %v1493, %v1229
      %v1530 = vsel %vm1458, %v1494, %v1236
      %v1531 = vsel %vm1459, %v1495, %v1243
      %v1532 = vsel %vm1460, %v1496, %v1250
      %v1533 = vsel %vm1461, %v1497, %v1257
      %v1534 = vsel %vm1462, %v1498, %v1264
      %v1535 = vsel %vm1463, %v1499, %v1271
      %v1536 = vsel %vm1464, %v1500, %v1278
      %v1537 = vsel %vm1465, %v1501, %v1285
      %v1538 = vsel %vm1466, %v1502, %v1292
      %v1539 = vsel %vm1467, %v1503, %v1299
      %v1540 = vsel %vm1468, %v1504, %v1306
      %v1541 = vsel %vm1469, %v1505, %v1313
      %v1542 = vsel %vm1470, %v1506, %v1320
      %v1543 = vsel %vm1471, %v1507, %v1327
      %v1544 = vsel %vm1472, %v1508, %v1334
      %v1545 = vsel %vm1473, %v1509, %v1341
      %v1546 = vsel %vm1474, %v1510, %v1348
      %v1547 = vsel %vm1475, %v1511, %v1355
      %v1548 = vsel %vm1476, %v1512, %v1362
      %v1549 = vsel %vm1477, %v1513, %v1369
      %vm1586 = vcmask 1040384
      %v1587 = vrot.slane %v1082, 7
      %v1588 = vrot.slane %v1083, 7
      %v1589 = vsel %vm1586, %v1587, %v1588
      %v1590 = vrot.slane %v1084, 7
      %v1591 = vsel %vm1586, %v1588, %v1590
      %v1592 = vrot.slane %v1085, 7
      %v1593 = vsel %vm1586, %v1590, %v1592
      %v1594 = vrot.slane %v1086, 7
      %v1595 = vsel %vm1586, %v1592, %v1594
      %v1596 = vrot.slane %v1087, 7
      %v1597 = vsel %vm1586, %v1594, %v1596
      %v1598 = vrot.slane %v1088, 7
      %v1599 = vsel %vm1586, %v1596, %v1598
      %v1600 = vrot.slane %v1089, 7
      %v1601 = vsel %vm1586, %v1598, %v1600
      %v1602 = vrot.slane %v1090, 7
      %v1603 = vsel %vm1586, %v1600, %v1602
      %v1604 = vrot.slane %v1091, 7
      %v1605 = vsel %vm1586, %v1602, %v1604
      %v1606 = vrot.slane %v1092, 7
      %v1607 = vsel %vm1586, %v1604, %v1606
      %v1608 = vrot.slane %v1093, 7
      %v1609 = vsel %vm1586, %v1606, %v1608
      %v1610 = vrot.slane %v1094, 7
      %v1611 = vsel %vm1586, %v1608, %v1610
      %v1612 = vrot.slane %v1095, 7
      %v1613 = vsel %vm1586, %v1610, %v1612
      %v1614 = vrot.slane %v1096, 7
      %v1615 = vsel %vm1586, %v1612, %v1614
      %v1616 = vrot.slane %v1097, 7
      %v1617 = vsel %vm1586, %v1614, %v1616
      %v1618 = vrot.slane %v1098, 7
      %v1619 = vsel %vm1586, %v1616, %v1618
      %v1620 = vrot.slane %v1099, 7
      %v1621 = vsel %vm1586, %v1618, %v1620
      %v1622 = vrot.slane %v1100, 7
      %v1623 = vsel %vm1586, %v1620, %v1622
      %v1624 = vrot.slane %v1101, 7
      %v1625 = vsel %vm1586, %v1622, %v1624
      %v1626 = vrot.slane %v1102, 7
      %v1627 = vsel %vm1586, %v1624, %v1626
      %v1628 = vrot.slane %v1103, 7
      %v1629 = vsel %vm1586, %v1626, %v1628
      %v1630 = vrot.slane %v1104, 7
      %v1631 = vsel %vm1586, %v1628, %v1630
      %v1632 = vrot.slane %v1105, 7
      %v1633 = vsel %vm1586, %v1630, %v1632
      %v1634 = vrot.slane %v1106, 7
      %v1635 = vsel %vm1586, %v1632, %v1634
      %v1636 = vrot.slane %v1107, 7
      %v1637 = vsel %vm1586, %v1634, %v1636
      %v1638 = vrot.slane %v1108, 7
      %v1639 = vsel %vm1586, %v1636, %v1638
      %v1640 = vrot.slane %v1109, 7
      %v1641 = vsel %vm1586, %v1638, %v1640
      %v1642 = vrot.slane %v1110, 7
      %v1643 = vsel %vm1586, %v1640, %v1642
      %v1644 = vrot.slane %v1111, 7
      %v1645 = vsel %vm1586, %v1642, %v1644
      %v1646 = vrot.slane %v1112, 7
      %v1647 = vsel %vm1586, %v1644, %v1646
      %v1648 = vrot.slane %v1113, 7
      %v1649 = vsel %vm1586, %v1646, %v1648
      %v1650 = vrot.slane %v1114, 7
      %v1651 = vsel %vm1586, %v1648, %v1650
      %v1652 = vrot.slane %v1115, 7
      %v1653 = vsel %vm1586, %v1650, %v1652
      %v1654 = vrot.slane %v1116, 7
      %v1655 = vsel %vm1586, %v1652, %v1654
      %v1656 = vrot.slane %v1117, 7
      %v1657 = vsel %vm1586, %v1654, %v1656
      %v1694 = vsel %vm1586, 0.0, %v1587
      %vm1695 = vcmp.eq.s32.totalorder %v1514, 0
      %vm1696 = vcmp.eq.s32.totalorder %v1515, 0
      %vm1697 = vcmp.eq.s32.totalorder %v1516, 0
      %vm1698 = vcmp.eq.s32.totalorder %v1517, 0
      %vm1699 = vcmp.eq.s32.totalorder %v1518, 0
      %vm1700 = vcmp.eq.s32.totalorder %v1519, 0
      %vm1701 = vcmp.eq.s32.totalorder %v1520, 0
      %vm1702 = vcmp.eq.s32.totalorder %v1521, 0
      %vm1703 = vcmp.eq.s32.totalorder %v1522, 0
      %vm1704 = vcmp.eq.s32.totalorder %v1523, 0
      %vm1705 = vcmp.eq.s32.totalorder %v1524, 0
      %vm1706 = vcmp.eq.s32.totalorder %v1525, 0
      %vm1707 = vcmp.eq.s32.totalorder %v1526, 0
      %vm1708 = vcmp.eq.s32.totalorder %v1527, 0
      %vm1709 = vcmp.eq.s32.totalorder %v1528, 0
      %vm1710 = vcmp.eq.s32.totalorder %v1529, 0
      %vm1711 = vcmp.eq.s32.totalorder %v1530, 0
      %vm1712 = vcmp.eq.s32.totalorder %v1531, 0
      %vm1713 = vcmp.eq.s32.totalorder %v1532, 0
      %vm1714 = vcmp.eq.s32.totalorder %v1533, 0
      %vm1715 = vcmp.eq.s32.totalorder %v1534, 0
      %vm1716 = vcmp.eq.s32.totalorder %v1535, 0
      %vm1717 = vcmp.eq.s32.totalorder %v1536, 0
      %vm1718 = vcmp.eq.s32.totalorder %v1537, 0
      %vm1719 = vcmp.eq.s32.totalorder %v1538, 0
      %vm1720 = vcmp.eq.s32.totalorder %v1539, 0
      %vm1721 = vcmp.eq.s32.totalorder %v1540, 0
      %vm1722 = vcmp.eq.s32.totalorder %v1541, 0
      %vm1723 = vcmp.eq.s32.totalorder %v1542, 0
      %vm1724 = vcmp.eq.s32.totalorder %v1543, 0
      %vm1725 = vcmp.eq.s32.totalorder %v1544, 0
      %vm1726 = vcmp.eq.s32.totalorder %v1545, 0
      %vm1727 = vcmp.eq.s32.totalorder %v1546, 0
      %vm1728 = vcmp.eq.s32.totalorder %v1547, 0
      %vm1729 = vcmp.eq.s32.totalorder %v1548, 0
      %vm1730 = vcmp.eq.s32.totalorder %v1549, 0
      %v1731 = vsel %vm1695, 0.0, 1.0
      %v1732 = vsel %vm1696, 0.0, 1.0
      %v1733 = vsel %vm1697, 0.0, 1.0
      %v1734 = vsel %vm1698, 0.0, 1.0
      %v1735 = vsel %vm1699, 0.0, 1.0
      %v1736 = vsel %vm1700, 0.0, 1.0
      %v1737 = vsel %vm1701, 0.0, 1.0
      %v1738 = vsel %vm1702, 0.0, 1.0
      %v1739 = vsel %vm1703, 0.0, 1.0
      %v1740 = vsel %vm1704, 0.0, 1.0
      %v1741 = vsel %vm1705, 0.0, 1.0
      %v1742 = vsel %vm1706, 0.0, 1.0
      %v1743 = vsel %vm1707, 0.0, 1.0
      %v1744 = vsel %vm1708, 0.0, 1.0
      %v1745 = vsel %vm1709, 0.0, 1.0
      %v1746 = vsel %vm1710, 0.0, 1.0
      %v1747 = vsel %vm1711, 0.0, 1.0
      %v1748 = vsel %vm1712, 0.0, 1.0
      %v1749 = vsel %vm1713, 0.0, 1.0
      %v1750 = vsel %vm1714, 0.0, 1.0
      %v1751 = vsel %vm1715, 0.0, 1.0
      %v1752 = vsel %vm1716, 0.0, 1.0
      %v1753 = vsel %vm1717, 0.0, 1.0
      %v1754 = vsel %vm1718, 0.0, 1.0
      %v1755 = vsel %vm1719, 0.0, 1.0
      %v1756 = vsel %vm1720, 0.0, 1.0
      %v1757 = vsel %vm1721, 0.0, 1.0
      %v1758 = vsel %vm1722, 0.0, 1.0
      %v1759 = vsel %vm1723, 0.0, 1.0
      %v1760 = vsel %vm1724, 0.0, 1.0
      %v1761 = vsel %vm1725, 0.0, 1.0
      %v1762 = vsel %vm1726, 0.0, 1.0
      %v1763 = vsel %vm1727, 0.0, 1.0
      %v1764 = vsel %vm1728, 0.0, 1.0
      %v1765 = vsel %vm1729, 0.0, 1.0
      %v1766 = vsel %vm1730, 0.0, 1.0
      %v1767 = vmul.f32 %v1694, %v1731
      %v1768 = vmul.f32 %v1589, %v1732
      %v1769 = vmul.f32 %v1591, %v1733
      %v1770 = vmul.f32 %v1593, %v1734
      %v1771 = vmul.f32 %v1595, %v1735
      %v1772 = vmul.f32 %v1597, %v1736
      %v1773 = vmul.f32 %v1599, %v1737
      %v1774 = vmul.f32 %v1601, %v1738
      %v1775 = vmul.f32 %v1603, %v1739
      %v1776 = vmul.f32 %v1605, %v1740
      %v1777 = vmul.f32 %v1607, %v1741
      %v1778 = vmul.f32 %v1609, %v1742
      %v1779 = vmul.f32 %v1611, %v1743
      %v1780 = vmul.f32 %v1613, %v1744
      %v1781 = vmul.f32 %v1615, %v1745
      %v1782 = vmul.f32 %v1617, %v1746
      %v1783 = vmul.f32 %v1619, %v1747
      %v1784 = vmul.f32 %v1621, %v1748
      %v1785 = vmul.f32 %v1623, %v1749
      %v1786 = vmul.f32 %v1625, %v1750
      %v1787 = vmul.f32 %v1627, %v1751
      %v1788 = vmul.f32 %v1629, %v1752
      %v1789 = vmul.f32 %v1631, %v1753
      %v1790 = vmul.f32 %v1633, %v1754
      %v1791 = vmul.f32 %v1635, %v1755
      %v1792 = vmul.f32 %v1637, %v1756
      %v1793 = vmul.f32 %v1639, %v1757
      %v1794 = vmul.f32 %v1641, %v1758
      %v1795 = vmul.f32 %v1643, %v1759
      %v1796 = vmul.f32 %v1645, %v1760
      %v1797 = vmul.f32 %v1647, %v1761
      %v1798 = vmul.f32 %v1649, %v1762
      %v1799 = vmul.f32 %v1651, %v1763
      %v1800 = vmul.f32 %v1653, %v1764
      %v1801 = vmul.f32 %v1655, %v1765
      %v1802 = vmul.f32 %v1657, %v1766
      %vm1803 = vcmask 1046528
      %v1804 = vrot.slane %v1082, 1
      %v1805 = vrot.slane %v1083, 1
      %v1806 = vsel %vm1803, %v1804, %v1805
      %v1807 = vrot.slane %v1084, 1
      %v1808 = vsel %vm1803, %v1805, %v1807
      %v1809 = vrot.slane %v1085, 1
      %v1810 = vsel %vm1803, %v1807, %v1809
      %v1811 = vrot.slane %v1086, 1
      %v1812 = vsel %vm1803, %v1809, %v1811
      %v1813 = vrot.slane %v1087, 1
      %v1814 = vsel %vm1803, %v1811, %v1813
      %v1815 = vrot.slane %v1088, 1
      %v1816 = vsel %vm1803, %v1813, %v1815
      %v1817 = vrot.slane %v1089, 1
      %v1818 = vsel %vm1803, %v1815, %v1817
      %v1819 = vrot.slane %v1090, 1
      %v1820 = vsel %vm1803, %v1817, %v1819
      %v1821 = vrot.slane %v1091, 1
      %v1822 = vsel %vm1803, %v1819, %v1821
      %v1823 = vrot.slane %v1092, 1
      %v1824 = vsel %vm1803, %v1821, %v1823
      %v1825 = vrot.slane %v1093, 1
      %v1826 = vsel %vm1803, %v1823, %v1825
      %v1827 = vrot.slane %v1094, 1
      %v1828 = vsel %vm1803, %v1825, %v1827
      %v1829 = vrot.slane %v1095, 1
      %v1830 = vsel %vm1803, %v1827, %v1829
      %v1831 = vrot.slane %v1096, 1
      %v1832 = vsel %vm1803, %v1829, %v1831
      %v1833 = vrot.slane %v1097, 1
      %v1834 = vsel %vm1803, %v1831, %v1833
      %v1835 = vrot.slane %v1098, 1
      %v1836 = vsel %vm1803, %v1833, %v1835
      %v1837 = vrot.slane %v1099, 1
      %v1838 = vsel %vm1803, %v1835, %v1837
      %v1839 = vrot.slane %v1100, 1
      %v1840 = vsel %vm1803, %v1837, %v1839
      %v1841 = vrot.slane %v1101, 1
      %v1842 = vsel %vm1803, %v1839, %v1841
      %v1843 = vrot.slane %v1102, 1
      %v1844 = vsel %vm1803, %v1841, %v1843
      %v1845 = vrot.slane %v1103, 1
      %v1846 = vsel %vm1803, %v1843, %v1845
      %v1847 = vrot.slane %v1104, 1
      %v1848 = vsel %vm1803, %v1845, %v1847
      %v1849 = vrot.slane %v1105, 1
      %v1850 = vsel %vm1803, %v1847, %v1849
      %v1851 = vrot.slane %v1106, 1
      %v1852 = vsel %vm1803, %v1849, %v1851
      %v1853 = vrot.slane %v1107, 1
      %v1854 = vsel %vm1803, %v1851, %v1853
      %v1855 = vrot.slane %v1108, 1
      %v1856 = vsel %vm1803, %v1853, %v1855
      %v1857 = vrot.slane %v1109, 1
      %v1858 = vsel %vm1803, %v1855, %v1857
      %v1859 = vrot.slane %v1110, 1
      %v1860 = vsel %vm1803, %v1857, %v1859
      %v1861 = vrot.slane %v1111, 1
      %v1862 = vsel %vm1803, %v1859, %v1861
      %v1863 = vrot.slane %v1112, 1
      %v1864 = vsel %vm1803, %v1861, %v1863
      %v1865 = vrot.slane %v1113, 1
      %v1866 = vsel %vm1803, %v1863, %v1865
      %v1867 = vrot.slane %v1114, 1
      %v1868 = vsel %vm1803, %v1865, %v1867
      %v1869 = vrot.slane %v1115, 1
      %v1870 = vsel %vm1803, %v1867, %v1869
      %v1871 = vrot.slane %v1116, 1
      %v1872 = vsel %vm1803, %v1869, %v1871
      %v1873 = vrot.slane %v1117, 1
      %v1874 = vsel %vm1803, %v1871, %v1873
      %v1911 = vsel %vm1803, %v1873, 0.0
      %vm1912 = vcmp.eq.s32.totalorder %v1514, 15
      %vm1913 = vcmp.eq.s32.totalorder %v1515, 15
      %vm1914 = vcmp.eq.s32.totalorder %v1516, 15
      %vm1915 = vcmp.eq.s32.totalorder %v1517, 15
      %vm1916 = vcmp.eq.s32.totalorder %v1518, 15
      %vm1917 = vcmp.eq.s32.totalorder %v1519, 15
      %vm1918 = vcmp.eq.s32.totalorder %v1520, 15
      %vm1919 = vcmp.eq.s32.totalorder %v1521, 15
      %vm1920 = vcmp.eq.s32.totalorder %v1522, 15
      %vm1921 = vcmp.eq.s32.totalorder %v1523, 15
      %vm1922 = vcmp.eq.s32.totalorder %v1524, 15
      %vm1923 = vcmp.eq.s32.totalorder %v1525, 15
      %vm1924 = vcmp.eq.s32.totalorder %v1526, 15
      %vm1925 = vcmp.eq.s32.totalorder %v1527, 15
      %vm1926 = vcmp.eq.s32.totalorder %v1528, 15
      %vm1927 = vcmp.eq.s32.totalorder %v1529, 15
      %vm1928 = vcmp.eq.s32.totalorder %v1530, 15
      %vm1929 = vcmp.eq.s32.totalorder %v1531, 15
      %vm1930 = vcmp.eq.s32.totalorder %v1532, 15
      %vm1931 = vcmp.eq.s32.totalorder %v1533, 15
      %vm1932 = vcmp.eq.s32.totalorder %v1534, 15
      %vm1933 = vcmp.eq.s32.totalorder %v1535, 15
      %vm1934 = vcmp.eq.s32.totalorder %v1536, 15
      %vm1935 = vcmp.eq.s32.totalorder %v1537, 15
      %vm1936 = vcmp.eq.s32.totalorder %v1538, 15
      %vm1937 = vcmp.eq.s32.totalorder %v1539, 15
      %vm1938 = vcmp.eq.s32.totalorder %v1540, 15
      %vm1939 = vcmp.eq.s32.totalorder %v1541, 15
      %vm1940 = vcmp.eq.s32.totalorder %v1542, 15
      %vm1941 = vcmp.eq.s32.totalorder %v1543, 15
      %vm1942 = vcmp.eq.s32.totalorder %v1544, 15
      %vm1943 = vcmp.eq.s32.totalorder %v1545, 15
      %vm1944 = vcmp.eq.s32.totalorder %v1546, 15
      %vm1945 = vcmp.eq.s32.totalorder %v1547, 15
      %vm1946 = vcmp.eq.s32.totalorder %v1548, 15
      %vm1947 = vcmp.eq.s32.totalorder %v1549, 15
      %v1948 = vsel %vm1912, 0.0, 1.0
      %v1949 = vsel %vm1913, 0.0, 1.0
      %v1950 = vsel %vm1914, 0.0, 1.0
      %v1951 = vsel %vm1915, 0.0, 1.0
      %v1952 = vsel %vm1916, 0.0, 1.0
      %v1953 = vsel %vm1917, 0.0, 1.0
      %v1954 = vsel %vm1918, 0.0, 1.0
      %v1955 = vsel %vm1919, 0.0, 1.0
      %v1956 = vsel %vm1920, 0.0, 1.0
      %v1957 = vsel %vm1921, 0.0, 1.0
      %v1958 = vsel %vm1922, 0.0, 1.0
      %v1959 = vsel %vm1923, 0.0, 1.0
      %v1960 = vsel %vm1924, 0.0, 1.0
      %v1961 = vsel %vm1925, 0.0, 1.0
      %v1962 = vsel %vm1926, 0.0, 1.0
      %v1963 = vsel %vm1927, 0.0, 1.0
      %v1964 = vsel %vm1928, 0.0, 1.0
      %v1965 = vsel %vm1929, 0.0, 1.0
      %v1966 = vsel %vm1930, 0.0, 1.0
      %v1967 = vsel %vm1931, 0.0, 1.0
      %v1968 = vsel %vm1932, 0.0, 1.0
      %v1969 = vsel %vm1933, 0.0, 1.0
      %v1970 = vsel %vm1934, 0.0, 1.0
      %v1971 = vsel %vm1935, 0.0, 1.0
      %v1972 = vsel %vm1936, 0.0, 1.0
      %v1973 = vsel %vm1937, 0.0, 1.0
      %v1974 = vsel %vm1938, 0.0, 1.0
      %v1975 = vsel %vm1939, 0.0, 1.0
      %v1976 = vsel %vm1940, 0.0, 1.0
      %v1977 = vsel %vm1941, 0.0, 1.0
      %v1978 = vsel %vm1942, 0.0, 1.0
      %v1979 = vsel %vm1943, 0.0, 1.0
      %v1980 = vsel %vm1944, 0.0, 1.0
      %v1981 = vsel %vm1945, 0.0, 1.0
      %v1982 = vsel %vm1946, 0.0, 1.0
      %v1983 = vsel %vm1947, 0.0, 1.0
      %v1984 = vmul.f32 %v1806, %v1948
      %v1985 = vmul.f32 %v1808, %v1949
      %v1986 = vmul.f32 %v1810, %v1950
      %v1987 = vmul.f32 %v1812, %v1951
      %v1988 = vmul.f32 %v1814, %v1952
      %v1989 = vmul.f32 %v1816, %v1953
      %v1990 = vmul.f32 %v1818, %v1954
      %v1991 = vmul.f32 %v1820, %v1955
      %v1992 = vmul.f32 %v1822, %v1956
      %v1993 = vmul.f32 %v1824, %v1957
      %v1994 = vmul.f32 %v1826, %v1958
      %v1995 = vmul.f32 %v1828, %v1959
      %v1996 = vmul.f32 %v1830, %v1960
      %v1997 = vmul.f32 %v1832, %v1961
      %v1998 = vmul.f32 %v1834, %v1962
      %v1999 = vmul.f32 %v1836, %v1963
      %v2000 = vmul.f32 %v1838, %v1964
      %v2001 = vmul.f32 %v1840, %v1965
      %v2002 = vmul.f32 %v1842, %v1966
      %v2003 = vmul.f32 %v1844, %v1967
      %v2004 = vmul.f32 %v1846, %v1968
      %v2005 = vmul.f32 %v1848, %v1969
      %v2006 = vmul.f32 %v1850, %v1970
      %v2007 = vmul.f32 %v1852, %v1971
      %v2008 = vmul.f32 %v1854, %v1972
      %v2009 = vmul.f32 %v1856, %v1973
      %v2010 = vmul.f32 %v1858, %v1974
      %v2011 = vmul.f32 %v1860, %v1975
      %v2012 = vmul.f32 %v1862, %v1976
      %v2013 = vmul.f32 %v1864, %v1977
      %v2014 = vmul.f32 %v1866, %v1978
      %v2015 = vmul.f32 %v1868, %v1979
      %v2016 = vmul.f32 %v1870, %v1980
      %v2017 = vmul.f32 %v1872, %v1981
      %v2018 = vmul.f32 %v1874, %v1982
      %v2019 = vmul.f32 %v1911, %v1983
      %v2020 = vpack.c.bf16 %v1768, %v1767
      %v2021 = vpack.c.bf16 %v1083, %v1082
      %v2022 = vpack.c.bf16 %v1985, %v1984
      %v2023 = vpack.c.bf16 %v1770, %v1769
      %v2024 = vpack.c.bf16 %v1085, %v1084
      %v2025 = vpack.c.bf16 %v1987, %v1986
      %v2026 = vpack.c.bf16 %v1772, %v1771
      %v2027 = vpack.c.bf16 %v1087, %v1086
      %v2028 = vpack.c.bf16 %v1989, %v1988
      %v2029 = vpack.c.bf16 %v1774, %v1773
      %v2030 = vpack.c.bf16 %v1089, %v1088
      %v2031 = vpack.c.bf16 %v1991, %v1990
      %v2032 = vpack.c.bf16 %v1776, %v1775
      %v2033 = vpack.c.bf16 %v1091, %v1090
      %v2034 = vpack.c.bf16 %v1993, %v1992
      %v2035 = vpack.c.bf16 %v1778, %v1777
      %v2036 = vpack.c.bf16 %v1093, %v1092
      %v2037 = vpack.c.bf16 %v1995, %v1994
      %v2038 = vpack.c.bf16 %v1780, %v1779
      %v2039 = vpack.c.bf16 %v1095, %v1094
      %v2040 = vpack.c.bf16 %v1997, %v1996
      %v2041 = vpack.c.bf16 %v1782, %v1781
      %v2042 = vpack.c.bf16 %v1097, %v1096
      %v2043 = vpack.c.bf16 %v1999, %v1998
      %v2044 = vpack.c.bf16 %v1784, %v1783
      %v2045 = vpack.c.bf16 %v1099, %v1098
      %v2046 = vpack.c.bf16 %v2001, %v2000
      %v2047 = vpack.c.bf16 %v1786, %v1785
      %v2048 = vpack.c.bf16 %v1101, %v1100
      %v2049 = vpack.c.bf16 %v2003, %v2002
      %v2050 = vpack.c.bf16 %v1788, %v1787
      %v2051 = vpack.c.bf16 %v1103, %v1102
      %v2052 = vpack.c.bf16 %v2005, %v2004
      %v2053 = vpack.c.bf16 %v1790, %v1789
      %v2054 = vpack.c.bf16 %v1105, %v1104
      %v2055 = vpack.c.bf16 %v2007, %v2006
      %v2056 = vpack.c.bf16 %v1792, %v1791
      %v2057 = vpack.c.bf16 %v1107, %v1106
      %v2058 = vpack.c.bf16 %v2009, %v2008
      %v2059 = vpack.c.bf16 %v1794, %v1793
      %v2060 = vpack.c.bf16 %v1109, %v1108
      %v2061 = vpack.c.bf16 %v2011, %v2010
      %v2062 = vpack.c.bf16 %v1796, %v1795
      %v2063 = vpack.c.bf16 %v1111, %v1110
      %v2064 = vpack.c.bf16 %v2013, %v2012
      %v2065 = vpack.c.bf16 %v1798, %v1797
      %v2066 = vpack.c.bf16 %v1113, %v1112
      %v2067 = vpack.c.bf16 %v2015, %v2014
      %v2068 = vld [vmem:[%s5] sm:$0xf]
      %v2069 = vld [vmem:[%s5 + $0x4] sm:$0xf]
      %v2070 = vld [vmem:[%s5 + $0x8] sm:$0xf]
      %v2071 = vld [vmem:[%s5 + $0xc] sm:$0xf]
      %v2072 = vld [vmem:[%s5 + $0x10] sm:$0xf]
      %v2073 = vld [vmem:[%s5 + $0x14] sm:$0xf]
      %v2074 = vld [vmem:[%s5 + $0x18] sm:$0xf]
      %v2075 = vld [vmem:[%s5 + $0x1c] sm:$0xf]
      %v2076 = vld [vmem:[%s5 + $0x20] sm:$0xf]
      %v2077 = vld [vmem:[%s5 + $0x24] sm:$0xf]
      %v2078 = vld [vmem:[%s5 + $0x28] sm:$0xf]
      %v2079 = vld [vmem:[%s5 + $0x2c] sm:$0xf]
      %v2080 = vld [vmem:[%s5 + $0x30] sm:$0xf]
      %v2081 = vld [vmem:[%s5 + $0x34] sm:$0xf]
      %v2082 = vld [vmem:[%s5 + $0x38] sm:$0xf]
      %v2083 = vld [vmem:[%s5 + $0x3c] sm:$0xf]
      %v2084 = vld [vmem:[%s5 + $0x40] sm:$0xf]
      %v2085 = vld [vmem:[%s5 + $0x44] sm:$0xf]
      %v2086 = vld [vmem:[%s5 + $0x48] sm:$0xf]
      %v2087 = vld [vmem:[%s5 + $0x4c] sm:$0xf]
      %v2088 = vld [vmem:[%s5 + $0x50] sm:$0xf]
      %v2089 = vld [vmem:[%s5 + $0x54] sm:$0xf]
      %v2090 = vld [vmem:[%s5 + $0x58] sm:$0xf]
      %v2091 = vld [vmem:[%s5 + $0x5c] sm:$0xf]
      %v2092 = vld [vmem:[%s5 + $0x60] sm:$0xf]
      %v2093 = vld [vmem:[%s5 + $0x64] sm:$0xf]
      %v2094 = vld [vmem:[%s5 + $0x68] sm:$0xf]
      %v2095 = vld [vmem:[%s5 + $0x6c] sm:$0xf]
      %v2096 = vld [vmem:[%s5 + $0x70] sm:$0xf]
      %v2097 = vld [vmem:[%s5 + $0x74] sm:$0xf]
      %v2098 = vld [vmem:[%s5 + $0x78] sm:$0xf]
      %v2099 = vld [vmem:[%s5 + $0x7c] sm:$0xf]
      %v2100 = vld [vmem:[%s5 + $0x80] sm:$0xf]
      %v2101 = vld [vmem:[%s5 + $0x84] sm:$0xf]
      %v2102 = vld [vmem:[%s5 + $0x88] sm:$0xf]
      %v2103 = vld [vmem:[%s5 + $0x8c] sm:$0xf]
      %v2104 = vld [vmem:[%s5 + $0x90] sm:$0xf]
      %v2105 = vld [vmem:[%s5 + $0x94] sm:$0xf]
      %v2106 = vld [vmem:[%s5 + $0x98] sm:$0xf]
      %v2107 = vld [vmem:[%s5 + $0x9c] sm:$0xf]
      %v2108 = vld [vmem:[%s5 + $0xa0] sm:$0xf]
      %v2109 = vld [vmem:[%s5 + $0xa4] sm:$0xf]
      %v2110 = vld [vmem:[%s5 + $0xa8] sm:$0xf]
      %v2111 = vld [vmem:[%s5 + $0xac] sm:$0xf]
      %v2112 = vld [vmem:[%s5 + $0xb0] sm:$0xf]
      %v2113 = vld [vmem:[%s5 + $0xb4] sm:$0xf]
      %v2114 = vld [vmem:[%s5 + $0xb8] sm:$0xf]
      %v2115 = vld [vmem:[%s5 + $0xbc] sm:$0xf]
      %v2116 = vpack.c.bf16 %v1800, %v1799
      %v2117 = vpack.c.bf16 %v1115, %v1114
      %v2118 = vpack.c.bf16 %v2017, %v2016
      %s2119 = scalar_lea.vmem %s5, 192
      %v2120 = vld [vmem:[%s2119] sm:$0xf]
      %v2121 = vld [vmem:[%s2119 + $0x4] sm:$0xf]
      %v2122 = vld [vmem:[%s2119 + $0x8] sm:$0xf]
      %v2123 = vld [vmem:[%s2119 + $0xc] sm:$0xf]
      %v2124 = vld [vmem:[%s2119 + $0x10] sm:$0xf]
      %v2125 = vld [vmem:[%s2119 + $0x14] sm:$0xf]
      %v2126 = vld [vmem:[%s2119 + $0x18] sm:$0xf]
      %v2127 = vld [vmem:[%s2119 + $0x1c] sm:$0xf]
      %v2128 = vld [vmem:[%s2119 + $0x20] sm:$0xf]
      %v2129 = vld [vmem:[%s2119 + $0x24] sm:$0xf]
      %v2130 = vld [vmem:[%s2119 + $0x28] sm:$0xf]
      %v2131 = vld [vmem:[%s2119 + $0x2c] sm:$0xf]
      %v2132 = vld [vmem:[%s2119 + $0x30] sm:$0xf]
      %v2133 = vld [vmem:[%s2119 + $0x34] sm:$0xf]
      %v2134 = vld [vmem:[%s2119 + $0x38] sm:$0xf]
      %v2135 = vld [vmem:[%s2119 + $0x3c] sm:$0xf]
      %v2136 = vld [vmem:[%s2119 + $0x40] sm:$0xf]
      %v2137 = vld [vmem:[%s2119 + $0x44] sm:$0xf]
      %v2138 = vld [vmem:[%s2119 + $0x48] sm:$0xf]
      %v2139 = vld [vmem:[%s2119 + $0x4c] sm:$0xf]
      %v2140 = vld [vmem:[%s2119 + $0x50] sm:$0xf]
      %v2141 = vld [vmem:[%s2119 + $0x54] sm:$0xf]
      %v2142 = vld [vmem:[%s2119 + $0x58] sm:$0xf]
      %v2143 = vld [vmem:[%s2119 + $0x5c] sm:$0xf]
      %v2144 = vld [vmem:[%s2119 + $0x60] sm:$0xf]
      %v2145 = vld [vmem:[%s2119 + $0x64] sm:$0xf]
      %v2146 = vld [vmem:[%s2119 + $0x68] sm:$0xf]
      %v2147 = vld [vmem:[%s2119 + $0x6c] sm:$0xf]
      %v2148 = vld [vmem:[%s2119 + $0x70] sm:$0xf]
      %v2149 = vld [vmem:[%s2119 + $0x74] sm:$0xf]
      %v2150 = vld [vmem:[%s2119 + $0x78] sm:$0xf]
      %v2151 = vld [vmem:[%s2119 + $0x7c] sm:$0xf]
      %v2152 = vld [vmem:[%s2119 + $0x80] sm:$0xf]
      %v2153 = vld [vmem:[%s2119 + $0x84] sm:$0xf]
      %v2154 = vld [vmem:[%s2119 + $0x88] sm:$0xf]
      %v2155 = vld [vmem:[%s2119 + $0x8c] sm:$0xf]
      %v2156 = vld [vmem:[%s2119 + $0x90] sm:$0xf]
      %v2157 = vld [vmem:[%s2119 + $0x94] sm:$0xf]
      %v2158 = vld [vmem:[%s2119 + $0x98] sm:$0xf]
      %v2159 = vld [vmem:[%s2119 + $0x9c] sm:$0xf]
      %v2160 = vld [vmem:[%s2119 + $0xa0] sm:$0xf]
      %v2161 = vld [vmem:[%s2119 + $0xa4] sm:$0xf]
      %v2162 = vld [vmem:[%s2119 + $0xa8] sm:$0xf]
      %v2163 = vld [vmem:[%s2119 + $0xac] sm:$0xf]
      %v2164 = vld [vmem:[%s2119 + $0xb0] sm:$0xf]
      %v2165 = vld [vmem:[%s2119 + $0xb4] sm:$0xf]
      %v2166 = vld [vmem:[%s2119 + $0xb8] sm:$0xf]
      %v2167 = vld [vmem:[%s2119 + $0xbc] sm:$0xf]
      %v2216 = vunpack.c.l.b16 %v2120
      %v2217 = vunpack.c.l.b16 %v2121
      %v2218 = vunpack.c.l.b16 %v2122
      %v2219 = vunpack.c.l.b16 %v2123
      %v2220 = vunpack.c.l.b16 %v2124
      %v2221 = vunpack.c.l.b16 %v2125
      %v2222 = vunpack.c.l.b16 %v2126
      %v2223 = vunpack.c.l.b16 %v2127
      %v2224 = vunpack.c.l.b16 %v2128
      %v2225 = vunpack.c.l.b16 %v2129
      %v2226 = vunpack.c.l.b16 %v2130
      %v2227 = vunpack.c.l.b16 %v2131
      %v2228 = vunpack.c.l.b16 %v2132
      %v2229 = vunpack.c.l.b16 %v2133
      %v2230 = vunpack.c.l.b16 %v2134
      %v2231 = vunpack.c.l.b16 %v2135
      %v2232 = vunpack.c.l.b16 %v2136
      %v2233 = vunpack.c.l.b16 %v2137
      %v2234 = vunpack.c.l.b16 %v2138
      %v2235 = vunpack.c.l.b16 %v2139
      %v2236 = vunpack.c.l.b16 %v2140
      %v2237 = vunpack.c.l.b16 %v2141
      %v2238 = vunpack.c.l.b16 %v2142
      %v2239 = vunpack.c.l.b16 %v2143
      %v2240 = vunpack.c.l.b16 %v2144
      %v2241 = vunpack.c.l.b16 %v2145
      %v2242 = vunpack.c.l.b16 %v2146
      %v2243 = vunpack.c.l.b16 %v2147
      %v2244 = vunpack.c.l.b16 %v2148
      %v2245 = vunpack.c.l.b16 %v2149
      %v2246 = vunpack.c.l.b16 %v2150
      %v2247 = vunpack.c.l.b16 %v2151
      %v2248 = vunpack.c.l.b16 %v2152
      %v2249 = vunpack.c.l.b16 %v2153
      %v2250 = vunpack.c.l.b16 %v2154
      %v2251 = vunpack.c.l.b16 %v2155
      %v2252 = vunpack.c.l.b16 %v2156
      %v2253 = vunpack.c.l.b16 %v2157
      %v2254 = vunpack.c.l.b16 %v2158
      %v2255 = vunpack.c.l.b16 %v2159
      %v2256 = vunpack.c.l.b16 %v2160
      %v2257 = vunpack.c.l.b16 %v2161
      %v2258 = vunpack.c.l.b16 %v2162
      %v2259 = vunpack.c.l.b16 %v2163
      %v2260 = vunpack.c.l.b16 %v2164
      %v2261 = vunpack.c.l.b16 %v2165
      %v2262 = vunpack.c.l.b16 %v2166
      %v2263 = vunpack.c.l.b16 %v2167
      %v2264 = vpack.c.b16 %v2217, %v2216
      %v2265 = vpack.c.b16 %v2219, %v2218
      %v2266 = vpack.c.b16 %v2221, %v2220
      %v2267 = vpack.c.b16 %v2223, %v2222
      %v2268 = vpack.c.b16 %v2225, %v2224
      %v2269 = vpack.c.b16 %v2227, %v2226
      %v2270 = vpack.c.b16 %v2229, %v2228
      %v2271 = vpack.c.b16 %v2231, %v2230
      %v2272 = vpack.c.b16 %v2233, %v2232
      %v2273 = vpack.c.b16 %v2235, %v2234
      %v2274 = vpack.c.b16 %v2237, %v2236
      %v2275 = vpack.c.b16 %v2239, %v2238
      %v2276 = vpack.c.b16 %v2241, %v2240
      %v2277 = vpack.c.b16 %v2243, %v2242
      %v2278 = vpack.c.b16 %v2245, %v2244
      %v2279 = vpack.c.b16 %v2247, %v2246
      %v2280 = vpack.c.b16 %v2249, %v2248
      %v2281 = vpack.c.b16 %v2251, %v2250
      %v2282 = vpack.c.b16 %v2253, %v2252
      %v2283 = vpack.c.b16 %v2255, %v2254
      %v2284 = vpack.c.b16 %v2257, %v2256
      %v2285 = vpack.c.b16 %v2259, %v2258
      %v2286 = vpack.c.b16 %v2261, %v2260
      %v2287 = vpack.c.b16 %v2263, %v2262
      %2312 = vmatprep.subr.bf16.mxu0 0
      %2313 = vmatpush1.bf16.msra.mxu0 %v2271
      %2314 = vmatprep.subr.bf16.mxu0 0
      %2315 = vmatpush1.bf16.msra.mxu0 %v2270
      %2316 = vmatprep.subr.bf16.mxu0 0
      %2317 = vmatpush1.bf16.msra.mxu0 %v2269
      %2318 = vmatprep.subr.bf16.mxu0 0
      %2319 = vmatpush1.bf16.msra.mxu0 %v2268
      %2320 = vmatprep.subr.bf16.mxu0 0
      %2321 = vmatpush1.bf16.msra.mxu0 %v2267
      %2322 = vmatprep.subr.bf16.mxu0 0
      %2323 = vmatpush1.bf16.msra.mxu0 %v2266
      %2324 = vmatprep.subr.bf16.mxu0 0
      %2325 = vmatpush1.bf16.msra.mxu0 %v2265
      %2326 = vmatprep.subr.bf16.mxu0 0
      %2327 = vmatpush1.bf16.msra.mxu0 %v2264
      %2328 = vmatprep.subr.bf16.mxu0 0
      %2329 = vmatpush2.bf16.msra.mxu0 %v2279
      %2330 = vmatprep.subr.bf16.mxu0 0
      %2331 = vmatpush2.bf16.msra.mxu0 %v2278
      %2332 = vmatprep.subr.bf16.mxu0 0
      %2333 = vmatpush2.bf16.msra.mxu0 %v2277
      %2334 = vmatprep.subr.bf16.mxu0 0
      %2335 = vmatpush2.bf16.msra.mxu0 %v2276
      %2336 = vmatprep.subr.bf16.mxu0 0
      %2337 = vmatpush2.bf16.msra.mxu0 %v2275
      %2338 = vmatprep.subr.bf16.mxu0 0
      %2339 = vmatpush2.bf16.msra.mxu0 %v2274
      %2340 = vmatprep.subr.bf16.mxu0 0
      %2341 = vmatpush2.bf16.msra.mxu0 %v2273
      %2342 = vmatprep.subr.bf16.mxu0 0
      %2343 = vmatpush2.bf16.msra.mxu0 %v2272
      %2344 = vmatprep.mubr.bf16.mxu0 %v2024
      %2345 = vmatmul.mubr.bf16.gmra.mxu0 %v2023
      %v2346 = vpop.f32.mrf.mxu0
      %v2347 = vadd.f32 0.0, %v2346
      %v2348 = vpop.f32.mrf.mxu0
      %v2349 = vpop.f32.mrf.mxu0
      %v2350 = vadd.f32 0.0, %v2349
      %v2351 = vpop.f32.mrf.mxu0
      %2352 = vmatprep.mubr.bf16.mxu0 %v2027
      %2353 = vmatmul.mubr.bf16.gmra.mxu0 %v2026
      %v2354 = vpop.f32.mrf.mxu0
      %v2355 = vadd.f32 0.0, %v2354
      %v2356 = vpop.f32.mrf.mxu0
      %v2357 = vpop.f32.mrf.mxu0
      %v2358 = vadd.f32 0.0, %v2357
      %v2359 = vpop.f32.mrf.mxu0
      %2360 = vmatprep.mubr.bf16.mxu0 %v2030
      %2361 = vmatmul.mubr.bf16.gmra.mxu0 %v2029
      %v2362 = vpop.f32.mrf.mxu0
      %v2363 = vadd.f32 0.0, %v2362
      %v2364 = vpop.f32.mrf.mxu0
      %v2365 = vpop.f32.mrf.mxu0
      %v2366 = vadd.f32 0.0, %v2365
      %v2367 = vpop.f32.mrf.mxu0
      %2368 = vmatprep.mubr.bf16.mxu0 %v2033
      %2369 = vmatmul.mubr.bf16.gmra.mxu0 %v2032
      %v2370 = vpop.f32.mrf.mxu0
      %v2371 = vadd.f32 0.0, %v2370
      %v2372 = vpop.f32.mrf.mxu0
      %v2373 = vpop.f32.mrf.mxu0
      %v2374 = vadd.f32 0.0, %v2373
      %v2375 = vpop.f32.mrf.mxu0
      %2376 = vmatprep.mubr.bf16.mxu0 %v2036
      %2377 = vmatmul.mubr.bf16.gmra.mxu0 %v2035
      %v2378 = vpop.f32.mrf.mxu0
      %v2379 = vadd.f32 0.0, %v2378
      %v2380 = vpop.f32.mrf.mxu0
      %v2381 = vpop.f32.mrf.mxu0
      %v2382 = vadd.f32 0.0, %v2381
      %v2383 = vpop.f32.mrf.mxu0
      %2384 = vmatprep.mubr.bf16.mxu0 %v2039
      %2385 = vmatmul.mubr.bf16.gmra.mxu0 %v2038
      %v2386 = vpop.f32.mrf.mxu0
      %v2387 = vadd.f32 0.0, %v2386
      %v2388 = vpop.f32.mrf.mxu0
      %v2389 = vpop.f32.mrf.mxu0
      %v2390 = vadd.f32 0.0, %v2389
      %v2391 = vpop.f32.mrf.mxu0
      %2392 = vmatprep.mubr.bf16.mxu0 %v2042
      %2393 = vmatmul.mubr.bf16.gmra.mxu0 %v2041
      %v2394 = vpop.f32.mrf.mxu0
      %v2395 = vadd.f32 0.0, %v2394
      %v2396 = vpop.f32.mrf.mxu0
      %v2397 = vpop.f32.mrf.mxu0
      %v2398 = vadd.f32 0.0, %v2397
      %v2399 = vpop.f32.mrf.mxu0
      %2400 = vmatprep.mubr.bf16.mxu0 %v2045
      %2401 = vmatmul.mubr.bf16.gmra.mxu0 %v2044
      %v2402 = vpop.f32.mrf.mxu0
      %v2403 = vadd.f32 0.0, %v2402
      %v2404 = vpop.f32.mrf.mxu0
      %v2405 = vpop.f32.mrf.mxu0
      %v2406 = vadd.f32 0.0, %v2405
      %v2407 = vpop.f32.mrf.mxu0
      %2408 = vmatprep.mubr.bf16.mxu0 %v2048
      %2409 = vmatmul.mubr.bf16.gmra.mxu0 %v2047
      %v2410 = vpop.f32.mrf.mxu0
      %v2411 = vadd.f32 0.0, %v2410
      %v2412 = vpop.f32.mrf.mxu0
      %v2413 = vpop.f32.mrf.mxu0
      %v2414 = vadd.f32 0.0, %v2413
      %v2415 = vpop.f32.mrf.mxu0
      %2416 = vmatprep.mubr.bf16.mxu0 %v2051
      %2417 = vmatmul.mubr.bf16.gmra.mxu0 %v2050
      %v2418 = vpop.f32.mrf.mxu0
      %v2419 = vadd.f32 0.0, %v2418
      %v2420 = vpop.f32.mrf.mxu0
      %v2421 = vpop.f32.mrf.mxu0
      %v2422 = vadd.f32 0.0, %v2421
      %v2423 = vpop.f32.mrf.mxu0
      %2424 = vmatprep.mubr.bf16.mxu0 %v2054
      %2425 = vmatmul.mubr.bf16.gmra.mxu0 %v2053
      %v2426 = vpop.f32.mrf.mxu0
      %v2427 = vadd.f32 0.0, %v2426
      %v2428 = vpop.f32.mrf.mxu0
      %v2429 = vpop.f32.mrf.mxu0
      %v2430 = vadd.f32 0.0, %v2429
      %v2431 = vpop.f32.mrf.mxu0
      %2432 = vmatprep.mubr.bf16.mxu0 %v2057
      %2433 = vmatmul.mubr.bf16.gmra.mxu0 %v2056
      %v2434 = vpop.f32.mrf.mxu0
      %v2435 = vadd.f32 0.0, %v2434
      %v2436 = vpop.f32.mrf.mxu0
      %v2437 = vpop.f32.mrf.mxu0
      %v2438 = vadd.f32 0.0, %v2437
      %v2439 = vpop.f32.mrf.mxu0
      %2440 = vmatprep.mubr.bf16.mxu0 %v2060
      %2441 = vmatmul.mubr.bf16.gmra.mxu0 %v2059
      %v2442 = vpop.f32.mrf.mxu0
      %v2443 = vadd.f32 0.0, %v2442
      %v2444 = vpop.f32.mrf.mxu0
      %v2445 = vpop.f32.mrf.mxu0
      %v2446 = vadd.f32 0.0, %v2445
      %v2447 = vpop.f32.mrf.mxu0
      %2448 = vmatprep.mubr.bf16.mxu0 %v2063
      %2449 = vmatmul.mubr.bf16.gmra.mxu0 %v2062
      %v2450 = vpop.f32.mrf.mxu0
      %v2451 = vadd.f32 0.0, %v2450
      %v2452 = vpop.f32.mrf.mxu0
      %v2453 = vpop.f32.mrf.mxu0
      %v2454 = vadd.f32 0.0, %v2453
      %v2455 = vpop.f32.mrf.mxu0
      %2456 = vmatprep.mubr.bf16.mxu0 %v2066
      %2457 = vmatmul.mubr.bf16.gmra.mxu0 %v2065
      %v2458 = vpop.f32.mrf.mxu0
      %v2459 = vadd.f32 0.0, %v2458
      %v2460 = vpop.f32.mrf.mxu0
      %v2461 = vpop.f32.mrf.mxu0
      %v2462 = vadd.f32 0.0, %v2461
      %v2463 = vpop.f32.mrf.mxu0
      %2464 = vmatprep.mubr.bf16.mxu0 %v2117
      %2465 = vmatmul.mubr.bf16.gmra.mxu0 %v2116
      %v2466 = vpop.f32.mrf.mxu0
      %v2467 = vadd.f32 0.0, %v2466
      %v2468 = vpop.f32.mrf.mxu0
      %v2469 = vpop.f32.mrf.mxu0
      %v2470 = vadd.f32 0.0, %v2469
      %v2471 = vpop.f32.mrf.mxu0
      %2472 = vdwg.mxu0
      %2473 = vmatprep.subr.bf16.mxu0 0
      %2474 = vmatpush1.bf16.msra.mxu0 %v2287
      %2475 = vmatprep.subr.bf16.mxu0 0
      %2476 = vmatpush1.bf16.msra.mxu0 %v2286
      %2477 = vmatprep.subr.bf16.mxu0 0
      %2478 = vmatpush1.bf16.msra.mxu0 %v2285
      %2479 = vmatprep.subr.bf16.mxu0 0
      %2480 = vmatpush1.bf16.msra.mxu0 %v2284
      %2481 = vmatprep.subr.bf16.mxu0 0
      %2482 = vmatpush1.bf16.msra.mxu0 %v2283
      %2483 = vmatprep.subr.bf16.mxu0 0
      %2484 = vmatpush1.bf16.msra.mxu0 %v2282
      %2485 = vmatprep.subr.bf16.mxu0 0
      %2486 = vmatpush1.bf16.msra.mxu0 %v2281
      %2487 = vmatprep.subr.bf16.mxu0 0
      %2488 = vmatpush1.bf16.msra.mxu0 %v2280
      %2489 = vmatprep.subr.bf16.mxu0 0
      %2490 = vmatpush2.bf16.msra.mxu0 0
      %2491 = vmatprep.subr.bf16.mxu0 0
      %2492 = vmatpush2.bf16.msra.mxu0 0
      %2493 = vmatprep.subr.bf16.mxu0 0
      %2494 = vmatpush2.bf16.msra.mxu0 0
      %2495 = vmatprep.subr.bf16.mxu0 0
      %2496 = vmatpush2.bf16.msra.mxu0 0
      %2497 = vmatprep.subr.bf16.mxu0 0
      %2498 = vmatpush2.bf16.msra.mxu0 0
      %2499 = vmatprep.subr.bf16.mxu0 0
      %2500 = vmatpush2.bf16.msra.mxu0 0
      %2501 = vmatprep.subr.bf16.mxu0 0
      %2502 = vmatpush2.bf16.msra.mxu0 0
      %2503 = vmatprep.subr.bf16.mxu0 0
      %2504 = vmatpush2.bf16.msra.mxu0 0
      %2505 = vmatprep.mubr.bf16.mxu0 0
      %2506 = vmatmul.mubr.bf16.gmra.mxu0 %v2025
      %v2507 = vpop.f32.mrf.mxu0
      %v2508 = vadd.f32 %v2347, %v2507
      %v2509 = vpop.f32.mrf.mxu0
      %v2510 = vpop.f32.mrf.mxu0
      %v2511 = vadd.f32 %v2350, %v2510
      %v2512 = vpop.f32.mrf.mxu0
      %2513 = vmatprep.mubr.bf16.mxu0 0
      %2514 = vmatmul.mubr.bf16.gmra.mxu0 %v2028
      %v2515 = vpop.f32.mrf.mxu0
      %v2516 = vadd.f32 %v2355, %v2515
      %v2517 = vpop.f32.mrf.mxu0
      %v2518 = vpop.f32.mrf.mxu0
      %v2519 = vadd.f32 %v2358, %v2518
      %v2520 = vpop.f32.mrf.mxu0
      %2521 = vmatprep.mubr.bf16.mxu0 0
      %2522 = vmatmul.mubr.bf16.gmra.mxu0 %v2031
      %v2523 = vpop.f32.mrf.mxu0
      %v2524 = vadd.f32 %v2363, %v2523
      %v2525 = vpop.f32.mrf.mxu0
      %v2526 = vpop.f32.mrf.mxu0
      %v2527 = vadd.f32 %v2366, %v2526
      %v2528 = vpop.f32.mrf.mxu0
      %2529 = vmatprep.mubr.bf16.mxu0 0
      %2530 = vmatmul.mubr.bf16.gmra.mxu0 %v2034
      %v2531 = vpop.f32.mrf.mxu0
      %v2532 = vadd.f32 %v2371, %v2531
      %v2533 = vpop.f32.mrf.mxu0
      %v2534 = vpop.f32.mrf.mxu0
      %v2535 = vadd.f32 %v2374, %v2534
      %v2536 = vpop.f32.mrf.mxu0
      %2537 = vmatprep.mubr.bf16.mxu0 0
      %2538 = vmatmul.mubr.bf16.gmra.mxu0 %v2037
      %v2539 = vpop.f32.mrf.mxu0
      %v2540 = vadd.f32 %v2379, %v2539
      %v2541 = vpop.f32.mrf.mxu0
      %v2542 = vpop.f32.mrf.mxu0
      %v2543 = vadd.f32 %v2382, %v2542
      %v2544 = vpop.f32.mrf.mxu0
      %2545 = vmatprep.mubr.bf16.mxu0 0
      %2546 = vmatmul.mubr.bf16.gmra.mxu0 %v2040
      %v2547 = vpop.f32.mrf.mxu0
      %v2548 = vadd.f32 %v2387, %v2547
      %v2549 = vpop.f32.mrf.mxu0
      %v2550 = vpop.f32.mrf.mxu0
      %v2551 = vadd.f32 %v2390, %v2550
      %v2552 = vpop.f32.mrf.mxu0
      %2553 = vmatprep.mubr.bf16.mxu0 0
      %2554 = vmatmul.mubr.bf16.gmra.mxu0 %v2043
      %v2555 = vpop.f32.mrf.mxu0
      %v2556 = vadd.f32 %v2395, %v2555
      %v2557 = vpop.f32.mrf.mxu0
      %v2558 = vpop.f32.mrf.mxu0
      %v2559 = vadd.f32 %v2398, %v2558
      %v2560 = vpop.f32.mrf.mxu0
      %2561 = vmatprep.mubr.bf16.mxu0 0
      %2562 = vmatmul.mubr.bf16.gmra.mxu0 %v2046
      %v2563 = vpop.f32.mrf.mxu0
      %v2564 = vadd.f32 %v2403, %v2563
      %v2565 = vpop.f32.mrf.mxu0
      %v2566 = vpop.f32.mrf.mxu0
      %v2567 = vadd.f32 %v2406, %v2566
      %v2568 = vpop.f32.mrf.mxu0
      %2569 = vmatprep.mubr.bf16.mxu0 0
      %2570 = vmatmul.mubr.bf16.gmra.mxu0 %v2049
      %v2571 = vpop.f32.mrf.mxu0
      %v2572 = vadd.f32 %v2411, %v2571
      %v2573 = vpop.f32.mrf.mxu0
      %v2574 = vpop.f32.mrf.mxu0
      %v2575 = vadd.f32 %v2414, %v2574
      %v2576 = vpop.f32.mrf.mxu0
      %2577 = vmatprep.mubr.bf16.mxu0 0
      %2578 = vmatmul.mubr.bf16.gmra.mxu0 %v2052
      %v2579 = vpop.f32.mrf.mxu0
      %v2580 = vadd.f32 %v2419, %v2579
      %v2581 = vpop.f32.mrf.mxu0
      %v2582 = vpop.f32.mrf.mxu0
      %v2583 = vadd.f32 %v2422, %v2582
      %v2584 = vpop.f32.mrf.mxu0
      %2585 = vmatprep.mubr.bf16.mxu0 0
      %2586 = vmatmul.mubr.bf16.gmra.mxu0 %v2055
      %v2587 = vpop.f32.mrf.mxu0
      %v2588 = vadd.f32 %v2427, %v2587
      %v2589 = vpop.f32.mrf.mxu0
      %v2590 = vpop.f32.mrf.mxu0
      %v2591 = vadd.f32 %v2430, %v2590
      %v2592 = vpop.f32.mrf.mxu0
      %2593 = vmatprep.mubr.bf16.mxu0 0
      %2594 = vmatmul.mubr.bf16.gmra.mxu0 %v2058
      %v2595 = vpop.f32.mrf.mxu0
      %v2596 = vadd.f32 %v2435, %v2595
      %v2597 = vpop.f32.mrf.mxu0
      %v2598 = vpop.f32.mrf.mxu0
      %v2599 = vadd.f32 %v2438, %v2598
      %v2600 = vpop.f32.mrf.mxu0
      %2601 = vmatprep.mubr.bf16.mxu0 0
      %2602 = vmatmul.mubr.bf16.gmra.mxu0 %v2061
      %v2603 = vpop.f32.mrf.mxu0
      %v2604 = vadd.f32 %v2443, %v2603
      %v2605 = vpop.f32.mrf.mxu0
      %v2606 = vpop.f32.mrf.mxu0
      %v2607 = vadd.f32 %v2446, %v2606
      %v2608 = vpop.f32.mrf.mxu0
      %2609 = vmatprep.mubr.bf16.mxu0 0
      %2610 = vmatmul.mubr.bf16.gmra.mxu0 %v2064
      %v2611 = vpop.f32.mrf.mxu0
      %v2612 = vadd.f32 %v2451, %v2611
      %v2613 = vpop.f32.mrf.mxu0
      %v2614 = vpop.f32.mrf.mxu0
      %v2615 = vadd.f32 %v2454, %v2614
      %v2616 = vpop.f32.mrf.mxu0
      %2617 = vmatprep.mubr.bf16.mxu0 0
      %2618 = vmatmul.mubr.bf16.gmra.mxu0 %v2067
      %v2619 = vpop.f32.mrf.mxu0
      %v2620 = vadd.f32 %v2459, %v2619
      %v2621 = vpop.f32.mrf.mxu0
      %v2622 = vpop.f32.mrf.mxu0
      %v2623 = vadd.f32 %v2462, %v2622
      %v2624 = vpop.f32.mrf.mxu0
      %2625 = vmatprep.mubr.bf16.mxu0 0
      %2626 = vmatmul.mubr.bf16.gmra.mxu0 %v2118
      %v2627 = vpop.f32.mrf.mxu0
      %v2628 = vadd.f32 %v2467, %v2627
      %v2629 = vpop.f32.mrf.mxu0
      %v2630 = vpop.f32.mrf.mxu0
      %v2631 = vadd.f32 %v2470, %v2630
      %v2632 = vpop.f32.mrf.mxu0
      %2633 = vdwg.mxu0
      %v2682 = vunpack.c.l.b16 %v2068
      %v2683 = vunpack.c.l.b16 %v2069
      %v2684 = vunpack.c.l.b16 %v2070
      %v2685 = vunpack.c.l.b16 %v2071
      %v2686 = vunpack.c.l.b16 %v2072
      %v2687 = vunpack.c.l.b16 %v2073
      %v2688 = vunpack.c.l.b16 %v2074
      %v2689 = vunpack.c.l.b16 %v2075
      %v2690 = vunpack.c.l.b16 %v2076
      %v2691 = vunpack.c.l.b16 %v2077
      %v2692 = vunpack.c.l.b16 %v2078
      %v2693 = vunpack.c.l.b16 %v2079
      %v2694 = vunpack.c.l.b16 %v2080
      %v2695 = vunpack.c.l.b16 %v2081
      %v2696 = vunpack.c.l.b16 %v2082
      %v2697 = vunpack.c.l.b16 %v2083
      %v2698 = vunpack.c.l.b16 %v2084
      %v2699 = vunpack.c.l.b16 %v2085
      %v2700 = vunpack.c.l.b16 %v2086
      %v2701 = vunpack.c.l.b16 %v2087
      %v2702 = vunpack.c.l.b16 %v2088
      %v2703 = vunpack.c.l.b16 %v2089
      %v2704 = vunpack.c.l.b16 %v2090
      %v2705 = vunpack.c.l.b16 %v2091
      %v2706 = vunpack.c.l.b16 %v2092
      %v2707 = vunpack.c.l.b16 %v2093
      %v2708 = vunpack.c.l.b16 %v2094
      %v2709 = vunpack.c.l.b16 %v2095
      %v2710 = vunpack.c.l.b16 %v2096
      %v2711 = vunpack.c.l.b16 %v2097
      %v2712 = vunpack.c.l.b16 %v2098
      %v2713 = vunpack.c.l.b16 %v2099
      %v2714 = vunpack.c.l.b16 %v2100
      %v2715 = vunpack.c.l.b16 %v2101
      %v2716 = vunpack.c.l.b16 %v2102
      %v2717 = vunpack.c.l.b16 %v2103
      %v2718 = vunpack.c.l.b16 %v2104
      %v2719 = vunpack.c.l.b16 %v2105
      %v2720 = vunpack.c.l.b16 %v2106
      %v2721 = vunpack.c.l.b16 %v2107
      %v2722 = vunpack.c.l.b16 %v2108
      %v2723 = vunpack.c.l.b16 %v2109
      %v2724 = vunpack.c.l.b16 %v2110
      %v2725 = vunpack.c.l.b16 %v2111
      %v2726 = vunpack.c.l.b16 %v2112
      %v2727 = vunpack.c.l.b16 %v2113
      %v2728 = vunpack.c.l.b16 %v2114
      %v2729 = vunpack.c.l.b16 %v2115
      %v2730 = vpack.c.b16 %v2683, %v2682
      %v2731 = vpack.c.b16 %v2685, %v2684
      %v2732 = vpack.c.b16 %v2687, %v2686
      %v2733 = vpack.c.b16 %v2689, %v2688
      %v2734 = vpack.c.b16 %v2691, %v2690
      %v2735 = vpack.c.b16 %v2693, %v2692
      %v2736 = vpack.c.b16 %v2695, %v2694
      %v2737 = vpack.c.b16 %v2697, %v2696
      %v2738 = vpack.c.b16 %v2699, %v2698
      %v2739 = vpack.c.b16 %v2701, %v2700
      %v2740 = vpack.c.b16 %v2703, %v2702
      %v2741 = vpack.c.b16 %v2705, %v2704
      %v2742 = vpack.c.b16 %v2707, %v2706
      %v2743 = vpack.c.b16 %v2709, %v2708
      %v2744 = vpack.c.b16 %v2711, %v2710
      %v2745 = vpack.c.b16 %v2713, %v2712
      %v2746 = vpack.c.b16 %v2715, %v2714
      %v2747 = vpack.c.b16 %v2717, %v2716
      %v2748 = vpack.c.b16 %v2719, %v2718
      %v2749 = vpack.c.b16 %v2721, %v2720
      %v2750 = vpack.c.b16 %v2723, %v2722
      %v2751 = vpack.c.b16 %v2725, %v2724
      %v2752 = vpack.c.b16 %v2727, %v2726
      %v2753 = vpack.c.b16 %v2729, %v2728
      %2778 = vmatprep.subr.bf16.mxu0 0
      %2779 = vmatpush1.bf16.msra.mxu0 %v2737
      %2780 = vmatprep.subr.bf16.mxu0 0
      %2781 = vmatpush1.bf16.msra.mxu0 %v2736
      %2782 = vmatprep.subr.bf16.mxu0 0
      %2783 = vmatpush1.bf16.msra.mxu0 %v2735
      %2784 = vmatprep.subr.bf16.mxu0 0
      %2785 = vmatpush1.bf16.msra.mxu0 %v2734
      %2786 = vmatprep.subr.bf16.mxu0 0
      %2787 = vmatpush1.bf16.msra.mxu0 %v2733
      %2788 = vmatprep.subr.bf16.mxu0 0
      %2789 = vmatpush1.bf16.msra.mxu0 %v2732
      %2790 = vmatprep.subr.bf16.mxu0 0
      %2791 = vmatpush1.bf16.msra.mxu0 %v2731
      %2792 = vmatprep.subr.bf16.mxu0 0
      %2793 = vmatpush1.bf16.msra.mxu0 %v2730
      %2794 = vmatprep.subr.bf16.mxu0 0
      %2795 = vmatpush2.bf16.msra.mxu0 %v2745
      %2796 = vmatprep.subr.bf16.mxu0 0
      %2797 = vmatpush2.bf16.msra.mxu0 %v2744
      %2798 = vmatprep.subr.bf16.mxu0 0
      %2799 = vmatpush2.bf16.msra.mxu0 %v2743
      %2800 = vmatprep.subr.bf16.mxu0 0
      %2801 = vmatpush2.bf16.msra.mxu0 %v2742
      %2802 = vmatprep.subr.bf16.mxu0 0
      %2803 = vmatpush2.bf16.msra.mxu0 %v2741
      %2804 = vmatprep.subr.bf16.mxu0 0
      %2805 = vmatpush2.bf16.msra.mxu0 %v2740
      %2806 = vmatprep.subr.bf16.mxu0 0
      %2807 = vmatpush2.bf16.msra.mxu0 %v2739
      %2808 = vmatprep.subr.bf16.mxu0 0
      %2809 = vmatpush2.bf16.msra.mxu0 %v2738
      %2810 = vmatprep.mubr.bf16.mxu0 %v2021
      %2811 = vmatmul.mubr.bf16.gmra.mxu0 %v2020
      %v2812 = vpop.f32.mrf.mxu0
      %v2813 = vadd.f32 %v2508, %v2812
      %v2814 = vpop.f32.mrf.mxu0
      %v2815 = vpop.f32.mrf.mxu0
      %v2816 = vadd.f32 %v2511, %v2815
      %v2817 = vpop.f32.mrf.mxu0
      %2818 = vmatprep.mubr.bf16.mxu0 %v2024
      %2819 = vmatmul.mubr.bf16.gmra.mxu0 %v2023
      %v2820 = vpop.f32.mrf.mxu0
      %v2821 = vadd.f32 %v2516, %v2820
      %v2822 = vpop.f32.mrf.mxu0
      %v2823 = vpop.f32.mrf.mxu0
      %v2824 = vadd.f32 %v2519, %v2823
      %v2825 = vpop.f32.mrf.mxu0
      %2826 = vmatprep.mubr.bf16.mxu0 %v2027
      %2827 = vmatmul.mubr.bf16.gmra.mxu0 %v2026
      %v2828 = vpop.f32.mrf.mxu0
      %v2829 = vadd.f32 %v2524, %v2828
      %v2830 = vpop.f32.mrf.mxu0
      %v2831 = vpop.f32.mrf.mxu0
      %v2832 = vadd.f32 %v2527, %v2831
      %v2833 = vpop.f32.mrf.mxu0
      %2834 = vmatprep.mubr.bf16.mxu0 %v2030
      %2835 = vmatmul.mubr.bf16.gmra.mxu0 %v2029
      %v2836 = vpop.f32.mrf.mxu0
      %v2837 = vadd.f32 %v2532, %v2836
      %v2838 = vpop.f32.mrf.mxu0
      %v2839 = vpop.f32.mrf.mxu0
      %v2840 = vadd.f32 %v2535, %v2839
      %v2841 = vpop.f32.mrf.mxu0
      %2842 = vmatprep.mubr.bf16.mxu0 %v2033
      %2843 = vmatmul.mubr.bf16.gmra.mxu0 %v2032
      %v2844 = vpop.f32.mrf.mxu0
      %v2845 = vadd.f32 %v2540, %v2844
      %v2846 = vpop.f32.mrf.mxu0
      %v2847 = vpop.f32.mrf.mxu0
      %v2848 = vadd.f32 %v2543, %v2847
      %v2849 = vpop.f32.mrf.mxu0
      %2850 = vmatprep.mubr.bf16.mxu0 %v2036
      %2851 = vmatmul.mubr.bf16.gmra.mxu0 %v2035
      %v2852 = vpop.f32.mrf.mxu0
      %v2853 = vadd.f32 %v2548, %v2852
      %v2854 = vpop.f32.mrf.mxu0
      %v2855 = vpop.f32.mrf.mxu0
      %v2856 = vadd.f32 %v2551, %v2855
      %v2857 = vpop.f32.mrf.mxu0
      %2858 = vmatprep.mubr.bf16.mxu0 %v2039
      %2859 = vmatmul.mubr.bf16.gmra.mxu0 %v2038
      %v2860 = vpop.f32.mrf.mxu0
      %v2861 = vadd.f32 %v2556, %v2860
      %v2862 = vpop.f32.mrf.mxu0
      %v2863 = vpop.f32.mrf.mxu0
      %v2864 = vadd.f32 %v2559, %v2863
      %v2865 = vpop.f32.mrf.mxu0
      %2866 = vmatprep.mubr.bf16.mxu0 %v2042
      %2867 = vmatmul.mubr.bf16.gmra.mxu0 %v2041
      %v2868 = vpop.f32.mrf.mxu0
      %v2869 = vadd.f32 %v2564, %v2868
      %v2870 = vpop.f32.mrf.mxu0
      %v2871 = vpop.f32.mrf.mxu0
      %v2872 = vadd.f32 %v2567, %v2871
      %v2873 = vpop.f32.mrf.mxu0
      %2874 = vmatprep.mubr.bf16.mxu0 %v2045
      %2875 = vmatmul.mubr.bf16.gmra.mxu0 %v2044
      %v2876 = vpop.f32.mrf.mxu0
      %v2877 = vadd.f32 %v2572, %v2876
      %v2878 = vpop.f32.mrf.mxu0
      %v2879 = vpop.f32.mrf.mxu0
      %v2880 = vadd.f32 %v2575, %v2879
      %v2881 = vpop.f32.mrf.mxu0
      %2882 = vmatprep.mubr.bf16.mxu0 %v2048
      %2883 = vmatmul.mubr.bf16.gmra.mxu0 %v2047
      %v2884 = vpop.f32.mrf.mxu0
      %v2885 = vadd.f32 %v2580, %v2884
      %v2886 = vpop.f32.mrf.mxu0
      %v2887 = vpop.f32.mrf.mxu0
      %v2888 = vadd.f32 %v2583, %v2887
      %v2889 = vpop.f32.mrf.mxu0
      %2890 = vmatprep.mubr.bf16.mxu0 %v2051
      %2891 = vmatmul.mubr.bf16.gmra.mxu0 %v2050
      %v2892 = vpop.f32.mrf.mxu0
      %v2893 = vadd.f32 %v2588, %v2892
      %v2894 = vpop.f32.mrf.mxu0
      %v2895 = vpop.f32.mrf.mxu0
      %v2896 = vadd.f32 %v2591, %v2895
      %v2897 = vpop.f32.mrf.mxu0
      %2898 = vmatprep.mubr.bf16.mxu0 %v2054
      %2899 = vmatmul.mubr.bf16.gmra.mxu0 %v2053
      %v2900 = vpop.f32.mrf.mxu0
      %v2901 = vadd.f32 %v2596, %v2900
      %v2902 = vpop.f32.mrf.mxu0
      %v2903 = vpop.f32.mrf.mxu0
      %v2904 = vadd.f32 %v2599, %v2903
      %v2905 = vpop.f32.mrf.mxu0
      %2906 = vmatprep.mubr.bf16.mxu0 %v2057
      %2907 = vmatmul.mubr.bf16.gmra.mxu0 %v2056
      %v2908 = vpop.f32.mrf.mxu0
      %v2909 = vadd.f32 %v2604, %v2908
      %v2910 = vpop.f32.mrf.mxu0
      %v2911 = vpop.f32.mrf.mxu0
      %v2912 = vadd.f32 %v2607, %v2911
      %v2913 = vpop.f32.mrf.mxu0
      %2914 = vmatprep.mubr.bf16.mxu0 %v2060
      %2915 = vmatmul.mubr.bf16.gmra.mxu0 %v2059
      %v2916 = vpop.f32.mrf.mxu0
      %v2917 = vadd.f32 %v2612, %v2916
      %v2918 = vpop.f32.mrf.mxu0
      %v2919 = vpop.f32.mrf.mxu0
      %v2920 = vadd.f32 %v2615, %v2919
      %v2921 = vpop.f32.mrf.mxu0
      %2922 = vmatprep.mubr.bf16.mxu0 %v2063
      %2923 = vmatmul.mubr.bf16.gmra.mxu0 %v2062
      %v2924 = vpop.f32.mrf.mxu0
      %v2925 = vadd.f32 %v2620, %v2924
      %v2926 = vpop.f32.mrf.mxu0
      %v2927 = vpop.f32.mrf.mxu0
      %v2928 = vadd.f32 %v2623, %v2927
      %v2929 = vpop.f32.mrf.mxu0
      %2930 = vmatprep.mubr.bf16.mxu0 %v2066
      %2931 = vmatmul.mubr.bf16.gmra.mxu0 %v2065
      %v2932 = vpop.f32.mrf.mxu0
      %v2933 = vadd.f32 %v2628, %v2932
      %v2934 = vpop.f32.mrf.mxu0
      %v2935 = vpop.f32.mrf.mxu0
      %v2936 = vadd.f32 %v2631, %v2935
      %v2937 = vpop.f32.mrf.mxu0
      %2938 = vdwg.mxu0
      %2939 = vmatprep.subr.bf16.mxu0 0
      %2940 = vmatpush1.bf16.msra.mxu0 %v2753
      %2941 = vmatprep.subr.bf16.mxu0 0
      %2942 = vmatpush1.bf16.msra.mxu0 %v2752
      %2943 = vmatprep.subr.bf16.mxu0 0
      %2944 = vmatpush1.bf16.msra.mxu0 %v2751
      %2945 = vmatprep.subr.bf16.mxu0 0
      %2946 = vmatpush1.bf16.msra.mxu0 %v2750
      %2947 = vmatprep.subr.bf16.mxu0 0
      %2948 = vmatpush1.bf16.msra.mxu0 %v2749
      %2949 = vmatprep.subr.bf16.mxu0 0
      %2950 = vmatpush1.bf16.msra.mxu0 %v2748
      %2951 = vmatprep.subr.bf16.mxu0 0
      %2952 = vmatpush1.bf16.msra.mxu0 %v2747
      %2953 = vmatprep.subr.bf16.mxu0 0
      %2954 = vmatpush1.bf16.msra.mxu0 %v2746
      %2955 = vmatprep.subr.bf16.mxu0 0
      %2956 = vmatpush2.bf16.msra.mxu0 0
      %2957 = vmatprep.subr.bf16.mxu0 0
      %2958 = vmatpush2.bf16.msra.mxu0 0
      %2959 = vmatprep.subr.bf16.mxu0 0
      %2960 = vmatpush2.bf16.msra.mxu0 0
      %2961 = vmatprep.subr.bf16.mxu0 0
      %2962 = vmatpush2.bf16.msra.mxu0 0
      %2963 = vmatprep.subr.bf16.mxu0 0
      %2964 = vmatpush2.bf16.msra.mxu0 0
      %2965 = vmatprep.subr.bf16.mxu0 0
      %2966 = vmatpush2.bf16.msra.mxu0 0
      %2967 = vmatprep.subr.bf16.mxu0 0
      %2968 = vmatpush2.bf16.msra.mxu0 0
      %2969 = vmatprep.subr.bf16.mxu0 0
      %2970 = vmatpush2.bf16.msra.mxu0 0
      %2971 = vmatprep.mubr.bf16.mxu0 0
      %2972 = vmatmul.mubr.bf16.gmra.mxu0 %v2022
      %v2973 = vpop.f32.mrf.mxu0
      %v2974 = vadd.f32 %v2813, %v2973
      %v2975 = vpop.f32.mrf.mxu0
      %v2976 = vpop.f32.mrf.mxu0
      %v2977 = vadd.f32 %v2816, %v2976
      %v2978 = vpop.f32.mrf.mxu0
      %2979 = vmatprep.mubr.bf16.mxu0 0
      %2980 = vmatmul.mubr.bf16.gmra.mxu0 %v2025
      %v2981 = vpop.f32.mrf.mxu0
      %v2982 = vadd.f32 %v2821, %v2981
      %v2983 = vpop.f32.mrf.mxu0
      %v2984 = vpop.f32.mrf.mxu0
      %v2985 = vadd.f32 %v2824, %v2984
      %v2986 = vpop.f32.mrf.mxu0
      %2987 = vmatprep.mubr.bf16.mxu0 0
      %2988 = vmatmul.mubr.bf16.gmra.mxu0 %v2028
      %v2989 = vpop.f32.mrf.mxu0
      %v2990 = vadd.f32 %v2829, %v2989
      %v2991 = vpop.f32.mrf.mxu0
      %v2992 = vpop.f32.mrf.mxu0
      %v2993 = vadd.f32 %v2832, %v2992
      %v2994 = vpop.f32.mrf.mxu0
      %2995 = vmatprep.mubr.bf16.mxu0 0
      %2996 = vmatmul.mubr.bf16.gmra.mxu0 %v2031
      %v2997 = vpop.f32.mrf.mxu0
      %v2998 = vadd.f32 %v2837, %v2997
      %v2999 = vpop.f32.mrf.mxu0
      %v3000 = vpop.f32.mrf.mxu0
      %v3001 = vadd.f32 %v2840, %v3000
      %v3002 = vpop.f32.mrf.mxu0
      %3003 = vmatprep.mubr.bf16.mxu0 0
      %3004 = vmatmul.mubr.bf16.gmra.mxu0 %v2034
      %v3005 = vpop.f32.mrf.mxu0
      %v3006 = vadd.f32 %v2845, %v3005
      %v3007 = vpop.f32.mrf.mxu0
      %v3008 = vpop.f32.mrf.mxu0
      %v3009 = vadd.f32 %v2848, %v3008
      %v3010 = vpop.f32.mrf.mxu0
      %3011 = vmatprep.mubr.bf16.mxu0 0
      %3012 = vmatmul.mubr.bf16.gmra.mxu0 %v2037
      %v3013 = vpop.f32.mrf.mxu0
      %v3014 = vadd.f32 %v2853, %v3013
      %v3015 = vpop.f32.mrf.mxu0
      %v3016 = vpop.f32.mrf.mxu0
      %v3017 = vadd.f32 %v2856, %v3016
      %v3018 = vpop.f32.mrf.mxu0
      %3019 = vmatprep.mubr.bf16.mxu0 0
      %3020 = vmatmul.mubr.bf16.gmra.mxu0 %v2040
      %v3021 = vpop.f32.mrf.mxu0
      %v3022 = vadd.f32 %v2861, %v3021
      %v3023 = vpop.f32.mrf.mxu0
      %v3024 = vpop.f32.mrf.mxu0
      %v3025 = vadd.f32 %v2864, %v3024
      %v3026 = vpop.f32.mrf.mxu0
      %3027 = vmatprep.mubr.bf16.mxu0 0
      %3028 = vmatmul.mubr.bf16.gmra.mxu0 %v2043
      %v3029 = vpop.f32.mrf.mxu0
      %v3030 = vadd.f32 %v2869, %v3029
      %v3031 = vpop.f32.mrf.mxu0
      %v3032 = vpop.f32.mrf.mxu0
      %v3033 = vadd.f32 %v2872, %v3032
      %v3034 = vpop.f32.mrf.mxu0
      %3035 = vmatprep.mubr.bf16.mxu0 0
      %3036 = vmatmul.mubr.bf16.gmra.mxu0 %v2046
      %v3037 = vpop.f32.mrf.mxu0
      %v3038 = vadd.f32 %v2877, %v3037
      %v3039 = vpop.f32.mrf.mxu0
      %v3040 = vpop.f32.mrf.mxu0
      %v3041 = vadd.f32 %v2880, %v3040
      %v3042 = vpop.f32.mrf.mxu0
      %3043 = vmatprep.mubr.bf16.mxu0 0
      %3044 = vmatmul.mubr.bf16.gmra.mxu0 %v2049
      %v3045 = vpop.f32.mrf.mxu0
      %v3046 = vadd.f32 %v2885, %v3045
      %v3047 = vpop.f32.mrf.mxu0
      %v3048 = vpop.f32.mrf.mxu0
      %v3049 = vadd.f32 %v2888, %v3048
      %v3050 = vpop.f32.mrf.mxu0
      %3051 = vmatprep.mubr.bf16.mxu0 0
      %3052 = vmatmul.mubr.bf16.gmra.mxu0 %v2052
      %v3053 = vpop.f32.mrf.mxu0
      %v3054 = vadd.f32 %v2893, %v3053
      %v3055 = vpop.f32.mrf.mxu0
      %v3056 = vpop.f32.mrf.mxu0
      %v3057 = vadd.f32 %v2896, %v3056
      %v3058 = vpop.f32.mrf.mxu0
      %3059 = vmatprep.mubr.bf16.mxu0 0
      %3060 = vmatmul.mubr.bf16.gmra.mxu0 %v2055
      %v3061 = vpop.f32.mrf.mxu0
      %v3062 = vadd.f32 %v2901, %v3061
      %v3063 = vpop.f32.mrf.mxu0
      %v3064 = vpop.f32.mrf.mxu0
      %v3065 = vadd.f32 %v2904, %v3064
      %v3066 = vpop.f32.mrf.mxu0
      %3067 = vmatprep.mubr.bf16.mxu0 0
      %3068 = vmatmul.mubr.bf16.gmra.mxu0 %v2058
      %v3069 = vpop.f32.mrf.mxu0
      %v3070 = vadd.f32 %v2909, %v3069
      %v3071 = vpop.f32.mrf.mxu0
      %v3072 = vpop.f32.mrf.mxu0
      %v3073 = vadd.f32 %v2912, %v3072
      %v3074 = vpop.f32.mrf.mxu0
      %3075 = vmatprep.mubr.bf16.mxu0 0
      %3076 = vmatmul.mubr.bf16.gmra.mxu0 %v2061
      %v3077 = vpop.f32.mrf.mxu0
      %v3078 = vadd.f32 %v2917, %v3077
      %v3079 = vpop.f32.mrf.mxu0
      %v3080 = vpop.f32.mrf.mxu0
      %v3081 = vadd.f32 %v2920, %v3080
      %v3082 = vpop.f32.mrf.mxu0
      %3083 = vmatprep.mubr.bf16.mxu0 0
      %3084 = vmatmul.mubr.bf16.gmra.mxu0 %v2064
      %v3085 = vpop.f32.mrf.mxu0
      %v3086 = vadd.f32 %v2925, %v3085
      %v3087 = vpop.f32.mrf.mxu0
      %v3088 = vpop.f32.mrf.mxu0
      %v3089 = vadd.f32 %v2928, %v3088
      %v3090 = vpop.f32.mrf.mxu0
      %3091 = vmatprep.mubr.bf16.mxu0 0
      %3092 = vmatmul.mubr.bf16.gmra.mxu0 %v2067
      %v3093 = vpop.f32.mrf.mxu0
      %v3094 = vadd.f32 %v2933, %v3093
      %v3095 = vpop.f32.mrf.mxu0
      %v3096 = vpop.f32.mrf.mxu0
      %v3097 = vadd.f32 %v2936, %v3096
      %v3098 = vpop.f32.mrf.mxu0
      %3099 = vdwg.mxu0
      %v3100 = vpack.c.bf16 %v1802, %v1801
      %v3101 = vpack.c.bf16 %v1117, %v1116
      %v3102 = vpack.c.bf16 %v2019, %v2018
      %s3103 = scalar_lea.vmem %s5, 384
      %v3104 = vld [vmem:[%s3103] sm:$0xf]
      %v3105 = vld [vmem:[%s3103 + $0x4] sm:$0xf]
      %v3106 = vld [vmem:[%s3103 + $0x8] sm:$0xf]
      %v3107 = vld [vmem:[%s3103 + $0xc] sm:$0xf]
      %v3108 = vld [vmem:[%s3103 + $0x10] sm:$0xf]
      %v3109 = vld [vmem:[%s3103 + $0x14] sm:$0xf]
      %v3110 = vld [vmem:[%s3103 + $0x18] sm:$0xf]
      %v3111 = vld [vmem:[%s3103 + $0x1c] sm:$0xf]
      %v3112 = vld [vmem:[%s3103 + $0x20] sm:$0xf]
      %v3113 = vld [vmem:[%s3103 + $0x24] sm:$0xf]
      %v3114 = vld [vmem:[%s3103 + $0x28] sm:$0xf]
      %v3115 = vld [vmem:[%s3103 + $0x2c] sm:$0xf]
      %v3116 = vld [vmem:[%s3103 + $0x30] sm:$0xf]
      %v3117 = vld [vmem:[%s3103 + $0x34] sm:$0xf]
      %v3118 = vld [vmem:[%s3103 + $0x38] sm:$0xf]
      %v3119 = vld [vmem:[%s3103 + $0x3c] sm:$0xf]
      %v3120 = vld [vmem:[%s3103 + $0x40] sm:$0xf]
      %v3121 = vld [vmem:[%s3103 + $0x44] sm:$0xf]
      %v3122 = vld [vmem:[%s3103 + $0x48] sm:$0xf]
      %v3123 = vld [vmem:[%s3103 + $0x4c] sm:$0xf]
      %v3124 = vld [vmem:[%s3103 + $0x50] sm:$0xf]
      %v3125 = vld [vmem:[%s3103 + $0x54] sm:$0xf]
      %v3126 = vld [vmem:[%s3103 + $0x58] sm:$0xf]
      %v3127 = vld [vmem:[%s3103 + $0x5c] sm:$0xf]
      %v3128 = vld [vmem:[%s3103 + $0x60] sm:$0xf]
      %v3129 = vld [vmem:[%s3103 + $0x64] sm:$0xf]
      %v3130 = vld [vmem:[%s3103 + $0x68] sm:$0xf]
      %v3131 = vld [vmem:[%s3103 + $0x6c] sm:$0xf]
      %v3132 = vld [vmem:[%s3103 + $0x70] sm:$0xf]
      %v3133 = vld [vmem:[%s3103 + $0x74] sm:$0xf]
      %v3134 = vld [vmem:[%s3103 + $0x78] sm:$0xf]
      %v3135 = vld [vmem:[%s3103 + $0x7c] sm:$0xf]
      %v3136 = vld [vmem:[%s3103 + $0x80] sm:$0xf]
      %v3137 = vld [vmem:[%s3103 + $0x84] sm:$0xf]
      %v3138 = vld [vmem:[%s3103 + $0x88] sm:$0xf]
      %v3139 = vld [vmem:[%s3103 + $0x8c] sm:$0xf]
      %v3140 = vld [vmem:[%s3103 + $0x90] sm:$0xf]
      %v3141 = vld [vmem:[%s3103 + $0x94] sm:$0xf]
      %v3142 = vld [vmem:[%s3103 + $0x98] sm:$0xf]
      %v3143 = vld [vmem:[%s3103 + $0x9c] sm:$0xf]
      %v3144 = vld [vmem:[%s3103 + $0xa0] sm:$0xf]
      %v3145 = vld [vmem:[%s3103 + $0xa4] sm:$0xf]
      %v3146 = vld [vmem:[%s3103 + $0xa8] sm:$0xf]
      %v3147 = vld [vmem:[%s3103 + $0xac] sm:$0xf]
      %v3148 = vld [vmem:[%s3103 + $0xb0] sm:$0xf]
      %v3149 = vld [vmem:[%s3103 + $0xb4] sm:$0xf]
      %v3150 = vld [vmem:[%s3103 + $0xb8] sm:$0xf]
      %v3151 = vld [vmem:[%s3103 + $0xbc] sm:$0xf]
      %v3200 = vunpack.c.l.b16 %v3104
      %v3201 = vunpack.c.l.b16 %v3105
      %v3202 = vunpack.c.l.b16 %v3106
      %v3203 = vunpack.c.l.b16 %v3107
      %v3204 = vunpack.c.l.b16 %v3108
      %v3205 = vunpack.c.l.b16 %v3109
      %v3206 = vunpack.c.l.b16 %v3110
      %v3207 = vunpack.c.l.b16 %v3111
      %v3208 = vunpack.c.l.b16 %v3112
      %v3209 = vunpack.c.l.b16 %v3113
      %v3210 = vunpack.c.l.b16 %v3114
      %v3211 = vunpack.c.l.b16 %v3115
      %v3212 = vunpack.c.l.b16 %v3116
      %v3213 = vunpack.c.l.b16 %v3117
      %v3214 = vunpack.c.l.b16 %v3118
      %v3215 = vunpack.c.l.b16 %v3119
      %v3216 = vunpack.c.l.b16 %v3120
      %v3217 = vunpack.c.l.b16 %v3121
      %v3218 = vunpack.c.l.b16 %v3122
      %v3219 = vunpack.c.l.b16 %v3123
      %v3220 = vunpack.c.l.b16 %v3124
      %v3221 = vunpack.c.l.b16 %v3125
      %v3222 = vunpack.c.l.b16 %v3126
      %v3223 = vunpack.c.l.b16 %v3127
      %v3224 = vunpack.c.l.b16 %v3128
      %v3225 = vunpack.c.l.b16 %v3129
      %v3226 = vunpack.c.l.b16 %v3130
      %v3227 = vunpack.c.l.b16 %v3131
      %v3228 = vunpack.c.l.b16 %v3132
      %v3229 = vunpack.c.l.b16 %v3133
      %v3230 = vunpack.c.l.b16 %v3134
      %v3231 = vunpack.c.l.b16 %v3135
      %v3232 = vunpack.c.l.b16 %v3136
      %v3233 = vunpack.c.l.b16 %v3137
      %v3234 = vunpack.c.l.b16 %v3138
      %v3235 = vunpack.c.l.b16 %v3139
      %v3236 = vunpack.c.l.b16 %v3140
      %v3237 = vunpack.c.l.b16 %v3141
      %v3238 = vunpack.c.l.b16 %v3142
      %v3239 = vunpack.c.l.b16 %v3143
      %v3240 = vunpack.c.l.b16 %v3144
      %v3241 = vunpack.c.l.b16 %v3145
      %v3242 = vunpack.c.l.b16 %v3146
      %v3243 = vunpack.c.l.b16 %v3147
      %v3244 = vunpack.c.l.b16 %v3148
      %v3245 = vunpack.c.l.b16 %v3149
      %v3246 = vunpack.c.l.b16 %v3150
      %v3247 = vunpack.c.l.b16 %v3151
      %v3248 = vpack.c.b16 %v3201, %v3200
      %v3249 = vpack.c.b16 %v3203, %v3202
      %v3250 = vpack.c.b16 %v3205, %v3204
      %v3251 = vpack.c.b16 %v3207, %v3206
      %v3252 = vpack.c.b16 %v3209, %v3208
      %v3253 = vpack.c.b16 %v3211, %v3210
      %v3254 = vpack.c.b16 %v3213, %v3212
      %v3255 = vpack.c.b16 %v3215, %v3214
      %v3256 = vpack.c.b16 %v3217, %v3216
      %v3257 = vpack.c.b16 %v3219, %v3218
      %v3258 = vpack.c.b16 %v3221, %v3220
      %v3259 = vpack.c.b16 %v3223, %v3222
      %v3260 = vpack.c.b16 %v3225, %v3224
      %v3261 = vpack.c.b16 %v3227, %v3226
      %v3262 = vpack.c.b16 %v3229, %v3228
      %v3263 = vpack.c.b16 %v3231, %v3230
      %v3264 = vpack.c.b16 %v3233, %v3232
      %v3265 = vpack.c.b16 %v3235, %v3234
      %v3266 = vpack.c.b16 %v3237, %v3236
      %v3267 = vpack.c.b16 %v3239, %v3238
      %v3268 = vpack.c.b16 %v3241, %v3240
      %v3269 = vpack.c.b16 %v3243, %v3242
      %v3270 = vpack.c.b16 %v3245, %v3244
      %v3271 = vpack.c.b16 %v3247, %v3246
      %3296 = vmatprep.subr.bf16.mxu0 0
      %3297 = vmatpush1.bf16.msra.mxu0 %v3255
      %3298 = vmatprep.subr.bf16.mxu0 0
      %3299 = vmatpush1.bf16.msra.mxu0 %v3254
      %3300 = vmatprep.subr.bf16.mxu0 0
      %3301 = vmatpush1.bf16.msra.mxu0 %v3253
      %3302 = vmatprep.subr.bf16.mxu0 0
      %3303 = vmatpush1.bf16.msra.mxu0 %v3252
      %3304 = vmatprep.subr.bf16.mxu0 0
      %3305 = vmatpush1.bf16.msra.mxu0 %v3251
      %3306 = vmatprep.subr.bf16.mxu0 0
      %3307 = vmatpush1.bf16.msra.mxu0 %v3250
      %3308 = vmatprep.subr.bf16.mxu0 0
      %3309 = vmatpush1.bf16.msra.mxu0 %v3249
      %3310 = vmatprep.subr.bf16.mxu0 0
      %3311 = vmatpush1.bf16.msra.mxu0 %v3248
      %3312 = vmatprep.subr.bf16.mxu0 0
      %3313 = vmatpush2.bf16.msra.mxu0 %v3263
      %3314 = vmatprep.subr.bf16.mxu0 0
      %3315 = vmatpush2.bf16.msra.mxu0 %v3262
      %3316 = vmatprep.subr.bf16.mxu0 0
      %3317 = vmatpush2.bf16.msra.mxu0 %v3261
      %3318 = vmatprep.subr.bf16.mxu0 0
      %3319 = vmatpush2.bf16.msra.mxu0 %v3260
      %3320 = vmatprep.subr.bf16.mxu0 0
      %3321 = vmatpush2.bf16.msra.mxu0 %v3259
      %3322 = vmatprep.subr.bf16.mxu0 0
      %3323 = vmatpush2.bf16.msra.mxu0 %v3258
      %3324 = vmatprep.subr.bf16.mxu0 0
      %3325 = vmatpush2.bf16.msra.mxu0 %v3257
      %3326 = vmatprep.subr.bf16.mxu0 0
      %3327 = vmatpush2.bf16.msra.mxu0 %v3256
      %3328 = vmatprep.mubr.bf16.mxu0 %v2027
      %3329 = vmatmul.mubr.bf16.gmra.mxu0 %v2026
      %v3330 = vpop.f32.mrf.mxu0
      %v3331 = vadd.f32 0.0, %v3330
      %v3332 = vpop.f32.mrf.mxu0
      %v3333 = vpop.f32.mrf.mxu0
      %v3334 = vadd.f32 0.0, %v3333
      %v3335 = vpop.f32.mrf.mxu0
      %3336 = vmatprep.mubr.bf16.mxu0 %v2030
      %3337 = vmatmul.mubr.bf16.gmra.mxu0 %v2029
      %v3338 = vpop.f32.mrf.mxu0
      %v3339 = vadd.f32 0.0, %v3338
      %v3340 = vpop.f32.mrf.mxu0
      %v3341 = vpop.f32.mrf.mxu0
      %v3342 = vadd.f32 0.0, %v3341
      %v3343 = vpop.f32.mrf.mxu0
      %3344 = vmatprep.mubr.bf16.mxu0 %v2033
      %3345 = vmatmul.mubr.bf16.gmra.mxu0 %v2032
      %v3346 = vpop.f32.mrf.mxu0
      %v3347 = vadd.f32 0.0, %v3346
      %v3348 = vpop.f32.mrf.mxu0
      %v3349 = vpop.f32.mrf.mxu0
      %v3350 = vadd.f32 0.0, %v3349
      %v3351 = vpop.f32.mrf.mxu0
      %3352 = vmatprep.mubr.bf16.mxu0 %v2036
      %3353 = vmatmul.mubr.bf16.gmra.mxu0 %v2035
      %v3354 = vpop.f32.mrf.mxu0
      %v3355 = vadd.f32 0.0, %v3354
      %v3356 = vpop.f32.mrf.mxu0
      %v3357 = vpop.f32.mrf.mxu0
      %v3358 = vadd.f32 0.0, %v3357
      %v3359 = vpop.f32.mrf.mxu0
      %3360 = vmatprep.mubr.bf16.mxu0 %v2039
      %3361 = vmatmul.mubr.bf16.gmra.mxu0 %v2038
      %v3362 = vpop.f32.mrf.mxu0
      %v3363 = vadd.f32 0.0, %v3362
      %v3364 = vpop.f32.mrf.mxu0
      %v3365 = vpop.f32.mrf.mxu0
      %v3366 = vadd.f32 0.0, %v3365
      %v3367 = vpop.f32.mrf.mxu0
      %3368 = vmatprep.mubr.bf16.mxu0 %v2042
      %3369 = vmatmul.mubr.bf16.gmra.mxu0 %v2041
      %v3370 = vpop.f32.mrf.mxu0
      %v3371 = vadd.f32 0.0, %v3370
      %v3372 = vpop.f32.mrf.mxu0
      %v3373 = vpop.f32.mrf.mxu0
      %v3374 = vadd.f32 0.0, %v3373
      %v3375 = vpop.f32.mrf.mxu0
      %3376 = vmatprep.mubr.bf16.mxu0 %v2045
      %3377 = vmatmul.mubr.bf16.gmra.mxu0 %v2044
      %v3378 = vpop.f32.mrf.mxu0
      %v3379 = vadd.f32 0.0, %v3378
      %v3380 = vpop.f32.mrf.mxu0
      %v3381 = vpop.f32.mrf.mxu0
      %v3382 = vadd.f32 0.0, %v3381
      %v3383 = vpop.f32.mrf.mxu0
      %3384 = vmatprep.mubr.bf16.mxu0 %v2048
      %3385 = vmatmul.mubr.bf16.gmra.mxu0 %v2047
      %v3386 = vpop.f32.mrf.mxu0
      %v3387 = vadd.f32 0.0, %v3386
      %v3388 = vpop.f32.mrf.mxu0
      %v3389 = vpop.f32.mrf.mxu0
      %v3390 = vadd.f32 0.0, %v3389
      %v3391 = vpop.f32.mrf.mxu0
      %3392 = vmatprep.mubr.bf16.mxu0 %v2051
      %3393 = vmatmul.mubr.bf16.gmra.mxu0 %v2050
      %v3394 = vpop.f32.mrf.mxu0
      %v3395 = vadd.f32 0.0, %v3394
      %v3396 = vpop.f32.mrf.mxu0
      %v3397 = vpop.f32.mrf.mxu0
      %v3398 = vadd.f32 0.0, %v3397
      %v3399 = vpop.f32.mrf.mxu0
      %3400 = vmatprep.mubr.bf16.mxu0 %v2054
      %3401 = vmatmul.mubr.bf16.gmra.mxu0 %v2053
      %v3402 = vpop.f32.mrf.mxu0
      %v3403 = vadd.f32 0.0, %v3402
      %v3404 = vpop.f32.mrf.mxu0
      %v3405 = vpop.f32.mrf.mxu0
      %v3406 = vadd.f32 0.0, %v3405
      %v3407 = vpop.f32.mrf.mxu0
      %3408 = vmatprep.mubr.bf16.mxu0 %v2057
      %3409 = vmatmul.mubr.bf16.gmra.mxu0 %v2056
      %v3410 = vpop.f32.mrf.mxu0
      %v3411 = vadd.f32 0.0, %v3410
      %v3412 = vpop.f32.mrf.mxu0
      %v3413 = vpop.f32.mrf.mxu0
      %v3414 = vadd.f32 0.0, %v3413
      %v3415 = vpop.f32.mrf.mxu0
      %3416 = vmatprep.mubr.bf16.mxu0 %v2060
      %3417 = vmatmul.mubr.bf16.gmra.mxu0 %v2059
      %v3418 = vpop.f32.mrf.mxu0
      %v3419 = vadd.f32 0.0, %v3418
      %v3420 = vpop.f32.mrf.mxu0
      %v3421 = vpop.f32.mrf.mxu0
      %v3422 = vadd.f32 0.0, %v3421
      %v3423 = vpop.f32.mrf.mxu0
      %3424 = vmatprep.mubr.bf16.mxu0 %v2063
      %3425 = vmatmul.mubr.bf16.gmra.mxu0 %v2062
      %v3426 = vpop.f32.mrf.mxu0
      %v3427 = vadd.f32 0.0, %v3426
      %v3428 = vpop.f32.mrf.mxu0
      %v3429 = vpop.f32.mrf.mxu0
      %v3430 = vadd.f32 0.0, %v3429
      %v3431 = vpop.f32.mrf.mxu0
      %3432 = vmatprep.mubr.bf16.mxu0 %v2066
      %3433 = vmatmul.mubr.bf16.gmra.mxu0 %v2065
      %v3434 = vpop.f32.mrf.mxu0
      %v3435 = vadd.f32 0.0, %v3434
      %v3436 = vpop.f32.mrf.mxu0
      %v3437 = vpop.f32.mrf.mxu0
      %v3438 = vadd.f32 0.0, %v3437
      %v3439 = vpop.f32.mrf.mxu0
      %3440 = vmatprep.mubr.bf16.mxu0 %v2117
      %3441 = vmatmul.mubr.bf16.gmra.mxu0 %v2116
      %v3442 = vpop.f32.mrf.mxu0
      %v3443 = vadd.f32 0.0, %v3442
      %v3444 = vpop.f32.mrf.mxu0
      %v3445 = vpop.f32.mrf.mxu0
      %v3446 = vadd.f32 0.0, %v3445
      %v3447 = vpop.f32.mrf.mxu0
      %3448 = vmatprep.mubr.bf16.mxu0 %v3101
      %3449 = vmatmul.mubr.bf16.gmra.mxu0 %v3100
      %v3450 = vpop.f32.mrf.mxu0
      %v3451 = vadd.f32 0.0, %v3450
      %v3452 = vpop.f32.mrf.mxu0
      %v3453 = vpop.f32.mrf.mxu0
      %v3454 = vadd.f32 0.0, %v3453
      %v3455 = vpop.f32.mrf.mxu0
      %3456 = vdwg.mxu0
      %3457 = vmatprep.subr.bf16.mxu0 0
      %3458 = vmatpush1.bf16.msra.mxu0 %v3271
      %3459 = vmatprep.subr.bf16.mxu0 0
      %3460 = vmatpush1.bf16.msra.mxu0 %v3270
      %3461 = vmatprep.subr.bf16.mxu0 0
      %3462 = vmatpush1.bf16.msra.mxu0 %v3269
      %3463 = vmatprep.subr.bf16.mxu0 0
      %3464 = vmatpush1.bf16.msra.mxu0 %v3268
      %3465 = vmatprep.subr.bf16.mxu0 0
      %3466 = vmatpush1.bf16.msra.mxu0 %v3267
      %3467 = vmatprep.subr.bf16.mxu0 0
      %3468 = vmatpush1.bf16.msra.mxu0 %v3266
      %3469 = vmatprep.subr.bf16.mxu0 0
      %3470 = vmatpush1.bf16.msra.mxu0 %v3265
      %3471 = vmatprep.subr.bf16.mxu0 0
      %3472 = vmatpush1.bf16.msra.mxu0 %v3264
      %3473 = vmatprep.subr.bf16.mxu0 0
      %3474 = vmatpush2.bf16.msra.mxu0 0
      %3475 = vmatprep.subr.bf16.mxu0 0
      %3476 = vmatpush2.bf16.msra.mxu0 0
      %3477 = vmatprep.subr.bf16.mxu0 0
      %3478 = vmatpush2.bf16.msra.mxu0 0
      %3479 = vmatprep.subr.bf16.mxu0 0
      %3480 = vmatpush2.bf16.msra.mxu0 0
      %3481 = vmatprep.subr.bf16.mxu0 0
      %3482 = vmatpush2.bf16.msra.mxu0 0
      %3483 = vmatprep.subr.bf16.mxu0 0
      %3484 = vmatpush2.bf16.msra.mxu0 0
      %3485 = vmatprep.subr.bf16.mxu0 0
      %3486 = vmatpush2.bf16.msra.mxu0 0
      %3487 = vmatprep.subr.bf16.mxu0 0
      %3488 = vmatpush2.bf16.msra.mxu0 0
      %3489 = vmatprep.mubr.bf16.mxu0 0
      %3490 = vmatmul.mubr.bf16.gmra.mxu0 %v2028
      %v3491 = vpop.f32.mrf.mxu0
      %v3492 = vadd.f32 %v3331, %v3491
      %v3493 = vpop.f32.mrf.mxu0
      %v3494 = vpop.f32.mrf.mxu0
      %v3495 = vadd.f32 %v3334, %v3494
      %v3496 = vpop.f32.mrf.mxu0
      %3497 = vmatprep.mubr.bf16.mxu0 0
      %3498 = vmatmul.mubr.bf16.gmra.mxu0 %v2031
      %v3499 = vpop.f32.mrf.mxu0
      %v3500 = vadd.f32 %v3339, %v3499
      %v3501 = vpop.f32.mrf.mxu0
      %v3502 = vpop.f32.mrf.mxu0
      %v3503 = vadd.f32 %v3342, %v3502
      %v3504 = vpop.f32.mrf.mxu0
      %3505 = vmatprep.mubr.bf16.mxu0 0
      %3506 = vmatmul.mubr.bf16.gmra.mxu0 %v2034
      %v3507 = vpop.f32.mrf.mxu0
      %v3508 = vadd.f32 %v3347, %v3507
      %v3509 = vpop.f32.mrf.mxu0
      %v3510 = vpop.f32.mrf.mxu0
      %v3511 = vadd.f32 %v3350, %v3510
      %v3512 = vpop.f32.mrf.mxu0
      %3513 = vmatprep.mubr.bf16.mxu0 0
      %3514 = vmatmul.mubr.bf16.gmra.mxu0 %v2037
      %v3515 = vpop.f32.mrf.mxu0
      %v3516 = vadd.f32 %v3355, %v3515
      %v3517 = vpop.f32.mrf.mxu0
      %v3518 = vpop.f32.mrf.mxu0
      %v3519 = vadd.f32 %v3358, %v3518
      %v3520 = vpop.f32.mrf.mxu0
      %3521 = vmatprep.mubr.bf16.mxu0 0
      %3522 = vmatmul.mubr.bf16.gmra.mxu0 %v2040
      %v3523 = vpop.f32.mrf.mxu0
      %v3524 = vadd.f32 %v3363, %v3523
      %v3525 = vpop.f32.mrf.mxu0
      %v3526 = vpop.f32.mrf.mxu0
      %v3527 = vadd.f32 %v3366, %v3526
      %v3528 = vpop.f32.mrf.mxu0
      %3529 = vmatprep.mubr.bf16.mxu0 0
      %3530 = vmatmul.mubr.bf16.gmra.mxu0 %v2043
      %v3531 = vpop.f32.mrf.mxu0
      %v3532 = vadd.f32 %v3371, %v3531
      %v3533 = vpop.f32.mrf.mxu0
      %v3534 = vpop.f32.mrf.mxu0
      %v3535 = vadd.f32 %v3374, %v3534
      %v3536 = vpop.f32.mrf.mxu0
      %3537 = vmatprep.mubr.bf16.mxu0 0
      %3538 = vmatmul.mubr.bf16.gmra.mxu0 %v2046
      %v3539 = vpop.f32.mrf.mxu0
      %v3540 = vadd.f32 %v3379, %v3539
      %v3541 = vpop.f32.mrf.mxu0
      %v3542 = vpop.f32.mrf.mxu0
      %v3543 = vadd.f32 %v3382, %v3542
      %v3544 = vpop.f32.mrf.mxu0
      %3545 = vmatprep.mubr.bf16.mxu0 0
      %3546 = vmatmul.mubr.bf16.gmra.mxu0 %v2049
      %v3547 = vpop.f32.mrf.mxu0
      %v3548 = vadd.f32 %v3387, %v3547
      %v3549 = vpop.f32.mrf.mxu0
      %v3550 = vpop.f32.mrf.mxu0
      %v3551 = vadd.f32 %v3390, %v3550
      %v3552 = vpop.f32.mrf.mxu0
      %3553 = vmatprep.mubr.bf16.mxu0 0
      %3554 = vmatmul.mubr.bf16.gmra.mxu0 %v2052
      %v3555 = vpop.f32.mrf.mxu0
      %v3556 = vadd.f32 %v3395, %v3555
      %v3557 = vpop.f32.mrf.mxu0
      %v3558 = vpop.f32.mrf.mxu0
      %v3559 = vadd.f32 %v3398, %v3558
      %v3560 = vpop.f32.mrf.mxu0
      %3561 = vmatprep.mubr.bf16.mxu0 0
      %3562 = vmatmul.mubr.bf16.gmra.mxu0 %v2055
      %v3563 = vpop.f32.mrf.mxu0
      %v3564 = vadd.f32 %v3403, %v3563
      %v3565 = vpop.f32.mrf.mxu0
      %v3566 = vpop.f32.mrf.mxu0
      %v3567 = vadd.f32 %v3406, %v3566
      %v3568 = vpop.f32.mrf.mxu0
      %3569 = vmatprep.mubr.bf16.mxu0 0
      %3570 = vmatmul.mubr.bf16.gmra.mxu0 %v2058
      %v3571 = vpop.f32.mrf.mxu0
      %v3572 = vadd.f32 %v3411, %v3571
      %v3573 = vpop.f32.mrf.mxu0
      %v3574 = vpop.f32.mrf.mxu0
      %v3575 = vadd.f32 %v3414, %v3574
      %v3576 = vpop.f32.mrf.mxu0
      %3577 = vmatprep.mubr.bf16.mxu0 0
      %3578 = vmatmul.mubr.bf16.gmra.mxu0 %v2061
      %v3579 = vpop.f32.mrf.mxu0
      %v3580 = vadd.f32 %v3419, %v3579
      %v3581 = vpop.f32.mrf.mxu0
      %v3582 = vpop.f32.mrf.mxu0
      %v3583 = vadd.f32 %v3422, %v3582
      %v3584 = vpop.f32.mrf.mxu0
      %3585 = vmatprep.mubr.bf16.mxu0 0
      %3586 = vmatmul.mubr.bf16.gmra.mxu0 %v2064
      %v3587 = vpop.f32.mrf.mxu0
      %v3588 = vadd.f32 %v3427, %v3587
      %v3589 = vpop.f32.mrf.mxu0
      %v3590 = vpop.f32.mrf.mxu0
      %v3591 = vadd.f32 %v3430, %v3590
      %v3592 = vpop.f32.mrf.mxu0
      %3593 = vmatprep.mubr.bf16.mxu0 0
      %3594 = vmatmul.mubr.bf16.gmra.mxu0 %v2067
      %v3595 = vpop.f32.mrf.mxu0
      %v3596 = vadd.f32 %v3435, %v3595
      %v3597 = vpop.f32.mrf.mxu0
      %v3598 = vpop.f32.mrf.mxu0
      %v3599 = vadd.f32 %v3438, %v3598
      %v3600 = vpop.f32.mrf.mxu0
      %3601 = vmatprep.mubr.bf16.mxu0 0
      %3602 = vmatmul.mubr.bf16.gmra.mxu0 %v2118
      %v3603 = vpop.f32.mrf.mxu0
      %v3604 = vadd.f32 %v3443, %v3603
      %v3605 = vpop.f32.mrf.mxu0
      %v3606 = vpop.f32.mrf.mxu0
      %v3607 = vadd.f32 %v3446, %v3606
      %v3608 = vpop.f32.mrf.mxu0
      %3609 = vmatprep.mubr.bf16.mxu0 0
      %3610 = vmatmul.mubr.bf16.gmra.mxu0 %v3102
      %v3611 = vpop.f32.mrf.mxu0
      %v3612 = vadd.f32 %v3451, %v3611
      %v3613 = vpop.f32.mrf.mxu0
      %v3614 = vpop.f32.mrf.mxu0
      %v3615 = vadd.f32 %v3454, %v3614
      %v3616 = vpop.f32.mrf.mxu0
      %3617 = vdwg.mxu0
      %v3618 = vadd.f32 %v2974, %v3492
      %v3619 = vadd.f32 %v2977, %v3495
      %v3620 = vadd.f32 %v2982, %v3500
      %v3621 = vadd.f32 %v2985, %v3503
      %v3622 = vadd.f32 %v2990, %v3508
      %v3623 = vadd.f32 %v2993, %v3511
      %v3624 = vadd.f32 %v2998, %v3516
      %v3625 = vadd.f32 %v3001, %v3519
      %v3626 = vadd.f32 %v3006, %v3524
      %v3627 = vadd.f32 %v3009, %v3527
      %v3628 = vadd.f32 %v3014, %v3532
      %v3629 = vadd.f32 %v3017, %v3535
      %v3630 = vadd.f32 %v3022, %v3540
      %v3631 = vadd.f32 %v3025, %v3543
      %v3632 = vadd.f32 %v3030, %v3548
      %v3633 = vadd.f32 %v3033, %v3551
      %v3634 = vadd.f32 %v3038, %v3556
      %v3635 = vadd.f32 %v3041, %v3559
      %v3636 = vadd.f32 %v3046, %v3564
      %v3637 = vadd.f32 %v3049, %v3567
      %v3638 = vadd.f32 %v3054, %v3572
      %v3639 = vadd.f32 %v3057, %v3575
      %v3640 = vadd.f32 %v3062, %v3580
      %v3641 = vadd.f32 %v3065, %v3583
      %v3642 = vadd.f32 %v3070, %v3588
      %v3643 = vadd.f32 %v3073, %v3591
      %v3644 = vadd.f32 %v3078, %v3596
      %v3645 = vadd.f32 %v3081, %v3599
      %v3646 = vadd.f32 %v3086, %v3604
      %v3647 = vadd.f32 %v3089, %v3607
      %v3648 = vadd.f32 %v3094, %v3612
      %v3649 = vadd.f32 %v3097, %v3615
      %v3650 = vld [vmem:[%s6] sm:$0x1]
      %v3652 = vlaneseq
      %v3653 = vshrl.u32 %v3652, 7
      %v3654 = vsub.s32 0, %v3653
      %v3655 = vrot.slane %v3650, %v3654
      %v3657 = vadd.f32 %v3618, %v3655
      %v3658 = vadd.f32 %v3619, %v3655
      %v3659 = vadd.f32 %v3620, %v3655
      %v3660 = vadd.f32 %v3621, %v3655
      %v3661 = vadd.f32 %v3622, %v3655
      %v3662 = vadd.f32 %v3623, %v3655
      %v3663 = vadd.f32 %v3624, %v3655
      %v3664 = vadd.f32 %v3625, %v3655
      %v3665 = vadd.f32 %v3626, %v3655
      %v3666 = vadd.f32 %v3627, %v3655
      %v3667 = vadd.f32 %v3628, %v3655
      %v3668 = vadd.f32 %v3629, %v3655
      %v3669 = vadd.f32 %v3630, %v3655
      %v3670 = vadd.f32 %v3631, %v3655
      %v3671 = vadd.f32 %v3632, %v3655
      %v3672 = vadd.f32 %v3633, %v3655
      %v3673 = vadd.f32 %v3634, %v3655
      %v3674 = vadd.f32 %v3635, %v3655
      %v3675 = vadd.f32 %v3636, %v3655
      %v3676 = vadd.f32 %v3637, %v3655
      %v3677 = vadd.f32 %v3638, %v3655
      %v3678 = vadd.f32 %v3639, %v3655
      %v3679 = vadd.f32 %v3640, %v3655
      %v3680 = vadd.f32 %v3641, %v3655
      %v3681 = vadd.f32 %v3642, %v3655
      %v3682 = vadd.f32 %v3643, %v3655
      %v3683 = vadd.f32 %v3644, %v3655
      %v3684 = vadd.f32 %v3645, %v3655
      %v3685 = vadd.f32 %v3646, %v3655
      %v3686 = vadd.f32 %v3647, %v3655
      %v3687 = vadd.f32 %v3648, %v3655
      %v3688 = vadd.f32 %v3649, %v3655
      %vm3689 = vcmp.ge.f32.partialorder %v3657, 0.0
      %vm3690 = vcmp.ge.f32.partialorder %v3658, 0.0
      %vm3691 = vcmp.ge.f32.partialorder %v3659, 0.0
      %vm3692 = vcmp.ge.f32.partialorder %v3660, 0.0
      %vm3693 = vcmp.ge.f32.partialorder %v3661, 0.0
      %vm3694 = vcmp.ge.f32.partialorder %v3662, 0.0
      %vm3695 = vcmp.ge.f32.partialorder %v3663, 0.0
      %vm3696 = vcmp.ge.f32.partialorder %v3664, 0.0
      %vm3697 = vcmp.ge.f32.partialorder %v3665, 0.0
      %vm3698 = vcmp.ge.f32.partialorder %v3666, 0.0
      %vm3699 = vcmp.ge.f32.partialorder %v3667, 0.0
      %vm3700 = vcmp.ge.f32.partialorder %v3668, 0.0
      %vm3701 = vcmp.ge.f32.partialorder %v3669, 0.0
      %vm3702 = vcmp.ge.f32.partialorder %v3670, 0.0
      %vm3703 = vcmp.ge.f32.partialorder %v3671, 0.0
      %vm3704 = vcmp.ge.f32.partialorder %v3672, 0.0
      %vm3705 = vcmp.ge.f32.partialorder %v3673, 0.0
      %vm3706 = vcmp.ge.f32.partialorder %v3674, 0.0
      %vm3707 = vcmp.ge.f32.partialorder %v3675, 0.0
      %vm3708 = vcmp.ge.f32.partialorder %v3676, 0.0
      %vm3709 = vcmp.ge.f32.partialorder %v3677, 0.0
      %vm3710 = vcmp.ge.f32.partialorder %v3678, 0.0
      %vm3711 = vcmp.ge.f32.partialorder %v3679, 0.0
      %vm3712 = vcmp.ge.f32.partialorder %v3680, 0.0
      %vm3713 = vcmp.ge.f32.partialorder %v3681, 0.0
      %vm3714 = vcmp.ge.f32.partialorder %v3682, 0.0
      %vm3715 = vcmp.ge.f32.partialorder %v3683, 0.0
      %vm3716 = vcmp.ge.f32.partialorder %v3684, 0.0
      %vm3717 = vcmp.ge.f32.partialorder %v3685, 0.0
      %vm3718 = vcmp.ge.f32.partialorder %v3686, 0.0
      %vm3719 = vcmp.ge.f32.partialorder %v3687, 0.0
      %vm3720 = vcmp.ge.f32.partialorder %v3688, 0.0
      %v3721 = vmul.f32 %v3657, 0.1
      %v3722 = vmul.f32 %v3658, 0.1
      %v3723 = vmul.f32 %v3659, 0.1
      %v3724 = vmul.f32 %v3660, 0.1
      %v3725 = vmul.f32 %v3661, 0.1
      %v3726 = vmul.f32 %v3662, 0.1
      %v3727 = vmul.f32 %v3663, 0.1
      %v3728 = vmul.f32 %v3664, 0.1
      %v3729 = vmul.f32 %v3665, 0.1
      %v3730 = vmul.f32 %v3666, 0.1
      %v3731 = vmul.f32 %v3667, 0.1
      %v3732 = vmul.f32 %v3668, 0.1
      %v3733 = vmul.f32 %v3669, 0.1
      %v3734 = vmul.f32 %v3670, 0.1
      %v3735 = vmul.f32 %v3671, 0.1
      %v3736 = vmul.f32 %v3672, 0.1
      %v3737 = vmul.f32 %v3673, 0.1
      %v3738 = vmul.f32 %v3674, 0.1
      %v3739 = vmul.f32 %v3675, 0.1
      %v3740 = vmul.f32 %v3676, 0.1
      %v3741 = vmul.f32 %v3677, 0.1
      %v3742 = vmul.f32 %v3678, 0.1
      %v3743 = vmul.f32 %v3679, 0.1
      %v3744 = vmul.f32 %v3680, 0.1
      %v3745 = vmul.f32 %v3681, 0.1
      %v3746 = vmul.f32 %v3682, 0.1
      %v3747 = vmul.f32 %v3683, 0.1
      %v3748 = vmul.f32 %v3684, 0.1
      %v3749 = vmul.f32 %v3685, 0.1
      %v3750 = vmul.f32 %v3686, 0.1
      %v3751 = vmul.f32 %v3687, 0.1
      %v3752 = vmul.f32 %v3688, 0.1
      %v3753 = vsel %vm3689, %v3657, %v3721
      %v3754 = vsel %vm3690, %v3658, %v3722
      %v3755 = vsel %vm3691, %v3659, %v3723
      %v3756 = vsel %vm3692, %v3660, %v3724
      %v3757 = vsel %vm3693, %v3661, %v3725
      %v3758 = vsel %vm3694, %v3662, %v3726
      %v3759 = vsel %vm3695, %v3663, %v3727
      %v3760 = vsel %vm3696, %v3664, %v3728
      %v3761 = vsel %vm3697, %v3665, %v3729
      %v3762 = vsel %vm3698, %v3666, %v3730
      %v3763 = vsel %vm3699, %v3667, %v3731
      %v3764 = vsel %vm3700, %v3668, %v3732
      %v3765 = vsel %vm3701, %v3669, %v3733
      %v3766 = vsel %vm3702, %v3670, %v3734
      %v3767 = vsel %vm3703, %v3671, %v3735
      %v3768 = vsel %vm3704, %v3672, %v3736
      %v3769 = vsel %vm3705, %v3673, %v3737
      %v3770 = vsel %vm3706, %v3674, %v3738
      %v3771 = vsel %vm3707, %v3675, %v3739
      %v3772 = vsel %vm3708, %v3676, %v3740
      %v3773 = vsel %vm3709, %v3677, %v3741
      %v3774 = vsel %vm3710, %v3678, %v3742
      %v3775 = vsel %vm3711, %v3679, %v3743
      %v3776 = vsel %vm3712, %v3680, %v3744
      %v3777 = vsel %vm3713, %v3681, %v3745
      %v3778 = vsel %vm3714, %v3682, %v3746
      %v3779 = vsel %vm3715, %v3683, %v3747
      %v3780 = vsel %vm3716, %v3684, %v3748
      %v3781 = vsel %vm3717, %v3685, %v3749
      %v3782 = vsel %vm3718, %v3686, %v3750
      %v3783 = vsel %vm3719, %v3687, %v3751
      %v3784 = vsel %vm3720, %v3688, %v3752
      %v3785 = vadd.f32 %v3753, %v447
      %v3786 = vadd.f32 %v3754, %v448
      %v3787 = vadd.f32 %v3755, %v449
      %v3788 = vadd.f32 %v3756, %v450
      %v3789 = vadd.f32 %v3757, %v451
      %v3790 = vadd.f32 %v3758, %v452
      %v3791 = vadd.f32 %v3759, %v453
      %v3792 = vadd.f32 %v3760, %v454
      %v3793 = vadd.f32 %v3761, %v455
      %v3794 = vadd.f32 %v3762, %v456
      %v3795 = vadd.f32 %v3763, %v457
      %v3796 = vadd.f32 %v3764, %v458
      %v3797 = vadd.f32 %v3765, %v459
      %v3798 = vadd.f32 %v3766, %v460
      %v3799 = vadd.f32 %v3767, %v461
      %v3800 = vadd.f32 %v3768, %v462
      %v3801 = vadd.f32 %v3769, %v463
      %v3802 = vadd.f32 %v3770, %v464
      %v3803 = vadd.f32 %v3771, %v465
      %v3804 = vadd.f32 %v3772, %v466
      %v3805 = vadd.f32 %v3773, %v467
      %v3806 = vadd.f32 %v3774, %v468
      %v3807 = vadd.f32 %v3775, %v469
      %v3808 = vadd.f32 %v3776, %v470
      %v3809 = vadd.f32 %v3777, %v471
      %v3810 = vadd.f32 %v3778, %v472
      %v3811 = vadd.f32 %v3779, %v473
      %v3812 = vadd.f32 %v3780, %v474
      %v3813 = vadd.f32 %v3781, %v475
      %v3814 = vadd.f32 %v3782, %v476
      %v3815 = vadd.f32 %v3783, %v477
      %v3816 = vadd.f32 %v3784, %v478
      %3817 = vst [vmem:[%s444] sm:$0xff] %v3785
      %3818 = vst [vmem:[%s444 + $0x8] sm:$0xff] %v3786
      %3819 = vst [vmem:[%s444 + $0x10] sm:$0xff] %v3787
      %3820 = vst [vmem:[%s444 + $0x18] sm:$0xff] %v3788
      %3821 = vst [vmem:[%s444 + $0x20] sm:$0xff] %v3789
      %3822 = vst [vmem:[%s444 + $0x28] sm:$0xff] %v3790
      %3823 = vst [vmem:[%s444 + $0x30] sm:$0xff] %v3791
      %3824 = vst [vmem:[%s444 + $0x38] sm:$0xff] %v3792
      %3825 = vst [vmem:[%s444 + $0x40] sm:$0xff] %v3793
      %3826 = vst [vmem:[%s444 + $0x48] sm:$0xff] %v3794
      %3827 = vst [vmem:[%s444 + $0x50] sm:$0xff] %v3795
      %3828 = vst [vmem:[%s444 + $0x58] sm:$0xff] %v3796
      %3829 = vst [vmem:[%s444 + $0x60] sm:$0xff] %v3797
      %3830 = vst [vmem:[%s444 + $0x68] sm:$0xff] %v3798
      %3831 = vst [vmem:[%s444 + $0x70] sm:$0xff] %v3799
      %3832 = vst [vmem:[%s444 + $0x78] sm:$0xff] %v3800
      %3833 = vst [vmem:[%s444 + $0x80] sm:$0xff] %v3801
      %3834 = vst [vmem:[%s444 + $0x88] sm:$0xff] %v3802
      %3835 = vst [vmem:[%s444 + $0x90] sm:$0xff] %v3803
      %3836 = vst [vmem:[%s444 + $0x98] sm:$0xff] %v3804
      %3837 = vst [vmem:[%s444 + $0xa0] sm:$0xff] %v3805
      %3838 = vst [vmem:[%s444 + $0xa8] sm:$0xff] %v3806
      %3839 = vst [vmem:[%s444 + $0xb0] sm:$0xff] %v3807
      %3840 = vst [vmem:[%s444 + $0xb8] sm:$0xff] %v3808
      %3841 = vst [vmem:[%s444 + $0xc0] sm:$0xff] %v3809
      %3842 = vst [vmem:[%s444 + $0xc8] sm:$0xff] %v3810
      %3843 = vst [vmem:[%s444 + $0xd0] sm:$0xff] %v3811
      %3844 = vst [vmem:[%s444 + $0xd8] sm:$0xff] %v3812
      %3845 = vst [vmem:[%s444 + $0xe0] sm:$0xff] %v3813
      %3846 = vst [vmem:[%s444 + $0xe8] sm:$0xff] %v3814
      %3847 = vst [vmem:[%s444 + $0xf0] sm:$0xff] %v3815
      %3848 = vst [vmem:[%s444 + $0xf8] sm:$0xff] %v3816
      %s3849 = smul.u32 32, %s23
      %p3850 = scmp.lt.s32.totalorder %s22, 1
      %s3851 = scalar_select %p3850, %s22, 1
      %p3852 = scmp.lt.s32.totalorder %s3849, 31
      %s3853 = scalar_select %p3852, %s3849, 31
      %s3854 = smul.addr %s3851, 32
      %s3855 = sadd.s32 %s3853, %s3854
      %s3856 = smul.addr %s3855, 8
      %s3857 = scalar_lea.vmem %s7, %s3856
      // Predicated region
      $region49: #{darknet_block_forward.2} parent=47 // pred_check
        %p3858 = pneg %p234
      $region50: #{darknet_block_forward.2} parent=47 // pred_check_branch
        %3860 = sbr.rel (%p3858) target = $region52
      $region51: #{darknet_block_forward.2} parent=47 // pred_region
        %s3861 = smul.u32 32, %s23
      $region52: #{darknet_block_forward.2} parent=47 // pred_fallthru
        _
    $region48: #{darknet_block_forward.2} parent=5 // pred_fallthru
      _
    %p3862 = scmp.le.s32.totalorder 2, %s13
    // Predicated region
    $region53: #{darknet_block_forward.2} parent=5 // pred_check
      %p3863 = pneg %p3862
    $region54: #{darknet_block_forward.2} parent=5 // pred_check_branch
      %3865 = sbr.rel (%p3863) target = $region56
    $region55: #{darknet_block_forward.2} parent=5 // pred_region
      %s3866 = ssub.s32 %s13, 2
      // Predicated region
      $region57: #{darknet_block_forward.2} parent=55 // pred_check
        %p3867 = pneg %p240
      $region58: #{darknet_block_forward.2} parent=55 // pred_check_branch
        %3869 = sbr.rel (%p3867) target = $region60
      $region59: #{darknet_block_forward.2} parent=55 // pred_region
        %s3870 = smul.u32 32, %s25
        %p3871 = scmp.lt.s32.totalorder %s24, 1
        %s3872 = scalar_select %p3871, %s24, 1
        %p3873 = scmp.lt.s32.totalorder %s3870, 31
        %s3874 = scalar_select %p3873, %s3870, 31
        %s3875 = smul.addr %s3872, 32
        %s3876 = sadd.s32 %s3874, %s3875
        %s3877 = smul.addr %s3876, 8
        %s3878 = scalar_lea.vmem %s7, %s3877
      $region60: #{darknet_block_forward.2} parent=55 // pred_fallthru
        _
    $region56: #{darknet_block_forward.2} parent=5 // pred_fallthru
      _
  $region6: #{darknet_block_forward.2} parent=0 // loop_footer
    %s17 = sadd.s32 1, %s13
  $region7: #{darknet_block_forward.2} parent=0 // loop_footer_branch
    %12 = sbr.rel target = $region3
  $region8: #{darknet_block_forward.2} parent=0 // loop_exit
    _

</llo_original>
